<compile_context>
chip_gen: v5e
topology: v5e:2x2
jax: 0.10.0
libtpu: 0.0.40
codegen_flags: <defaults>
</compile_context>

<pallas_src>
import functools

import jax
import jax.numpy as jnp
import numpy as np
from jax import lax
from jax.experimental import pallas as pl
from jax.experimental.pallas import tpu as pltpu

KH = KW = 4
STRIDE = 2
PAD = 1
EPS = 1e-5


def _matmul_bias_relu_stats_kernel(p_ref, w_ref, b_ref,
                                   y_ref, sum_ref, ssq_ref,
                                   *, tm, m_valid):
    """y = relu(P @ W9 + bias); emit per-tile BN partial sum / sum-of-squares."""
    i = pl.program_id(0)
    y = jnp.dot(p_ref[...], w_ref[...], preferred_element_type=jnp.float32)
    y = y + b_ref[...]                       # (tm, 4*Cout) + (1, 4*Cout)
    y = jnp.maximum(y, 0.0)                  # ReLU
    y_ref[...] = y.astype(y_ref.dtype)       # bf16 round-trip to kernel 2

    # Mask rows that are pure M-padding out of the batch statistics.
    row = lax.broadcasted_iota(jnp.int32, (tm, 1), 0) + i * tm
    ym = jnp.where(row < m_valid, y, 0.0)
    sum_ref[0] = jnp.sum(ym, axis=0, keepdims=True)        # (1, 4*Cout)
    ssq_ref[0] = jnp.sum(ym * ym, axis=0, keepdims=True)


def _bn_apply_kernel(y_ref, scale_ref, shift_ref, o_ref):
    """Pure lane-dense FMA: out = y * scale + shift (scale/shift precomputed)."""
    o_ref[...] = y_ref[...].astype(jnp.float32) * scale_ref[...] + shift_ref[...]


def decoder_block_forward(x, weight, bias, gamma, beta, *, tm=512):
    """x: (N, Cin, H, W) NCHW; weight: (Cin, Cout, 4, 4) ConvTranspose2d layout.

    Returns the NCHW output of ConvTranspose2d(k=4,s=2,p=1) -> ReLU -> BatchNorm2d.
    """
    N, Cin, H, W = x.shape
    Cout = weight.shape[1]
    OH, OW = STRIDE * H, STRIDE * W
    C4 = 4 * Cout                      # (py, px, cout) phase-expanded channels
    M = N * H * W
    K = 9 * Cin

    # ---- plain-JAX glue: channels-last pad + 3x3 patch extraction (bf16) ------
    x_cl = jnp.transpose(x, (0, 2, 3, 1))                       # (N, H, W, Cin)
    xp = jnp.pad(x_cl, ((0, 0), (1, 1), (1, 1), (0, 0)))        # (N, H+2, W+2, Cin)
    cols = [xp[:, ry:ry + H, rx:rx + W, :]
            for ry in range(3) for rx in range(3)]
    patches = jnp.stack(cols, axis=3).reshape(M, K)             # (M, 9*Cin)
    patches = patches.astype(jnp.bfloat16)

    # ---- phase-decomposed ConvTranspose2d weight: (9*Cin, 4*Cout) --------------
    # y[n, 2j+py, 2i+px, co] =
    #   sum_{ci, dy, dx in {0,1}} xp[n, j+py+dy, i+px+dx, ci]
    #                             * w[ci, co, 3-py-2dy, 3-px-2dx]
    w9 = jnp.zeros((3, 3, Cin, 2, 2, Cout), weight.dtype)
    for py in range(2):
        for px in range(2):
            for dy in range(2):
                for dx in range(2):
                    w9 = w9.at[py + dy, px + dx, :, py, px, :].set(
                        weight[:, :, 3 - py - 2 * dy, 3 - px - 2 * dx])
    w9 = w9.reshape(K, C4).astype(jnp.bfloat16)

    bias_t = jnp.tile(bias.astype(jnp.float32), 4).reshape(1, C4)

    # ---- tiling: pad M to a multiple of the row tile (stats are masked) -------
    if M >= tm:
        m_pad = -(-M // tm) * tm
    else:
        tm = -(-M // 16) * 16
        m_pad = tm
    if m_pad != M:
        patches = jnp.pad(patches, ((0, m_pad - M), (0, 0)))
    grid = (m_pad // tm,)
    g = grid[0]

    # ---- kernel 1: conv-transpose matmul + bias + ReLU + partial BN stats -----
    y_flat, psum, pssq = pl.pallas_call(
        functools.partial(_matmul_bias_relu_stats_kernel, tm=tm, m_valid=M),
        out_shape=(jax.ShapeDtypeStruct((m_pad, C4), jnp.bfloat16),
                   jax.ShapeDtypeStruct((g, 1, C4), jnp.float32),
                   jax.ShapeDtypeStruct((g, 1, C4), jnp.float32)),
        grid_spec=pltpu.PrefetchScalarGridSpec(
            num_scalar_prefetch=0,
            grid=grid,
            in_specs=[pl.BlockSpec((tm, K), lambda i: (i, 0)),
                      pl.BlockSpec((K, C4), lambda i: (0, 0)),
                      pl.BlockSpec((1, C4), lambda i: (0, 0))],
            out_specs=[pl.BlockSpec((tm, C4), lambda i: (i, 0)),
                       pl.BlockSpec((1, 1, C4), lambda i: (i, 0, 0)),
                       pl.BlockSpec((1, 1, C4), lambda i: (i, 0, 0))]),
        compiler_params=pltpu.CompilerParams(
            dimension_semantics=("parallel",)),   # distinct blocks per step
    )(patches, w9, bias_t)

    # ---- tiny JAX reduction: partials -> per-channel scale / shift ------------
    count = 4.0 * M                                    # = N * OH * OW per channel
    s_c = psum.reshape(g, 4, Cout).sum(axis=(0, 1))
    ss_c = pssq.reshape(g, 4, Cout).sum(axis=(0, 1))
    mean = s_c / count
    var = ss_c / count - mean * mean                   # biased variance (training)
    inv_std = lax.rsqrt(var + EPS)
    scale = gamma.astype(jnp.float32) * inv_std
    shift = beta.astype(jnp.float32) - mean * scale
    scale_t = jnp.tile(scale, 4).reshape(1, C4)
    shift_t = jnp.tile(shift, 4).reshape(1, C4)

    # ---- kernel 2: lane-dense BatchNorm apply ----------------------------------
    out_flat = pl.pallas_call(
        _bn_apply_kernel,
        out_shape=jax.ShapeDtypeStruct((m_pad, C4), jnp.float32),
        grid_spec=pltpu.PrefetchScalarGridSpec(
            num_scalar_prefetch=0,
            grid=grid,
            in_specs=[pl.BlockSpec((tm, C4), lambda i: (i, 0)),
                      pl.BlockSpec((1, C4), lambda i: (0, 0)),
                      pl.BlockSpec((1, C4), lambda i: (0, 0))],
            out_specs=pl.BlockSpec((tm, C4), lambda i: (i, 0))),
        compiler_params=pltpu.CompilerParams(
            dimension_semantics=("parallel",)),
    )(y_flat, scale_t, shift_t)

    # ---- back to NCHW: (N,H,W,py,px,C) -> (N,C,2H,2W) --------------------------
    out = out_flat[:M].reshape(N, H, W, 2, 2, Cout)
    out = out.transpose(0, 5, 1, 3, 2, 4).reshape(N, Cout, OH, OW)
    return out


def _reference(x, weight, bias, gamma, beta):
    """Pure-JAX reference matching PyTorch ConvTranspose2d->ReLU->BatchNorm2d."""
    w_oihw = weight[:, :, ::-1, ::-1].transpose(1, 0, 2, 3)     # (Cout, Cin, 4, 4)
    q = KH - 1 - PAD
    y = lax.conv_general_dilated(
        x, w_oihw, window_strides=(1, 1),
        padding=[(q, q), (q, q)], lhs_dilation=(STRIDE, STRIDE),
        dimension_numbers=("NCHW", "OIHW", "NCHW"))
    y = y + bias.reshape(1, -1, 1, 1)
    y = jnp.maximum(y, 0.0)
    mean = y.mean(axis=(0, 2, 3), keepdims=True)
    var = ((y - mean) ** 2).mean(axis=(0, 2, 3), keepdims=True)
    return ((y - mean) * lax.rsqrt(var + EPS)
            * gamma.reshape(1, -1, 1, 1) + beta.reshape(1, -1, 1, 1))


if __name__ == "__main__":
    # DecoderBlock(in_channels=64, out_channels=64, upsampling=2): the
    # out_conv_1 / out_conv_0 blocks of SegModel, at a small spatial size.
    N, Cin, Cout, H, W = 2, 64, 64, 16, 16

    key = jax.random.PRNGKey(0)
    kx, kw, kb, kg, kbeta = jax.random.split(key, 5)
    x = jax.random.normal(kx, (N, Cin, H, W), jnp.float32)
    # ConvTranspose2d weight shape: (in_channels, out_channels, KH, KW)
    weight = jax.random.normal(kw, (Cin, Cout, KH, KW), jnp.float32) * 0.1
    bias = jax.random.normal(kb, (Cout,), jnp.float32) * 0.1
    gamma = 1.0 + 0.1 * jax.random.normal(kg, (Cout,), jnp.float32)
    beta = 0.1 * jax.random.normal(kbeta, (Cout,), jnp.float32)

    out = jax.block_until_ready(decoder_block_forward(x, weight, bias, gamma, beta))
    assert out.shape == (N, Cout, 2 * H, 2 * W), out.shape

    # Strict check vs. a reference fed the same bf16-quantized x / weight the
    # kernel consumes (isolates kernel math from the deliberate bf16 inputs).
    xq = x.astype(jnp.bfloat16).astype(jnp.float32)
    wq = weight.astype(jnp.bfloat16).astype(jnp.float32)
    ref_q = jax.block_until_ready(_reference(xq, wq, bias, gamma, beta))
    np.testing.assert_allclose(np.asarray(out), np.asarray(ref_q),
                               rtol=1e-2, atol=1e-2)

    # Looser end-to-end check vs. the full-f32 reference (bf16 operand budget).
    ref = jax.block_until_ready(_reference(x, weight, bias, gamma, beta))
    np.testing.assert_allclose(np.asarray(out), np.asarray(ref),
                               rtol=5e-2, atol=5e-2)

    print("KERNEL_OK")
</pallas_src>

<mosaic_0001>
module attributes {stable_mosaic.version = 11 : i64} {
  func.func @_matmul_bias_relu_stats_kernel(%arg0: i32, %arg1: memref<512x576xbf16, #tpu.memory_space<vmem>>, %arg2: memref<576x256xbf16, #tpu.memory_space<vmem>>, %arg3: memref<1x256xf32, #tpu.memory_space<vmem>>, %arg4: memref<512x256xbf16, #tpu.memory_space<vmem>>, %arg5: memref<1x1x256xf32, #tpu.memory_space<vmem>>, %arg6: memref<1x1x256xf32, #tpu.memory_space<vmem>>) attributes {dimension_semantics = [#tpu.dimension_semantics<parallel>], iteration_bounds = array<i64: 1>, scalar_prefetch = 0 : i64, scratch_operands = 0 : i64, tpu.core_type = #tpu.core_type<tc>, window_params = [{transform_indices = @transform_0, window_bounds = array<i64: 512, 576>}, {pipeline_mode = #tpu.pipeline_mode<synchronous>, transform_indices = @transform_1, window_bounds = array<i64: 576, 256>}, {pipeline_mode = #tpu.pipeline_mode<synchronous>, transform_indices = @transform_2, window_bounds = array<i64: 1, 256>}, {transform_indices = @transform_3, window_bounds = array<i64: 512, 256>}, {transform_indices = @transform_4, window_bounds = array<i64: 1, 1, 256>}, {transform_indices = @transform_5, window_bounds = array<i64: 1, 1, 256>}]} {
    %c0 = arith.constant 0 : index
    %c0_0 = arith.constant 0 : index
    %0 = vector.load %arg1[%c0, %c0_0] : memref<512x576xbf16, #tpu.memory_space<vmem>>, vector<512x576xbf16>
    %c0_1 = arith.constant 0 : index
    %c0_2 = arith.constant 0 : index
    %1 = vector.load %arg2[%c0_1, %c0_2] : memref<576x256xbf16, #tpu.memory_space<vmem>>, vector<576x256xbf16>
    %cst = arith.constant dense<0.000000e+00> : vector<512x256xf32>
    %2 = tpu.matmul %0, %1, %cst {dimension_numbers = #tpu.dot_dimension_numbers<[1], [0], [0], [1], [0, 0, 1, 1], [], []>} : vector<512x576xbf16>, vector<576x256xbf16>, vector<512x256xf32> -> vector<512x256xf32>
    %c0_3 = arith.constant 0 : index
    %c0_4 = arith.constant 0 : index
    %3 = vector.load %arg3[%c0_3, %c0_4] : memref<1x256xf32, #tpu.memory_space<vmem>>, vector<1x256xf32>
    %4 = vector.broadcast %3 : vector<1x256xf32> to vector<512x256xf32>
    %5 = arith.addf %2, %4 : vector<512x256xf32>
    %cst_5 = arith.constant 0.000000e+00 : f32
    %6 = vector.broadcast %cst_5 : f32 to vector<512x256xf32>
    %7 = arith.maximumf %5, %6 : vector<512x256xf32>
    %8 = arith.truncf %7 : vector<512x256xf32> to vector<512x256xbf16>
    %c0_6 = arith.constant 0 : index
    %c0_7 = arith.constant 0 : index
    %9 = vector.load %arg4[%c0_6, %c0_7] : memref<512x256xbf16, #tpu.memory_space<vmem>>, vector<512x256xbf16>
    tpu.vector_store %arg4[%c0_6, %c0_7], %8 {strides = array<i32>} : memref<512x256xbf16, #tpu.memory_space<vmem>>, vector<512x256xbf16>,
    %10 = tpu.iota {dimensions = array<i32: 0>} : vector<512x1xi32>
    %c512_i32 = arith.constant 512 : i32
    %11 = arith.muli %arg0, %c512_i32 : i32
    %12 = vector.broadcast %11 : i32 to vector<512x1xi32>
    %13 = arith.addi %10, %12 : vector<512x1xi32>
    %c512_i32_8 = arith.constant 512 : i32
    %14 = vector.broadcast %c512_i32_8 : i32 to vector<512x1xi32>
    %15 = arith.cmpi slt, %13, %14 : vector<512x1xi32>
    %cst_9 = arith.constant 0.000000e+00 : f32
    %16 = vector.shape_cast %15 : vector<512x1xi1> to vector<512x1xi1>
    %17 = vector.broadcast %16 : vector<512x1xi1> to vector<512x256xi1>
    %18 = vector.broadcast %cst_9 : f32 to vector<512x256xf32>
    %19 = arith.select %17, %7, %18 : vector<512x256xi1>, vector<512x256xf32>
    %cst_10 = arith.constant dense<0.000000e+00> : vector<256xf32>
    %20 = vector.multi_reduction <add>, %19, %cst_10 [0] : vector<512x256xf32> to vector<256xf32>
    %21 = vector.shape_cast %20 : vector<256xf32> to vector<1x256xf32>
    %c0_11 = arith.constant 0 : index
    %c0_12 = arith.constant 0 : index
    %c0_13 = arith.constant 0 : index
    %22 = vector.load %arg5[%c0_11, %c0_12, %c0_13] : memref<1x1x256xf32, #tpu.memory_space<vmem>>, vector<1x1x256xf32>
    %23 = vector.shape_cast %22 : vector<1x1x256xf32> to vector<1x256xf32>
    %24 = vector.shape_cast %21 : vector<1x256xf32> to vector<1x1x256xf32>
    tpu.vector_store %arg5[%c0_11, %c0_12, %c0_13], %24 {strides = array<i32>} : memref<1x1x256xf32, #tpu.memory_space<vmem>>, vector<1x1x256xf32>,
    %25 = arith.mulf %19, %19 : vector<512x256xf32>
    %cst_14 = arith.constant dense<0.000000e+00> : vector<256xf32>
    %26 = vector.multi_reduction <add>, %25, %cst_14 [0] : vector<512x256xf32> to vector<256xf32>
    %27 = vector.shape_cast %26 : vector<256xf32> to vector<1x256xf32>
    %c0_15 = arith.constant 0 : index
    %c0_16 = arith.constant 0 : index
    %c0_17 = arith.constant 0 : index
    %28 = vector.load %arg6[%c0_15, %c0_16, %c0_17] : memref<1x1x256xf32, #tpu.memory_space<vmem>>, vector<1x1x256xf32>
    %29 = vector.shape_cast %28 : vector<1x1x256xf32> to vector<1x256xf32>
    %30 = vector.shape_cast %27 : vector<1x256xf32> to vector<1x1x256xf32>
    tpu.vector_store %arg6[%c0_15, %c0_16, %c0_17], %30 {strides = array<i32>} : memref<1x1x256xf32, #tpu.memory_space<vmem>>, vector<1x1x256xf32>,
    return
  }
  func.func @transform_0(%arg0: i32) -> (i32, i32) {
    %c0_i32 = arith.constant 0 : i32
    %c0_i32_0 = arith.constant 0 : i32
    return %arg0, %c0_i32 : i32, i32
  }
  func.func @transform_1(%arg0: i32) -> (i32, i32) {
    %c0_i32 = arith.constant 0 : i32
    %c0_i32_0 = arith.constant 0 : i32
    %c0_i32_1 = arith.constant 0 : i32
    return %c0_i32, %c0_i32_0 : i32, i32
  }
  func.func @transform_2(%arg0: i32) -> (i32, i32) {
    %c0_i32 = arith.constant 0 : i32
    %c0_i32_0 = arith.constant 0 : i32
    %c0_i32_1 = arith.constant 0 : i32
    return %c0_i32, %c0_i32_0 : i32, i32
  }
  func.func @transform_3(%arg0: i32) -> (i32, i32) {
    %c0_i32 = arith.constant 0 : i32
    %c0_i32_0 = arith.constant 0 : i32
    return %arg0, %c0_i32 : i32, i32
  }
  func.func @transform_4(%arg0: i32) -> (i32, i32, i32) {
    %c0_i32 = arith.constant 0 : i32
    %c0_i32_0 = arith.constant 0 : i32
    %c0_i32_1 = arith.constant 0 : i32
    return %arg0, %c0_i32, %c0_i32_0 : i32, i32, i32
  }
  func.func @transform_5(%arg0: i32) -> (i32, i32, i32) {
    %c0_i32 = arith.constant 0 : i32
    %c0_i32_0 = arith.constant 0 : i32
    %c0_i32_1 = arith.constant 0 : i32
    return %arg0, %c0_i32, %c0_i32_0 : i32, i32, i32
  }
}

</mosaic_0001>

<llo_original>
// kernel: tpu_custom_call.1
$region0: #{tpu_custom_call.1}
  #allocation0 [shape = 'u32[]', space=smem, size = 0x4, offset = 0x4, fixed_abs, tag = 'smem constant byte address 0x4 - core index']
  #allocation1 [shape = 'u32[72,128]{1,0:T(1,128)}', space=vmem, size = 0x9000, scoped, tag = 'internal scratch']
  %s0 = inlined_call_operand.vmem [shape: bf16[512,576], index: 0, kind: input, shape index: {}]
  %s1 = inlined_call_operand.vmem [shape: bf16[576,256], index: 1, kind: input, shape index: {}]
  %s2 = inlined_call_operand.vmem [shape: f32[1,256], index: 2, kind: input, shape index: {}]
  %s3 = inlined_call_operand.hbm [shape: bf16[512,256], index: 3, kind: output, shape index: {0}]
  %s4 = inlined_call_operand.hbm [shape: f32[1,1,256], index: 4, kind: output, shape index: {1}]
  %s5 = inlined_call_operand.hbm [shape: f32[1,1,256], index: 5, kind: output, shape index: {2}]
  %6 = xla_tuple %s3, %s4, %s5
  %s7 = sld [smem:[#allocation0]]
  $region38: #{tpu_custom_call.1} parent=0
    _
  %s9 = ssub.s32 1, %s7
  %s10 = scalar_select 0, %s9, %s7
  $region1: #{tpu_custom_call.1} parent=0
    #allocation2 [shape = 'u8[262144]{0}', space=vmem, size = 0x40000, scoped, tag = 'output window, operand 0, single buffered']
    #allocation3 [shape = 's32[1]{0}', space=sflag, size = 0x4, scoped, tag = 'scoped memory for tpu_custom_call.1']
    #allocation4 [shape = 'u8[1024]{0}', space=vmem, size = 0x400, scoped, tag = 'output window, operand 1, single buffered']
    #allocation5 [shape = 's32[1]{0}', space=sflag, size = 0x4, scoped, tag = 'scoped memory for tpu_custom_call.1']
    #allocation6 [shape = 'u8[1024]{0}', space=vmem, size = 0x400, scoped, tag = 'output window, operand 2, single buffered']
    %11 = vsyncpa [#allocation3], 0
    %12 = vsyncpa [#allocation5], 0
    // Predicated region
    $region2: #{tpu_custom_call.1} parent=1 // pred_check
      _
    $region3: #{tpu_custom_call.1} parent=1 // pred_check_branch
      %14 = sbr.rel (0) target = $region5
    $region4: #{tpu_custom_call.1} parent=1 // pred_region
      _
    $region5: #{tpu_custom_call.1} parent=1 // pred_fallthru
      _
    // Predicated region
    $region6: #{tpu_custom_call.1} parent=1 // pred_check
      _
    $region7: #{tpu_custom_call.1} parent=1 // pred_check_branch
      %16 = sbr.rel (0) target = $region9
    $region8: #{tpu_custom_call.1} parent=1 // pred_region
      _
    $region9: #{tpu_custom_call.1} parent=1 // pred_fallthru
      _
    // Predicated region
    $region10: #{tpu_custom_call.1} parent=1 // pred_check
      _
    $region11: #{tpu_custom_call.1} parent=1 // pred_check_branch
      %18 = sbr.rel (0) target = $region13
    $region12: #{tpu_custom_call.1} parent=1 // pred_region
      _
    $region13: #{tpu_custom_call.1} parent=1 // pred_fallthru
      _
    %v20 = vld [vmem:[%s0] sm:$0xff]
    %v21 = vld [vmem:[%s0 + $0x8] sm:$0xff]
    %v22 = vld [vmem:[%s0 + $0x10] sm:$0xf]
    %v23 = vld [vmem:[%s0 + $0x14] sm:$0xff]
    %v24 = vld [vmem:[%s0 + $0x1c] sm:$0xff]
    %v25 = vld [vmem:[%s0 + $0x24] sm:$0xf]
    %v26 = vld [vmem:[%s0 + $0x28] sm:$0xff]
    %v27 = vld [vmem:[%s0 + $0x30] sm:$0xff]
    %v28 = vld [vmem:[%s0 + $0x38] sm:$0xf]
    %v29 = vld [vmem:[%s0 + $0x3c] sm:$0xff]
    %v30 = vld [vmem:[%s0 + $0x44] sm:$0xff]
    %v31 = vld [vmem:[%s0 + $0x4c] sm:$0xf]
    %v32 = vld [vmem:[%s0 + $0x50] sm:$0xff]
    %v33 = vld [vmem:[%s0 + $0x58] sm:$0xff]
    %v34 = vld [vmem:[%s0 + $0x60] sm:$0xf]
    %v35 = vld [vmem:[%s0 + $0x64] sm:$0xff]
    %v36 = vld [vmem:[%s0 + $0x6c] sm:$0xff]
    %v37 = vld [vmem:[%s0 + $0x74] sm:$0xf]
    %v38 = vld [vmem:[%s0 + $0x78] sm:$0xff]
    %v39 = vld [vmem:[%s0 + $0x80] sm:$0xff]
    %v40 = vld [vmem:[%s0 + $0x88] sm:$0xf]
    %v41 = vld [vmem:[%s0 + $0x8c] sm:$0xff]
    %v42 = vld [vmem:[%s0 + $0x94] sm:$0xff]
    %v43 = vld [vmem:[%s0 + $0x9c] sm:$0xf]
    %v44 = vld [vmem:[%s0 + $0xa0] sm:$0xff]
    %v45 = vld [vmem:[%s0 + $0xa8] sm:$0xff]
    %v46 = vld [vmem:[%s0 + $0xb0] sm:$0xf]
    %v47 = vld [vmem:[%s0 + $0xb4] sm:$0xff]
    %v48 = vld [vmem:[%s0 + $0xbc] sm:$0xff]
    %v49 = vld [vmem:[%s0 + $0xc4] sm:$0xf]
    %v50 = vld [vmem:[%s0 + $0xc8] sm:$0xff]
    %v51 = vld [vmem:[%s0 + $0xd0] sm:$0xff]
    %v52 = vld [vmem:[%s0 + $0xd8] sm:$0xf]
    %v53 = vld [vmem:[%s0 + $0xdc] sm:$0xff]
    %v54 = vld [vmem:[%s0 + $0xe4] sm:$0xff]
    %v55 = vld [vmem:[%s0 + $0xec] sm:$0xf]
    %v56 = vld [vmem:[%s0 + $0xf0] sm:$0xff]
    %v57 = vld [vmem:[%s0 + $0xf8] sm:$0xff]
    %v58 = vld [vmem:[%s0 + $0x100] sm:$0xf]
    %v59 = vld [vmem:[%s0 + $0x104] sm:$0xff]
    %v60 = vld [vmem:[%s0 + $0x10c] sm:$0xff]
    %v61 = vld [vmem:[%s0 + $0x114] sm:$0xf]
    %v62 = vld [vmem:[%s0 + $0x118] sm:$0xff]
    %v63 = vld [vmem:[%s0 + $0x120] sm:$0xff]
    %v64 = vld [vmem:[%s0 + $0x128] sm:$0xf]
    %v65 = vld [vmem:[%s0 + $0x12c] sm:$0xff]
    %v66 = vld [vmem:[%s0 + $0x134] sm:$0xff]
    %v67 = vld [vmem:[%s0 + $0x13c] sm:$0xf]
    %v68 = vld [vmem:[%s0 + $0x140] sm:$0xff]
    %v69 = vld [vmem:[%s0 + $0x148] sm:$0xff]
    %v70 = vld [vmem:[%s0 + $0x150] sm:$0xf]
    %v71 = vld [vmem:[%s0 + $0x154] sm:$0xff]
    %v72 = vld [vmem:[%s0 + $0x15c] sm:$0xff]
    %v73 = vld [vmem:[%s0 + $0x164] sm:$0xf]
    %v74 = vld [vmem:[%s0 + $0x168] sm:$0xff]
    %v75 = vld [vmem:[%s0 + $0x170] sm:$0xff]
    %v76 = vld [vmem:[%s0 + $0x178] sm:$0xf]
    %v77 = vld [vmem:[%s0 + $0x17c] sm:$0xff]
    %v78 = vld [vmem:[%s0 + $0x184] sm:$0xff]
    %v79 = vld [vmem:[%s0 + $0x18c] sm:$0xf]
    %v80 = vld [vmem:[%s0 + $0x190] sm:$0xff]
    %v81 = vld [vmem:[%s0 + $0x198] sm:$0xff]
    %v82 = vld [vmem:[%s0 + $0x1a0] sm:$0xf]
    %v83 = vld [vmem:[%s0 + $0x1a4] sm:$0xff]
    %v84 = vld [vmem:[%s0 + $0x1ac] sm:$0xff]
    %v85 = vld [vmem:[%s0 + $0x1b4] sm:$0xf]
    %v86 = vld [vmem:[%s0 + $0x1b8] sm:$0xff]
    %v87 = vld [vmem:[%s0 + $0x1c0] sm:$0xff]
    %v88 = vld [vmem:[%s0 + $0x1c8] sm:$0xf]
    %v89 = vld [vmem:[%s0 + $0x1cc] sm:$0xff]
    %v90 = vld [vmem:[%s0 + $0x1d4] sm:$0xff]
    %v91 = vld [vmem:[%s0 + $0x1dc] sm:$0xf]
    %v92 = vld [vmem:[%s0 + $0x1e0] sm:$0xff]
    %v93 = vld [vmem:[%s0 + $0x1e8] sm:$0xff]
    %v94 = vld [vmem:[%s0 + $0x1f0] sm:$0xf]
    %v95 = vld [vmem:[%s0 + $0x1f4] sm:$0xff]
    %v96 = vld [vmem:[%s0 + $0x1fc] sm:$0xff]
    %v97 = vld [vmem:[%s0 + $0x204] sm:$0xf]
    %v98 = vld [vmem:[%s0 + $0x208] sm:$0xff]
    %v99 = vld [vmem:[%s0 + $0x210] sm:$0xff]
    %v100 = vld [vmem:[%s0 + $0x218] sm:$0xf]
    %v101 = vld [vmem:[%s0 + $0x21c] sm:$0xff]
    %v102 = vld [vmem:[%s0 + $0x224] sm:$0xff]
    %v103 = vld [vmem:[%s0 + $0x22c] sm:$0xf]
    %v104 = vld [vmem:[%s0 + $0x230] sm:$0xff]
    %v105 = vld [vmem:[%s0 + $0x238] sm:$0xff]
    %v106 = vld [vmem:[%s0 + $0x240] sm:$0xf]
    %v107 = vld [vmem:[%s0 + $0x244] sm:$0xff]
    %v108 = vld [vmem:[%s0 + $0x24c] sm:$0xff]
    %v109 = vld [vmem:[%s0 + $0x254] sm:$0xf]
    %v110 = vld [vmem:[%s0 + $0x258] sm:$0xff]
    %v111 = vld [vmem:[%s0 + $0x260] sm:$0xff]
    %v112 = vld [vmem:[%s0 + $0x268] sm:$0xf]
    %v113 = vld [vmem:[%s0 + $0x26c] sm:$0xff]
    %v114 = vld [vmem:[%s0 + $0x274] sm:$0xff]
    %v115 = vld [vmem:[%s0 + $0x27c] sm:$0xf]
    %v116 = vld [vmem:[%s0 + $0x280] sm:$0xff]
    %v117 = vld [vmem:[%s0 + $0x288] sm:$0xff]
    %v118 = vld [vmem:[%s0 + $0x290] sm:$0xf]
    %v119 = vld [vmem:[%s0 + $0x294] sm:$0xff]
    %v120 = vld [vmem:[%s0 + $0x29c] sm:$0xff]
    %v121 = vld [vmem:[%s0 + $0x2a4] sm:$0xf]
    %v122 = vld [vmem:[%s0 + $0x2a8] sm:$0xff]
    %v123 = vld [vmem:[%s0 + $0x2b0] sm:$0xff]
    %v124 = vld [vmem:[%s0 + $0x2b8] sm:$0xf]
    %v125 = vld [vmem:[%s0 + $0x2bc] sm:$0xff]
    %v126 = vld [vmem:[%s0 + $0x2c4] sm:$0xff]
    %v127 = vld [vmem:[%s0 + $0x2cc] sm:$0xf]
    %v128 = vld [vmem:[%s0 + $0x2d0] sm:$0xff]
    %v129 = vld [vmem:[%s0 + $0x2d8] sm:$0xff]
    %v130 = vld [vmem:[%s0 + $0x2e0] sm:$0xf]
    %v131 = vld [vmem:[%s0 + $0x2e4] sm:$0xff]
    %v132 = vld [vmem:[%s0 + $0x2ec] sm:$0xff]
    %v133 = vld [vmem:[%s0 + $0x2f4] sm:$0xf]
    %v134 = vld [vmem:[%s0 + $0x2f8] sm:$0xff]
    %v135 = vld [vmem:[%s0 + $0x300] sm:$0xff]
    %v136 = vld [vmem:[%s0 + $0x308] sm:$0xf]
    %v137 = vld [vmem:[%s0 + $0x30c] sm:$0xff]
    %v138 = vld [vmem:[%s0 + $0x314] sm:$0xff]
    %v139 = vld [vmem:[%s0 + $0x31c] sm:$0xf]
    %v140 = vld [vmem:[%s0 + $0x320] sm:$0xff]
    %v141 = vld [vmem:[%s0 + $0x328] sm:$0xff]
    %v142 = vld [vmem:[%s0 + $0x330] sm:$0xf]
    %v143 = vld [vmem:[%s0 + $0x334] sm:$0xff]
    %v144 = vld [vmem:[%s0 + $0x33c] sm:$0xff]
    %v145 = vld [vmem:[%s0 + $0x344] sm:$0xf]
    %v146 = vld [vmem:[%s0 + $0x348] sm:$0xff]
    %v147 = vld [vmem:[%s0 + $0x350] sm:$0xff]
    %v148 = vld [vmem:[%s0 + $0x358] sm:$0xf]
    %v149 = vld [vmem:[%s0 + $0x35c] sm:$0xff]
    %v150 = vld [vmem:[%s0 + $0x364] sm:$0xff]
    %v151 = vld [vmem:[%s0 + $0x36c] sm:$0xf]
    %v152 = vld [vmem:[%s0 + $0x370] sm:$0xff]
    %v153 = vld [vmem:[%s0 + $0x378] sm:$0xff]
    %v154 = vld [vmem:[%s0 + $0x380] sm:$0xf]
    %v155 = vld [vmem:[%s0 + $0x384] sm:$0xff]
    %v156 = vld [vmem:[%s0 + $0x38c] sm:$0xff]
    %v157 = vld [vmem:[%s0 + $0x394] sm:$0xf]
    %v158 = vld [vmem:[%s0 + $0x398] sm:$0xff]
    %v159 = vld [vmem:[%s0 + $0x3a0] sm:$0xff]
    %v160 = vld [vmem:[%s0 + $0x3a8] sm:$0xf]
    %v161 = vld [vmem:[%s0 + $0x3ac] sm:$0xff]
    %v162 = vld [vmem:[%s0 + $0x3b4] sm:$0xff]
    %v163 = vld [vmem:[%s0 + $0x3bc] sm:$0xf]
    %v164 = vld [vmem:[%s0 + $0x3c0] sm:$0xff]
    %v165 = vld [vmem:[%s0 + $0x3c8] sm:$0xff]
    %v166 = vld [vmem:[%s0 + $0x3d0] sm:$0xf]
    %v167 = vld [vmem:[%s0 + $0x3d4] sm:$0xff]
    %v168 = vld [vmem:[%s0 + $0x3dc] sm:$0xff]
    %v169 = vld [vmem:[%s0 + $0x3e4] sm:$0xf]
    %v170 = vld [vmem:[%s0 + $0x3e8] sm:$0xff]
    %v171 = vld [vmem:[%s0 + $0x3f0] sm:$0xff]
    %v172 = vld [vmem:[%s0 + $0x3f8] sm:$0xf]
    %v173 = vld [vmem:[%s0 + $0x3fc] sm:$0xff]
    %v174 = vld [vmem:[%s0 + $0x404] sm:$0xff]
    %v175 = vld [vmem:[%s0 + $0x40c] sm:$0xf]
    %v176 = vld [vmem:[%s0 + $0x410] sm:$0xff]
    %v177 = vld [vmem:[%s0 + $0x418] sm:$0xff]
    %v178 = vld [vmem:[%s0 + $0x420] sm:$0xf]
    %v179 = vld [vmem:[%s0 + $0x424] sm:$0xff]
    %v180 = vld [vmem:[%s0 + $0x42c] sm:$0xff]
    %v181 = vld [vmem:[%s0 + $0x434] sm:$0xf]
    %v182 = vld [vmem:[%s0 + $0x438] sm:$0xff]
    %v183 = vld [vmem:[%s0 + $0x440] sm:$0xff]
    %v184 = vld [vmem:[%s0 + $0x448] sm:$0xf]
    %v185 = vld [vmem:[%s0 + $0x44c] sm:$0xff]
    %v186 = vld [vmem:[%s0 + $0x454] sm:$0xff]
    %v187 = vld [vmem:[%s0 + $0x45c] sm:$0xf]
    %v188 = vld [vmem:[%s0 + $0x460] sm:$0xff]
    %v189 = vld [vmem:[%s0 + $0x468] sm:$0xff]
    %v190 = vld [vmem:[%s0 + $0x470] sm:$0xf]
    %v191 = vld [vmem:[%s0 + $0x474] sm:$0xff]
    %v192 = vld [vmem:[%s0 + $0x47c] sm:$0xff]
    %v193 = vld [vmem:[%s0 + $0x484] sm:$0xf]
    %v194 = vld [vmem:[%s0 + $0x488] sm:$0xff]
    %v195 = vld [vmem:[%s0 + $0x490] sm:$0xff]
    %v196 = vld [vmem:[%s0 + $0x498] sm:$0xf]
    %v197 = vld [vmem:[%s0 + $0x49c] sm:$0xff]
    %v198 = vld [vmem:[%s0 + $0x4a4] sm:$0xff]
    %v199 = vld [vmem:[%s0 + $0x4ac] sm:$0xf]
    %v200 = vld [vmem:[%s0 + $0x4b0] sm:$0xff]
    %v201 = vld [vmem:[%s0 + $0x4b8] sm:$0xff]
    %v202 = vld [vmem:[%s0 + $0x4c0] sm:$0xf]
    %v203 = vld [vmem:[%s0 + $0x4c4] sm:$0xff]
    %v204 = vld [vmem:[%s0 + $0x4cc] sm:$0xff]
    %v205 = vld [vmem:[%s0 + $0x4d4] sm:$0xf]
    %v206 = vld [vmem:[%s0 + $0x4d8] sm:$0xff]
    %v207 = vld [vmem:[%s0 + $0x4e0] sm:$0xff]
    %v208 = vld [vmem:[%s0 + $0x4e8] sm:$0xf]
    %v209 = vld [vmem:[%s0 + $0x4ec] sm:$0xff]
    %v210 = vld [vmem:[%s0 + $0x4f4] sm:$0xff]
    %v211 = vld [vmem:[%s0 + $0x4fc] sm:$0xf]
    %v212 = vld [vmem:[%s1] sm:$0xff]
    %v213 = vld [vmem:[%s1 + $0x8] sm:$0xff]
    %v214 = vld [vmem:[%s1 + $0x10] sm:$0xff]
    %v215 = vld [vmem:[%s1 + $0x18] sm:$0xff]
    %v216 = vld [vmem:[%s1 + $0x20] sm:$0xff]
    %v217 = vld [vmem:[%s1 + $0x28] sm:$0xff]
    %v218 = vld [vmem:[%s1 + $0x30] sm:$0xff]
    %v219 = vld [vmem:[%s1 + $0x38] sm:$0xff]
    %v220 = vld [vmem:[%s1 + $0x40] sm:$0xff]
    %v221 = vld [vmem:[%s1 + $0x48] sm:$0xff]
    %v222 = vld [vmem:[%s1 + $0x50] sm:$0xff]
    %v223 = vld [vmem:[%s1 + $0x58] sm:$0xff]
    %v224 = vld [vmem:[%s1 + $0x60] sm:$0xff]
    %v225 = vld [vmem:[%s1 + $0x68] sm:$0xff]
    %v226 = vld [vmem:[%s1 + $0x70] sm:$0xff]
    %v227 = vld [vmem:[%s1 + $0x78] sm:$0xff]
    %v228 = vld [vmem:[%s1 + $0x80] sm:$0xff]
    %v229 = vld [vmem:[%s1 + $0x88] sm:$0xff]
    %v230 = vld [vmem:[%s1 + $0x90] sm:$0xff]
    %v231 = vld [vmem:[%s1 + $0x98] sm:$0xff]
    %v232 = vld [vmem:[%s1 + $0xa0] sm:$0xff]
    %v233 = vld [vmem:[%s1 + $0xa8] sm:$0xff]
    %v234 = vld [vmem:[%s1 + $0xb0] sm:$0xff]
    %v235 = vld [vmem:[%s1 + $0xb8] sm:$0xff]
    %v236 = vld [vmem:[%s1 + $0xc0] sm:$0xff]
    %v237 = vld [vmem:[%s1 + $0xc8] sm:$0xff]
    %v238 = vld [vmem:[%s1 + $0xd0] sm:$0xff]
    %v239 = vld [vmem:[%s1 + $0xd8] sm:$0xff]
    %v240 = vld [vmem:[%s1 + $0xe0] sm:$0xff]
    %v241 = vld [vmem:[%s1 + $0xe8] sm:$0xff]
    %v242 = vld [vmem:[%s1 + $0xf0] sm:$0xff]
    %v243 = vld [vmem:[%s1 + $0xf8] sm:$0xff]
    %v244 = vld [vmem:[%s1 + $0x100] sm:$0xff]
    %v245 = vld [vmem:[%s1 + $0x108] sm:$0xff]
    %v246 = vld [vmem:[%s1 + $0x110] sm:$0xff]
    %v247 = vld [vmem:[%s1 + $0x118] sm:$0xff]
    %v248 = vld [vmem:[%s1 + $0x120] sm:$0xff]
    %v249 = vld [vmem:[%s1 + $0x128] sm:$0xff]
    %v250 = vld [vmem:[%s1 + $0x130] sm:$0xff]
    %v251 = vld [vmem:[%s1 + $0x138] sm:$0xff]
    %v252 = vld [vmem:[%s1 + $0x140] sm:$0xff]
    %v253 = vld [vmem:[%s1 + $0x148] sm:$0xff]
    %v254 = vld [vmem:[%s1 + $0x150] sm:$0xff]
    %v255 = vld [vmem:[%s1 + $0x158] sm:$0xff]
    %v256 = vld [vmem:[%s1 + $0x160] sm:$0xff]
    %v257 = vld [vmem:[%s1 + $0x168] sm:$0xff]
    %v258 = vld [vmem:[%s1 + $0x170] sm:$0xff]
    %v259 = vld [vmem:[%s1 + $0x178] sm:$0xff]
    %v260 = vld [vmem:[%s1 + $0x180] sm:$0xff]
    %v261 = vld [vmem:[%s1 + $0x188] sm:$0xff]
    %v262 = vld [vmem:[%s1 + $0x190] sm:$0xff]
    %v263 = vld [vmem:[%s1 + $0x198] sm:$0xff]
    %v264 = vld [vmem:[%s1 + $0x1a0] sm:$0xff]
    %v265 = vld [vmem:[%s1 + $0x1a8] sm:$0xff]
    %v266 = vld [vmem:[%s1 + $0x1b0] sm:$0xff]
    %v267 = vld [vmem:[%s1 + $0x1b8] sm:$0xff]
    %v268 = vld [vmem:[%s1 + $0x1c0] sm:$0xff]
    %v269 = vld [vmem:[%s1 + $0x1c8] sm:$0xff]
    %v270 = vld [vmem:[%s1 + $0x1d0] sm:$0xff]
    %v271 = vld [vmem:[%s1 + $0x1d8] sm:$0xff]
    %v272 = vld [vmem:[%s1 + $0x1e0] sm:$0xff]
    %v273 = vld [vmem:[%s1 + $0x1e8] sm:$0xff]
    %v274 = vld [vmem:[%s1 + $0x1f0] sm:$0xff]
    %v275 = vld [vmem:[%s1 + $0x1f8] sm:$0xff]
    %v276 = vld [vmem:[%s1 + $0x200] sm:$0xff]
    %v277 = vld [vmem:[%s1 + $0x208] sm:$0xff]
    %v278 = vld [vmem:[%s1 + $0x210] sm:$0xff]
    %v279 = vld [vmem:[%s1 + $0x218] sm:$0xff]
    %v280 = vld [vmem:[%s1 + $0x220] sm:$0xff]
    %v281 = vld [vmem:[%s1 + $0x228] sm:$0xff]
    %v282 = vld [vmem:[%s1 + $0x230] sm:$0xff]
    %v283 = vld [vmem:[%s1 + $0x238] sm:$0xff]
    %v284 = vld [vmem:[%s2] sm:$0x3]
    %v286 = vperm.slane %v284, 0
    %v287 = vperm.slane %v284, 1
    %v482 = vunpack.c.l.b16 %v20
    %v483 = vunpack.c.h.b16 %v20
    %v484 = vunpack.c.l.b16 %v21
    %v485 = vunpack.c.h.b16 %v21
    %v486 = vunpack.c.l.b16 %v22
    %v487 = vunpack.c.l.b16 %v23
    %v488 = vunpack.c.h.b16 %v23
    %v489 = vunpack.c.l.b16 %v24
    %v490 = vunpack.c.h.b16 %v24
    %v491 = vunpack.c.l.b16 %v25
    %v492 = vunpack.c.l.b16 %v26
    %v493 = vunpack.c.h.b16 %v26
    %v494 = vunpack.c.l.b16 %v27
    %v495 = vunpack.c.h.b16 %v27
    %v496 = vunpack.c.l.b16 %v28
    %v497 = vunpack.c.l.b16 %v29
    %v498 = vunpack.c.h.b16 %v29
    %v499 = vunpack.c.l.b16 %v30
    %v500 = vunpack.c.h.b16 %v30
    %v501 = vunpack.c.l.b16 %v31
    %v502 = vunpack.c.l.b16 %v32
    %v503 = vunpack.c.h.b16 %v32
    %v504 = vunpack.c.l.b16 %v33
    %v505 = vunpack.c.h.b16 %v33
    %v506 = vunpack.c.l.b16 %v34
    %v507 = vunpack.c.l.b16 %v35
    %v508 = vunpack.c.h.b16 %v35
    %v509 = vunpack.c.l.b16 %v36
    %v510 = vunpack.c.h.b16 %v36
    %v511 = vunpack.c.l.b16 %v37
    %v512 = vunpack.c.l.b16 %v38
    %v513 = vunpack.c.h.b16 %v38
    %v514 = vunpack.c.l.b16 %v39
    %v515 = vunpack.c.h.b16 %v39
    %v516 = vunpack.c.l.b16 %v40
    %v517 = vunpack.c.l.b16 %v41
    %v518 = vunpack.c.h.b16 %v41
    %v519 = vunpack.c.l.b16 %v42
    %v520 = vunpack.c.h.b16 %v42
    %v521 = vunpack.c.l.b16 %v43
    %v522 = vunpack.c.l.b16 %v44
    %v523 = vunpack.c.h.b16 %v44
    %v524 = vunpack.c.l.b16 %v45
    %v525 = vunpack.c.h.b16 %v45
    %v526 = vunpack.c.l.b16 %v46
    %v527 = vunpack.c.l.b16 %v47
    %v528 = vunpack.c.h.b16 %v47
    %v529 = vunpack.c.l.b16 %v48
    %v530 = vunpack.c.h.b16 %v48
    %v531 = vunpack.c.l.b16 %v49
    %v532 = vunpack.c.l.b16 %v50
    %v533 = vunpack.c.h.b16 %v50
    %v534 = vunpack.c.l.b16 %v51
    %v535 = vunpack.c.h.b16 %v51
    %v536 = vunpack.c.l.b16 %v52
    %v537 = vunpack.c.l.b16 %v53
    %v538 = vunpack.c.h.b16 %v53
    %v539 = vunpack.c.l.b16 %v54
    %v540 = vunpack.c.h.b16 %v54
    %v541 = vunpack.c.l.b16 %v55
    %v542 = vunpack.c.l.b16 %v56
    %v543 = vunpack.c.h.b16 %v56
    %v544 = vunpack.c.l.b16 %v57
    %v545 = vunpack.c.h.b16 %v57
    %v546 = vunpack.c.l.b16 %v58
    %v547 = vunpack.c.l.b16 %v59
    %v548 = vunpack.c.h.b16 %v59
    %v549 = vunpack.c.l.b16 %v60
    %v550 = vunpack.c.h.b16 %v60
    %v551 = vunpack.c.l.b16 %v61
    %v552 = vunpack.c.l.b16 %v62
    %v553 = vunpack.c.h.b16 %v62
    %v554 = vunpack.c.l.b16 %v63
    %v555 = vunpack.c.h.b16 %v63
    %v556 = vunpack.c.l.b16 %v64
    %v557 = vunpack.c.l.b16 %v65
    %v558 = vunpack.c.h.b16 %v65
    %v559 = vunpack.c.l.b16 %v66
    %v560 = vunpack.c.h.b16 %v66
    %v561 = vunpack.c.l.b16 %v67
    %v562 = vunpack.c.l.b16 %v68
    %v563 = vunpack.c.h.b16 %v68
    %v564 = vunpack.c.l.b16 %v69
    %v565 = vunpack.c.h.b16 %v69
    %v566 = vunpack.c.l.b16 %v70
    %v567 = vunpack.c.l.b16 %v71
    %v568 = vunpack.c.h.b16 %v71
    %v569 = vunpack.c.l.b16 %v72
    %v570 = vunpack.c.h.b16 %v72
    %v571 = vunpack.c.l.b16 %v73
    %v572 = vunpack.c.l.b16 %v74
    %v573 = vunpack.c.h.b16 %v74
    %v574 = vunpack.c.l.b16 %v75
    %v575 = vunpack.c.h.b16 %v75
    %v576 = vunpack.c.l.b16 %v76
    %v577 = vunpack.c.l.b16 %v77
    %v578 = vunpack.c.h.b16 %v77
    %v579 = vunpack.c.l.b16 %v78
    %v580 = vunpack.c.h.b16 %v78
    %v581 = vunpack.c.l.b16 %v79
    %v582 = vunpack.c.l.b16 %v80
    %v583 = vunpack.c.h.b16 %v80
    %v584 = vunpack.c.l.b16 %v81
    %v585 = vunpack.c.h.b16 %v81
    %v586 = vunpack.c.l.b16 %v82
    %v587 = vunpack.c.l.b16 %v83
    %v588 = vunpack.c.h.b16 %v83
    %v589 = vunpack.c.l.b16 %v84
    %v590 = vunpack.c.h.b16 %v84
    %v591 = vunpack.c.l.b16 %v85
    %v592 = vunpack.c.l.b16 %v86
    %v593 = vunpack.c.h.b16 %v86
    %v594 = vunpack.c.l.b16 %v87
    %v595 = vunpack.c.h.b16 %v87
    %v596 = vunpack.c.l.b16 %v88
    %v597 = vunpack.c.l.b16 %v89
    %v598 = vunpack.c.h.b16 %v89
    %v599 = vunpack.c.l.b16 %v90
    %v600 = vunpack.c.h.b16 %v90
    %v601 = vunpack.c.l.b16 %v91
    %v602 = vunpack.c.l.b16 %v92
    %v603 = vunpack.c.h.b16 %v92
    %v604 = vunpack.c.l.b16 %v93
    %v605 = vunpack.c.h.b16 %v93
    %v606 = vunpack.c.l.b16 %v94
    %v607 = vunpack.c.l.b16 %v95
    %v608 = vunpack.c.h.b16 %v95
    %v609 = vunpack.c.l.b16 %v96
    %v610 = vunpack.c.h.b16 %v96
    %v611 = vunpack.c.l.b16 %v97
    %v612 = vunpack.c.l.b16 %v98
    %v613 = vunpack.c.h.b16 %v98
    %v614 = vunpack.c.l.b16 %v99
    %v615 = vunpack.c.h.b16 %v99
    %v616 = vunpack.c.l.b16 %v100
    %v617 = vunpack.c.l.b16 %v101
    %v618 = vunpack.c.h.b16 %v101
    %v619 = vunpack.c.l.b16 %v102
    %v620 = vunpack.c.h.b16 %v102
    %v621 = vunpack.c.l.b16 %v103
    %v622 = vunpack.c.l.b16 %v104
    %v623 = vunpack.c.h.b16 %v104
    %v624 = vunpack.c.l.b16 %v105
    %v625 = vunpack.c.h.b16 %v105
    %v626 = vunpack.c.l.b16 %v106
    %v627 = vunpack.c.l.b16 %v107
    %v628 = vunpack.c.h.b16 %v107
    %v629 = vunpack.c.l.b16 %v108
    %v630 = vunpack.c.h.b16 %v108
    %v631 = vunpack.c.l.b16 %v109
    %v632 = vunpack.c.l.b16 %v110
    %v633 = vunpack.c.h.b16 %v110
    %v634 = vunpack.c.l.b16 %v111
    %v635 = vunpack.c.h.b16 %v111
    %v636 = vunpack.c.l.b16 %v112
    %v637 = vunpack.c.l.b16 %v113
    %v638 = vunpack.c.h.b16 %v113
    %v639 = vunpack.c.l.b16 %v114
    %v640 = vunpack.c.h.b16 %v114
    %v641 = vunpack.c.l.b16 %v115
    %v642 = vunpack.c.l.b16 %v116
    %v643 = vunpack.c.h.b16 %v116
    %v644 = vunpack.c.l.b16 %v117
    %v645 = vunpack.c.h.b16 %v117
    %v646 = vunpack.c.l.b16 %v118
    %v647 = vunpack.c.l.b16 %v119
    %v648 = vunpack.c.h.b16 %v119
    %v649 = vunpack.c.l.b16 %v120
    %v650 = vunpack.c.h.b16 %v120
    %v651 = vunpack.c.l.b16 %v121
    %v652 = vunpack.c.l.b16 %v122
    %v653 = vunpack.c.h.b16 %v122
    %v654 = vunpack.c.l.b16 %v123
    %v655 = vunpack.c.h.b16 %v123
    %v656 = vunpack.c.l.b16 %v124
    %v657 = vunpack.c.l.b16 %v125
    %v658 = vunpack.c.h.b16 %v125
    %v659 = vunpack.c.l.b16 %v126
    %v660 = vunpack.c.h.b16 %v126
    %v661 = vunpack.c.l.b16 %v127
    %v662 = vunpack.c.l.b16 %v128
    %v663 = vunpack.c.h.b16 %v128
    %v664 = vunpack.c.l.b16 %v129
    %v665 = vunpack.c.h.b16 %v129
    %v666 = vunpack.c.l.b16 %v130
    %v667 = vunpack.c.l.b16 %v131
    %v668 = vunpack.c.h.b16 %v131
    %v669 = vunpack.c.l.b16 %v132
    %v670 = vunpack.c.h.b16 %v132
    %v671 = vunpack.c.l.b16 %v133
    %v672 = vunpack.c.l.b16 %v134
    %v673 = vunpack.c.h.b16 %v134
    %v674 = vunpack.c.l.b16 %v135
    %v675 = vunpack.c.h.b16 %v135
    %v676 = vunpack.c.l.b16 %v136
    %v677 = vunpack.c.l.b16 %v137
    %v678 = vunpack.c.h.b16 %v137
    %v679 = vunpack.c.l.b16 %v138
    %v680 = vunpack.c.h.b16 %v138
    %v681 = vunpack.c.l.b16 %v139
    %v682 = vunpack.c.l.b16 %v140
    %v683 = vunpack.c.h.b16 %v140
    %v684 = vunpack.c.l.b16 %v141
    %v685 = vunpack.c.h.b16 %v141
    %v686 = vunpack.c.l.b16 %v142
    %v687 = vunpack.c.l.b16 %v143
    %v688 = vunpack.c.h.b16 %v143
    %v689 = vunpack.c.l.b16 %v144
    %v690 = vunpack.c.h.b16 %v144
    %v691 = vunpack.c.l.b16 %v145
    %v692 = vunpack.c.l.b16 %v146
    %v693 = vunpack.c.h.b16 %v146
    %v694 = vunpack.c.l.b16 %v147
    %v695 = vunpack.c.h.b16 %v147
    %v696 = vunpack.c.l.b16 %v148
    %v697 = vunpack.c.l.b16 %v149
    %v698 = vunpack.c.h.b16 %v149
    %v699 = vunpack.c.l.b16 %v150
    %v700 = vunpack.c.h.b16 %v150
    %v701 = vunpack.c.l.b16 %v151
    %v702 = vunpack.c.l.b16 %v152
    %v703 = vunpack.c.h.b16 %v152
    %v704 = vunpack.c.l.b16 %v153
    %v705 = vunpack.c.h.b16 %v153
    %v706 = vunpack.c.l.b16 %v154
    %v707 = vunpack.c.l.b16 %v155
    %v708 = vunpack.c.h.b16 %v155
    %v709 = vunpack.c.l.b16 %v156
    %v710 = vunpack.c.h.b16 %v156
    %v711 = vunpack.c.l.b16 %v157
    %v712 = vunpack.c.l.b16 %v158
    %v713 = vunpack.c.h.b16 %v158
    %v714 = vunpack.c.l.b16 %v159
    %v715 = vunpack.c.h.b16 %v159
    %v716 = vunpack.c.l.b16 %v160
    %v717 = vunpack.c.l.b16 %v161
    %v718 = vunpack.c.h.b16 %v161
    %v719 = vunpack.c.l.b16 %v162
    %v720 = vunpack.c.h.b16 %v162
    %v721 = vunpack.c.l.b16 %v163
    %v722 = vunpack.c.l.b16 %v164
    %v723 = vunpack.c.h.b16 %v164
    %v724 = vunpack.c.l.b16 %v165
    %v725 = vunpack.c.h.b16 %v165
    %v726 = vunpack.c.l.b16 %v166
    %v727 = vunpack.c.l.b16 %v167
    %v728 = vunpack.c.h.b16 %v167
    %v729 = vunpack.c.l.b16 %v168
    %v730 = vunpack.c.h.b16 %v168
    %v731 = vunpack.c.l.b16 %v169
    %v732 = vunpack.c.l.b16 %v170
    %v733 = vunpack.c.h.b16 %v170
    %v734 = vunpack.c.l.b16 %v171
    %v735 = vunpack.c.h.b16 %v171
    %v736 = vunpack.c.l.b16 %v172
    %v737 = vunpack.c.l.b16 %v173
    %v738 = vunpack.c.h.b16 %v173
    %v739 = vunpack.c.l.b16 %v174
    %v740 = vunpack.c.h.b16 %v174
    %v741 = vunpack.c.l.b16 %v175
    %v742 = vunpack.c.l.b16 %v176
    %v743 = vunpack.c.h.b16 %v176
    %v744 = vunpack.c.l.b16 %v177
    %v745 = vunpack.c.h.b16 %v177
    %v746 = vunpack.c.l.b16 %v178
    %v747 = vunpack.c.l.b16 %v179
    %v748 = vunpack.c.h.b16 %v179
    %v749 = vunpack.c.l.b16 %v180
    %v750 = vunpack.c.h.b16 %v180
    %v751 = vunpack.c.l.b16 %v181
    %v752 = vunpack.c.l.b16 %v182
    %v753 = vunpack.c.h.b16 %v182
    %v754 = vunpack.c.l.b16 %v183
    %v755 = vunpack.c.h.b16 %v183
    %v756 = vunpack.c.l.b16 %v184
    %v757 = vunpack.c.l.b16 %v185
    %v758 = vunpack.c.h.b16 %v185
    %v759 = vunpack.c.l.b16 %v186
    %v760 = vunpack.c.h.b16 %v186
    %v761 = vunpack.c.l.b16 %v187
    %v762 = vunpack.c.l.b16 %v188
    %v763 = vunpack.c.h.b16 %v188
    %v764 = vunpack.c.l.b16 %v189
    %v765 = vunpack.c.h.b16 %v189
    %v766 = vunpack.c.l.b16 %v190
    %v767 = vunpack.c.l.b16 %v191
    %v768 = vunpack.c.h.b16 %v191
    %v769 = vunpack.c.l.b16 %v192
    %v770 = vunpack.c.h.b16 %v192
    %v771 = vunpack.c.l.b16 %v193
    %v772 = vunpack.c.l.b16 %v194
    %v773 = vunpack.c.h.b16 %v194
    %v774 = vunpack.c.l.b16 %v195
    %v775 = vunpack.c.h.b16 %v195
    %v776 = vunpack.c.l.b16 %v196
    %v777 = vunpack.c.l.b16 %v197
    %v778 = vunpack.c.h.b16 %v197
    %v779 = vunpack.c.l.b16 %v198
    %v780 = vunpack.c.h.b16 %v198
    %v781 = vunpack.c.l.b16 %v199
    %v782 = vunpack.c.l.b16 %v200
    %v783 = vunpack.c.h.b16 %v200
    %v784 = vunpack.c.l.b16 %v201
    %v785 = vunpack.c.h.b16 %v201
    %v786 = vunpack.c.l.b16 %v202
    %v787 = vunpack.c.l.b16 %v203
    %v788 = vunpack.c.h.b16 %v203
    %v789 = vunpack.c.l.b16 %v204
    %v790 = vunpack.c.h.b16 %v204
    %v791 = vunpack.c.l.b16 %v205
    %v792 = vunpack.c.l.b16 %v206
    %v793 = vunpack.c.h.b16 %v206
    %v794 = vunpack.c.l.b16 %v207
    %v795 = vunpack.c.h.b16 %v207
    %v796 = vunpack.c.l.b16 %v208
    %v797 = vunpack.c.l.b16 %v209
    %v798 = vunpack.c.h.b16 %v209
    %v799 = vunpack.c.l.b16 %v210
    %v800 = vunpack.c.h.b16 %v210
    %v801 = vunpack.c.l.b16 %v211
    %v802 = vpack.c.b16 %v487, %v482
    %v803 = vpack.c.b16 %v488, %v483
    %v804 = vpack.c.b16 %v489, %v484
    %v805 = vpack.c.b16 %v490, %v485
    %v806 = vpack.c.b16 %v491, %v486
    %v807 = vpack.c.b16 %v497, %v492
    %v808 = vpack.c.b16 %v498, %v493
    %v809 = vpack.c.b16 %v499, %v494
    %v810 = vpack.c.b16 %v500, %v495
    %v811 = vpack.c.b16 %v501, %v496
    %v812 = vpack.c.b16 %v507, %v502
    %v813 = vpack.c.b16 %v508, %v503
    %v814 = vpack.c.b16 %v509, %v504
    %v815 = vpack.c.b16 %v510, %v505
    %v816 = vpack.c.b16 %v511, %v506
    %v817 = vpack.c.b16 %v517, %v512
    %v818 = vpack.c.b16 %v518, %v513
    %v819 = vpack.c.b16 %v519, %v514
    %v820 = vpack.c.b16 %v520, %v515
    %v821 = vpack.c.b16 %v521, %v516
    %v822 = vpack.c.b16 %v527, %v522
    %v823 = vpack.c.b16 %v528, %v523
    %v824 = vpack.c.b16 %v529, %v524
    %v825 = vpack.c.b16 %v530, %v525
    %v826 = vpack.c.b16 %v531, %v526
    %v827 = vpack.c.b16 %v537, %v532
    %v828 = vpack.c.b16 %v538, %v533
    %v829 = vpack.c.b16 %v539, %v534
    %v830 = vpack.c.b16 %v540, %v535
    %v831 = vpack.c.b16 %v541, %v536
    %v832 = vpack.c.b16 %v547, %v542
    %v833 = vpack.c.b16 %v548, %v543
    %v834 = vpack.c.b16 %v549, %v544
    %v835 = vpack.c.b16 %v550, %v545
    %v836 = vpack.c.b16 %v551, %v546
    %v837 = vpack.c.b16 %v557, %v552
    %v838 = vpack.c.b16 %v558, %v553
    %v839 = vpack.c.b16 %v559, %v554
    %v840 = vpack.c.b16 %v560, %v555
    %v841 = vpack.c.b16 %v561, %v556
    %v842 = vpack.c.b16 %v567, %v562
    %v843 = vpack.c.b16 %v568, %v563
    %v844 = vpack.c.b16 %v569, %v564
    %v845 = vpack.c.b16 %v570, %v565
    %v846 = vpack.c.b16 %v571, %v566
    %v847 = vpack.c.b16 %v577, %v572
    %v848 = vpack.c.b16 %v578, %v573
    %v849 = vpack.c.b16 %v579, %v574
    %v850 = vpack.c.b16 %v580, %v575
    %v851 = vpack.c.b16 %v581, %v576
    %v852 = vpack.c.b16 %v587, %v582
    %v853 = vpack.c.b16 %v588, %v583
    %v854 = vpack.c.b16 %v589, %v584
    %v855 = vpack.c.b16 %v590, %v585
    %v856 = vpack.c.b16 %v591, %v586
    %v857 = vpack.c.b16 %v597, %v592
    %v858 = vpack.c.b16 %v598, %v593
    %v859 = vpack.c.b16 %v599, %v594
    %v860 = vpack.c.b16 %v600, %v595
    %v861 = vpack.c.b16 %v601, %v596
    %v862 = vpack.c.b16 %v607, %v602
    %v863 = vpack.c.b16 %v608, %v603
    %v864 = vpack.c.b16 %v609, %v604
    %v865 = vpack.c.b16 %v610, %v605
    %v866 = vpack.c.b16 %v611, %v606
    %v867 = vpack.c.b16 %v617, %v612
    %v868 = vpack.c.b16 %v618, %v613
    %v869 = vpack.c.b16 %v619, %v614
    %v870 = vpack.c.b16 %v620, %v615
    %v871 = vpack.c.b16 %v621, %v616
    %v872 = vpack.c.b16 %v627, %v622
    %v873 = vpack.c.b16 %v628, %v623
    %v874 = vpack.c.b16 %v629, %v624
    %v875 = vpack.c.b16 %v630, %v625
    %v876 = vpack.c.b16 %v631, %v626
    %v877 = vpack.c.b16 %v637, %v632
    %v878 = vpack.c.b16 %v638, %v633
    %v879 = vpack.c.b16 %v639, %v634
    %v880 = vpack.c.b16 %v640, %v635
    %v881 = vpack.c.b16 %v641, %v636
    %v882 = vpack.c.b16 %v647, %v642
    %v883 = vpack.c.b16 %v648, %v643
    %v884 = vpack.c.b16 %v649, %v644
    %v885 = vpack.c.b16 %v650, %v645
    %v886 = vpack.c.b16 %v651, %v646
    %v887 = vpack.c.b16 %v657, %v652
    %v888 = vpack.c.b16 %v658, %v653
    %v889 = vpack.c.b16 %v659, %v654
    %v890 = vpack.c.b16 %v660, %v655
    %v891 = vpack.c.b16 %v661, %v656
    %v892 = vpack.c.b16 %v667, %v662
    %v893 = vpack.c.b16 %v668, %v663
    %v894 = vpack.c.b16 %v669, %v664
    %v895 = vpack.c.b16 %v670, %v665
    %v896 = vpack.c.b16 %v671, %v666
    %v897 = vpack.c.b16 %v677, %v672
    %v898 = vpack.c.b16 %v678, %v673
    %v899 = vpack.c.b16 %v679, %v674
    %v900 = vpack.c.b16 %v680, %v675
    %v901 = vpack.c.b16 %v681, %v676
    %v902 = vpack.c.b16 %v687, %v682
    %v903 = vpack.c.b16 %v688, %v683
    %v904 = vpack.c.b16 %v689, %v684
    %v905 = vpack.c.b16 %v690, %v685
    %v906 = vpack.c.b16 %v691, %v686
    %v907 = vpack.c.b16 %v697, %v692
    %v908 = vpack.c.b16 %v698, %v693
    %v909 = vpack.c.b16 %v699, %v694
    %v910 = vpack.c.b16 %v700, %v695
    %v911 = vpack.c.b16 %v701, %v696
    %v912 = vpack.c.b16 %v707, %v702
    %v913 = vpack.c.b16 %v708, %v703
    %v914 = vpack.c.b16 %v709, %v704
    %v915 = vpack.c.b16 %v710, %v705
    %v916 = vpack.c.b16 %v711, %v706
    %v917 = vpack.c.b16 %v717, %v712
    %v918 = vpack.c.b16 %v718, %v713
    %v919 = vpack.c.b16 %v719, %v714
    %v920 = vpack.c.b16 %v720, %v715
    %v921 = vpack.c.b16 %v721, %v716
    %v922 = vpack.c.b16 %v727, %v722
    %v923 = vpack.c.b16 %v728, %v723
    %v924 = vpack.c.b16 %v729, %v724
    %v925 = vpack.c.b16 %v730, %v725
    %v926 = vpack.c.b16 %v731, %v726
    %v927 = vpack.c.b16 %v737, %v732
    %v928 = vpack.c.b16 %v738, %v733
    %v929 = vpack.c.b16 %v739, %v734
    %v930 = vpack.c.b16 %v740, %v735
    %v931 = vpack.c.b16 %v741, %v736
    %v932 = vpack.c.b16 %v747, %v742
    %v933 = vpack.c.b16 %v748, %v743
    %v934 = vpack.c.b16 %v749, %v744
    %v935 = vpack.c.b16 %v750, %v745
    %v936 = vpack.c.b16 %v751, %v746
    %v937 = vpack.c.b16 %v757, %v752
    %v938 = vpack.c.b16 %v758, %v753
    %v939 = vpack.c.b16 %v759, %v754
    %v940 = vpack.c.b16 %v760, %v755
    %v941 = vpack.c.b16 %v761, %v756
    %v942 = vpack.c.b16 %v767, %v762
    %v943 = vpack.c.b16 %v768, %v763
    %v944 = vpack.c.b16 %v769, %v764
    %v945 = vpack.c.b16 %v770, %v765
    %v946 = vpack.c.b16 %v771, %v766
    %v947 = vpack.c.b16 %v777, %v772
    %v948 = vpack.c.b16 %v778, %v773
    %v949 = vpack.c.b16 %v779, %v774
    %v950 = vpack.c.b16 %v780, %v775
    %v951 = vpack.c.b16 %v781, %v776
    %v952 = vpack.c.b16 %v787, %v782
    %v953 = vpack.c.b16 %v788, %v783
    %v954 = vpack.c.b16 %v789, %v784
    %v955 = vpack.c.b16 %v790, %v785
    %v956 = vpack.c.b16 %v791, %v786
    %v957 = vpack.c.b16 %v797, %v792
    %v958 = vpack.c.b16 %v798, %v793
    %v959 = vpack.c.b16 %v799, %v794
    %v960 = vpack.c.b16 %v800, %v795
    %v961 = vpack.c.b16 %v801, %v796
    %v1162 = vunpack.c.l.b16 %v212
    %v1163 = vunpack.c.h.b16 %v212
    %v1164 = vunpack.c.l.b16 %v213
    %v1165 = vunpack.c.h.b16 %v213
    %v1166 = vunpack.c.l.b16 %v214
    %v1167 = vunpack.c.h.b16 %v214
    %v1168 = vunpack.c.l.b16 %v215
    %v1169 = vunpack.c.h.b16 %v215
    %v1170 = vunpack.c.l.b16 %v216
    %v1171 = vunpack.c.h.b16 %v216
    %v1172 = vunpack.c.l.b16 %v217
    %v1173 = vunpack.c.h.b16 %v217
    %v1174 = vunpack.c.l.b16 %v218
    %v1175 = vunpack.c.h.b16 %v218
    %v1176 = vunpack.c.l.b16 %v219
    %v1177 = vunpack.c.h.b16 %v219
    %v1178 = vunpack.c.l.b16 %v220
    %v1179 = vunpack.c.h.b16 %v220
    %v1180 = vunpack.c.l.b16 %v221
    %v1181 = vunpack.c.h.b16 %v221
    %v1182 = vunpack.c.l.b16 %v222
    %v1183 = vunpack.c.h.b16 %v222
    %v1184 = vunpack.c.l.b16 %v223
    %v1185 = vunpack.c.h.b16 %v223
    %v1186 = vunpack.c.l.b16 %v224
    %v1187 = vunpack.c.h.b16 %v224
    %v1188 = vunpack.c.l.b16 %v225
    %v1189 = vunpack.c.h.b16 %v225
    %v1190 = vunpack.c.l.b16 %v226
    %v1191 = vunpack.c.h.b16 %v226
    %v1192 = vunpack.c.l.b16 %v227
    %v1193 = vunpack.c.h.b16 %v227
    %v1194 = vunpack.c.l.b16 %v228
    %v1195 = vunpack.c.h.b16 %v228
    %v1196 = vunpack.c.l.b16 %v229
    %v1197 = vunpack.c.h.b16 %v229
    %v1198 = vunpack.c.l.b16 %v230
    %v1199 = vunpack.c.h.b16 %v230
    %v1200 = vunpack.c.l.b16 %v231
    %v1201 = vunpack.c.h.b16 %v231
    %v1202 = vunpack.c.l.b16 %v232
    %v1203 = vunpack.c.h.b16 %v232
    %v1204 = vunpack.c.l.b16 %v233
    %v1205 = vunpack.c.h.b16 %v233
    %v1206 = vunpack.c.l.b16 %v234
    %v1207 = vunpack.c.h.b16 %v234
    %v1208 = vunpack.c.l.b16 %v235
    %v1209 = vunpack.c.h.b16 %v235
    %v1210 = vunpack.c.l.b16 %v236
    %v1211 = vunpack.c.h.b16 %v236
    %v1212 = vunpack.c.l.b16 %v237
    %v1213 = vunpack.c.h.b16 %v237
    %v1214 = vunpack.c.l.b16 %v238
    %v1215 = vunpack.c.h.b16 %v238
    %v1216 = vunpack.c.l.b16 %v239
    %v1217 = vunpack.c.h.b16 %v239
    %v1218 = vunpack.c.l.b16 %v240
    %v1219 = vunpack.c.h.b16 %v240
    %v1220 = vunpack.c.l.b16 %v241
    %v1221 = vunpack.c.h.b16 %v241
    %v1222 = vunpack.c.l.b16 %v242
    %v1223 = vunpack.c.h.b16 %v242
    %v1224 = vunpack.c.l.b16 %v243
    %v1225 = vunpack.c.h.b16 %v243
    %v1226 = vunpack.c.l.b16 %v244
    %v1227 = vunpack.c.h.b16 %v244
    %v1228 = vunpack.c.l.b16 %v245
    %v1229 = vunpack.c.h.b16 %v245
    %v1230 = vunpack.c.l.b16 %v246
    %v1231 = vunpack.c.h.b16 %v246
    %v1232 = vunpack.c.l.b16 %v247
    %v1233 = vunpack.c.h.b16 %v247
    %v1234 = vunpack.c.l.b16 %v248
    %v1235 = vunpack.c.h.b16 %v248
    %v1236 = vunpack.c.l.b16 %v249
    %v1237 = vunpack.c.h.b16 %v249
    %v1238 = vunpack.c.l.b16 %v250
    %v1239 = vunpack.c.h.b16 %v250
    %v1240 = vunpack.c.l.b16 %v251
    %v1241 = vunpack.c.h.b16 %v251
    %v1242 = vunpack.c.l.b16 %v252
    %v1243 = vunpack.c.h.b16 %v252
    %v1244 = vunpack.c.l.b16 %v253
    %v1245 = vunpack.c.h.b16 %v253
    %v1246 = vunpack.c.l.b16 %v254
    %v1247 = vunpack.c.h.b16 %v254
    %v1248 = vunpack.c.l.b16 %v255
    %v1249 = vunpack.c.h.b16 %v255
    %v1250 = vunpack.c.l.b16 %v256
    %v1251 = vunpack.c.h.b16 %v256
    %v1252 = vunpack.c.l.b16 %v257
    %v1253 = vunpack.c.h.b16 %v257
    %v1254 = vunpack.c.l.b16 %v258
    %v1255 = vunpack.c.h.b16 %v258
    %v1256 = vunpack.c.l.b16 %v259
    %v1257 = vunpack.c.h.b16 %v259
    %v1258 = vunpack.c.l.b16 %v260
    %v1259 = vunpack.c.h.b16 %v260
    %v1260 = vunpack.c.l.b16 %v261
    %v1261 = vunpack.c.h.b16 %v261
    %v1262 = vunpack.c.l.b16 %v262
    %v1263 = vunpack.c.h.b16 %v262
    %v1264 = vunpack.c.l.b16 %v263
    %v1265 = vunpack.c.h.b16 %v263
    %v1266 = vunpack.c.l.b16 %v264
    %v1267 = vunpack.c.h.b16 %v264
    %v1268 = vunpack.c.l.b16 %v265
    %v1269 = vunpack.c.h.b16 %v265
    %v1270 = vunpack.c.l.b16 %v266
    %v1271 = vunpack.c.h.b16 %v266
    %v1272 = vunpack.c.l.b16 %v267
    %v1273 = vunpack.c.h.b16 %v267
    %v1274 = vunpack.c.l.b16 %v268
    %v1275 = vunpack.c.h.b16 %v268
    %v1276 = vunpack.c.l.b16 %v269
    %v1277 = vunpack.c.h.b16 %v269
    %v1278 = vunpack.c.l.b16 %v270
    %v1279 = vunpack.c.h.b16 %v270
    %v1280 = vunpack.c.l.b16 %v271
    %v1281 = vunpack.c.h.b16 %v271
    %v1282 = vunpack.c.l.b16 %v272
    %v1283 = vunpack.c.h.b16 %v272
    %v1284 = vunpack.c.l.b16 %v273
    %v1285 = vunpack.c.h.b16 %v273
    %v1286 = vunpack.c.l.b16 %v274
    %v1287 = vunpack.c.h.b16 %v274
    %v1288 = vunpack.c.l.b16 %v275
    %v1289 = vunpack.c.h.b16 %v275
    %v1290 = vunpack.c.l.b16 %v276
    %v1291 = vunpack.c.h.b16 %v276
    %v1292 = vunpack.c.l.b16 %v277
    %v1293 = vunpack.c.h.b16 %v277
    %v1294 = vunpack.c.l.b16 %v278
    %v1295 = vunpack.c.h.b16 %v278
    %v1296 = vunpack.c.l.b16 %v279
    %v1297 = vunpack.c.h.b16 %v279
    %v1298 = vunpack.c.l.b16 %v280
    %v1299 = vunpack.c.h.b16 %v280
    %v1300 = vunpack.c.l.b16 %v281
    %v1301 = vunpack.c.h.b16 %v281
    %v1302 = vunpack.c.l.b16 %v282
    %v1303 = vunpack.c.h.b16 %v282
    %v1304 = vunpack.c.l.b16 %v283
    %v1305 = vunpack.c.h.b16 %v283
    %v1306 = vpack.c.b16 %v1164, %v1162
    %v1307 = vpack.c.b16 %v1165, %v1163
    %v1308 = vpack.c.b16 %v1168, %v1166
    %v1309 = vpack.c.b16 %v1169, %v1167
    %v1310 = vpack.c.b16 %v1172, %v1170
    %v1311 = vpack.c.b16 %v1173, %v1171
    %v1312 = vpack.c.b16 %v1176, %v1174
    %v1313 = vpack.c.b16 %v1177, %v1175
    %v1314 = vpack.c.b16 %v1180, %v1178
    %v1315 = vpack.c.b16 %v1181, %v1179
    %v1316 = vpack.c.b16 %v1184, %v1182
    %v1317 = vpack.c.b16 %v1185, %v1183
    %v1318 = vpack.c.b16 %v1188, %v1186
    %v1319 = vpack.c.b16 %v1189, %v1187
    %v1320 = vpack.c.b16 %v1192, %v1190
    %v1321 = vpack.c.b16 %v1193, %v1191
    %v1322 = vpack.c.b16 %v1196, %v1194
    %v1323 = vpack.c.b16 %v1197, %v1195
    %v1324 = vpack.c.b16 %v1200, %v1198
    %v1325 = vpack.c.b16 %v1201, %v1199
    %v1326 = vpack.c.b16 %v1204, %v1202
    %v1327 = vpack.c.b16 %v1205, %v1203
    %v1328 = vpack.c.b16 %v1208, %v1206
    %v1329 = vpack.c.b16 %v1209, %v1207
    %v1330 = vpack.c.b16 %v1212, %v1210
    %v1331 = vpack.c.b16 %v1213, %v1211
    %v1332 = vpack.c.b16 %v1216, %v1214
    %v1333 = vpack.c.b16 %v1217, %v1215
    %v1334 = vpack.c.b16 %v1220, %v1218
    %v1335 = vpack.c.b16 %v1221, %v1219
    %v1336 = vpack.c.b16 %v1224, %v1222
    %v1337 = vpack.c.b16 %v1225, %v1223
    %v1338 = vpack.c.b16 %v1228, %v1226
    %v1339 = vpack.c.b16 %v1229, %v1227
    %v1340 = vpack.c.b16 %v1232, %v1230
    %v1341 = vpack.c.b16 %v1233, %v1231
    %v1342 = vpack.c.b16 %v1236, %v1234
    %v1343 = vpack.c.b16 %v1237, %v1235
    %v1344 = vpack.c.b16 %v1240, %v1238
    %v1345 = vpack.c.b16 %v1241, %v1239
    %v1346 = vpack.c.b16 %v1244, %v1242
    %v1347 = vpack.c.b16 %v1245, %v1243
    %v1348 = vpack.c.b16 %v1248, %v1246
    %v1349 = vpack.c.b16 %v1249, %v1247
    %v1350 = vpack.c.b16 %v1252, %v1250
    %v1351 = vpack.c.b16 %v1253, %v1251
    %v1352 = vpack.c.b16 %v1256, %v1254
    %v1353 = vpack.c.b16 %v1257, %v1255
    %v1354 = vpack.c.b16 %v1260, %v1258
    %v1355 = vpack.c.b16 %v1261, %v1259
    %v1356 = vpack.c.b16 %v1264, %v1262
    %v1357 = vpack.c.b16 %v1265, %v1263
    %v1358 = vpack.c.b16 %v1268, %v1266
    %v1359 = vpack.c.b16 %v1269, %v1267
    %v1360 = vpack.c.b16 %v1272, %v1270
    %v1361 = vpack.c.b16 %v1273, %v1271
    %v1362 = vpack.c.b16 %v1276, %v1274
    %v1363 = vpack.c.b16 %v1277, %v1275
    %v1364 = vpack.c.b16 %v1280, %v1278
    %v1365 = vpack.c.b16 %v1281, %v1279
    %v1366 = vpack.c.b16 %v1284, %v1282
    %v1367 = vpack.c.b16 %v1285, %v1283
    %v1368 = vpack.c.b16 %v1288, %v1286
    %v1369 = vpack.c.b16 %v1289, %v1287
    %v1370 = vpack.c.b16 %v1292, %v1290
    %v1371 = vpack.c.b16 %v1293, %v1291
    %v1372 = vpack.c.b16 %v1296, %v1294
    %v1373 = vpack.c.b16 %v1297, %v1295
    %v1374 = vpack.c.b16 %v1300, %v1298
    %v1375 = vpack.c.b16 %v1301, %v1299
    %v1376 = vpack.c.b16 %v1304, %v1302
    %v1377 = vpack.c.b16 %v1305, %v1303
    %vm1450 = vcmask 523264
    %v1452 = vsel %vm1450, %v806, 0
    %v1455 = vsel %vm1450, %v811, 0
    %v1458 = vsel %vm1450, %v816, 0
    %v1461 = vsel %vm1450, %v821, 0
    %v1464 = vsel %vm1450, %v826, 0
    %v1467 = vsel %vm1450, %v831, 0
    %v1470 = vsel %vm1450, %v836, 0
    %v1473 = vsel %vm1450, %v841, 0
    %v1476 = vsel %vm1450, %v846, 0
    %v1479 = vsel %vm1450, %v851, 0
    %v1482 = vsel %vm1450, %v856, 0
    %v1485 = vsel %vm1450, %v861, 0
    %v1488 = vsel %vm1450, %v866, 0
    %v1491 = vsel %vm1450, %v871, 0
    %v1494 = vsel %vm1450, %v876, 0
    %v1497 = vsel %vm1450, %v881, 0
    %v1500 = vsel %vm1450, %v886, 0
    %v1503 = vsel %vm1450, %v891, 0
    %v1506 = vsel %vm1450, %v896, 0
    %v1509 = vsel %vm1450, %v901, 0
    %v1512 = vsel %vm1450, %v906, 0
    %v1515 = vsel %vm1450, %v911, 0
    %v1518 = vsel %vm1450, %v916, 0
    %v1521 = vsel %vm1450, %v921, 0
    %v1524 = vsel %vm1450, %v926, 0
    %v1527 = vsel %vm1450, %v931, 0
    %v1530 = vsel %vm1450, %v936, 0
    %v1533 = vsel %vm1450, %v941, 0
    %v1536 = vsel %vm1450, %v946, 0
    %v1539 = vsel %vm1450, %v951, 0
    %v1542 = vsel %vm1450, %v956, 0
    %v1545 = vsel %vm1450, %v961, 0
    %1547 = vmatpush.bf16.msra.mxu0 %v1320
    %1548 = vmatpush.bf16.msra.mxu0 %v1318
    %1549 = vmatpush.bf16.msra.mxu0 %v1316
    %1550 = vmatpush.bf16.msra.mxu0 %v1314
    %1551 = vmatpush.bf16.msra.mxu0 %v1312
    %1552 = vmatpush.bf16.msra.mxu0 %v1310
    %1553 = vmatpush.bf16.msra.mxu0 %v1308
    %1554 = vmatpush.bf16.msra.mxu0 %v1306
    %1555 = vmatmul.bf16.gmra.mxu0 %v802
    %v1556 = vpop.f32.mrf.mxu0
    %v1557 = vadd.f32 %v286, %v1556
    %v1558 = vpop.f32.mrf.mxu0
    %v1559 = vadd.f32 %v286, %v1558
    %1560 = vmatmul.bf16.gmra.mxu0 %v807
    %v1561 = vpop.f32.mrf.mxu0
    %v1562 = vadd.f32 %v286, %v1561
    %v1563 = vpop.f32.mrf.mxu0
    %v1564 = vadd.f32 %v286, %v1563
    %1565 = vmatmul.bf16.gmra.mxu0 %v812
    %v1566 = vpop.f32.mrf.mxu0
    %v1567 = vadd.f32 %v286, %v1566
    %v1568 = vpop.f32.mrf.mxu0
    %v1569 = vadd.f32 %v286, %v1568
    %1570 = vmatmul.bf16.gmra.mxu0 %v817
    %v1571 = vpop.f32.mrf.mxu0
    %v1572 = vadd.f32 %v286, %v1571
    %v1573 = vpop.f32.mrf.mxu0
    %v1574 = vadd.f32 %v286, %v1573
    %1575 = vmatmul.bf16.gmra.mxu0 %v822
    %v1576 = vpop.f32.mrf.mxu0
    %v1577 = vadd.f32 %v286, %v1576
    %v1578 = vpop.f32.mrf.mxu0
    %v1579 = vadd.f32 %v286, %v1578
    %1580 = vmatmul.bf16.gmra.mxu0 %v827
    %v1581 = vpop.f32.mrf.mxu0
    %v1582 = vadd.f32 %v286, %v1581
    %v1583 = vpop.f32.mrf.mxu0
    %v1584 = vadd.f32 %v286, %v1583
    %1585 = vmatmul.bf16.gmra.mxu0 %v832
    %v1586 = vpop.f32.mrf.mxu0
    %v1587 = vadd.f32 %v286, %v1586
    %v1588 = vpop.f32.mrf.mxu0
    %v1589 = vadd.f32 %v286, %v1588
    %1590 = vmatmul.bf16.gmra.mxu0 %v837
    %v1591 = vpop.f32.mrf.mxu0
    %v1592 = vadd.f32 %v286, %v1591
    %v1593 = vpop.f32.mrf.mxu0
    %v1594 = vadd.f32 %v286, %v1593
    %1595 = vmatmul.bf16.gmra.mxu0 %v842
    %v1596 = vpop.f32.mrf.mxu0
    %v1597 = vadd.f32 %v286, %v1596
    %v1598 = vpop.f32.mrf.mxu0
    %v1599 = vadd.f32 %v286, %v1598
    %1600 = vmatmul.bf16.gmra.mxu0 %v847
    %v1601 = vpop.f32.mrf.mxu0
    %v1602 = vadd.f32 %v286, %v1601
    %v1603 = vpop.f32.mrf.mxu0
    %v1604 = vadd.f32 %v286, %v1603
    %1605 = vmatmul.bf16.gmra.mxu0 %v852
    %v1606 = vpop.f32.mrf.mxu0
    %v1607 = vadd.f32 %v286, %v1606
    %v1608 = vpop.f32.mrf.mxu0
    %v1609 = vadd.f32 %v286, %v1608
    %1610 = vmatmul.bf16.gmra.mxu0 %v857
    %v1611 = vpop.f32.mrf.mxu0
    %v1612 = vadd.f32 %v286, %v1611
    %v1613 = vpop.f32.mrf.mxu0
    %v1614 = vadd.f32 %v286, %v1613
    %1615 = vmatmul.bf16.gmra.mxu0 %v862
    %v1616 = vpop.f32.mrf.mxu0
    %v1617 = vadd.f32 %v286, %v1616
    %v1618 = vpop.f32.mrf.mxu0
    %v1619 = vadd.f32 %v286, %v1618
    %1620 = vmatmul.bf16.gmra.mxu0 %v867
    %v1621 = vpop.f32.mrf.mxu0
    %v1622 = vadd.f32 %v286, %v1621
    %v1623 = vpop.f32.mrf.mxu0
    %v1624 = vadd.f32 %v286, %v1623
    %1625 = vmatmul.bf16.gmra.mxu0 %v872
    %v1626 = vpop.f32.mrf.mxu0
    %v1627 = vadd.f32 %v286, %v1626
    %v1628 = vpop.f32.mrf.mxu0
    %v1629 = vadd.f32 %v286, %v1628
    %1630 = vmatmul.bf16.gmra.mxu0 %v877
    %v1631 = vpop.f32.mrf.mxu0
    %v1632 = vadd.f32 %v286, %v1631
    %v1633 = vpop.f32.mrf.mxu0
    %v1634 = vadd.f32 %v286, %v1633
    %1635 = vmatmul.bf16.gmra.mxu0 %v882
    %v1636 = vpop.f32.mrf.mxu0
    %v1637 = vadd.f32 %v286, %v1636
    %v1638 = vpop.f32.mrf.mxu0
    %v1639 = vadd.f32 %v286, %v1638
    %1640 = vmatmul.bf16.gmra.mxu0 %v887
    %v1641 = vpop.f32.mrf.mxu0
    %v1642 = vadd.f32 %v286, %v1641
    %v1643 = vpop.f32.mrf.mxu0
    %v1644 = vadd.f32 %v286, %v1643
    %1645 = vmatmul.bf16.gmra.mxu0 %v892
    %v1646 = vpop.f32.mrf.mxu0
    %v1647 = vadd.f32 %v286, %v1646
    %v1648 = vpop.f32.mrf.mxu0
    %v1649 = vadd.f32 %v286, %v1648
    %1650 = vmatmul.bf16.gmra.mxu0 %v897
    %v1651 = vpop.f32.mrf.mxu0
    %v1652 = vadd.f32 %v286, %v1651
    %v1653 = vpop.f32.mrf.mxu0
    %v1654 = vadd.f32 %v286, %v1653
    %1655 = vmatmul.bf16.gmra.mxu0 %v902
    %v1656 = vpop.f32.mrf.mxu0
    %v1657 = vadd.f32 %v286, %v1656
    %v1658 = vpop.f32.mrf.mxu0
    %v1659 = vadd.f32 %v286, %v1658
    %1660 = vmatmul.bf16.gmra.mxu0 %v907
    %v1661 = vpop.f32.mrf.mxu0
    %v1662 = vadd.f32 %v286, %v1661
    %v1663 = vpop.f32.mrf.mxu0
    %v1664 = vadd.f32 %v286, %v1663
    %1665 = vmatmul.bf16.gmra.mxu0 %v912
    %v1666 = vpop.f32.mrf.mxu0
    %v1667 = vadd.f32 %v286, %v1666
    %v1668 = vpop.f32.mrf.mxu0
    %v1669 = vadd.f32 %v286, %v1668
    %1670 = vmatmul.bf16.gmra.mxu0 %v917
    %v1671 = vpop.f32.mrf.mxu0
    %v1672 = vadd.f32 %v286, %v1671
    %v1673 = vpop.f32.mrf.mxu0
    %v1674 = vadd.f32 %v286, %v1673
    %1675 = vmatmul.bf16.gmra.mxu0 %v922
    %v1676 = vpop.f32.mrf.mxu0
    %v1677 = vadd.f32 %v286, %v1676
    %v1678 = vpop.f32.mrf.mxu0
    %v1679 = vadd.f32 %v286, %v1678
    %1680 = vmatmul.bf16.gmra.mxu0 %v927
    %v1681 = vpop.f32.mrf.mxu0
    %v1682 = vadd.f32 %v286, %v1681
    %v1683 = vpop.f32.mrf.mxu0
    %v1684 = vadd.f32 %v286, %v1683
    %1685 = vmatmul.bf16.gmra.mxu0 %v932
    %v1686 = vpop.f32.mrf.mxu0
    %v1687 = vadd.f32 %v286, %v1686
    %v1688 = vpop.f32.mrf.mxu0
    %v1689 = vadd.f32 %v286, %v1688
    %1690 = vmatmul.bf16.gmra.mxu0 %v937
    %v1691 = vpop.f32.mrf.mxu0
    %v1692 = vadd.f32 %v286, %v1691
    %v1693 = vpop.f32.mrf.mxu0
    %v1694 = vadd.f32 %v286, %v1693
    %1695 = vmatmul.bf16.gmra.mxu0 %v942
    %v1696 = vpop.f32.mrf.mxu0
    %v1697 = vadd.f32 %v286, %v1696
    %v1698 = vpop.f32.mrf.mxu0
    %v1699 = vadd.f32 %v286, %v1698
    %1700 = vmatmul.bf16.gmra.mxu0 %v947
    %v1701 = vpop.f32.mrf.mxu0
    %v1702 = vadd.f32 %v286, %v1701
    %v1703 = vpop.f32.mrf.mxu0
    %v1704 = vadd.f32 %v286, %v1703
    %1705 = vmatmul.bf16.gmra.mxu0 %v952
    %v1706 = vpop.f32.mrf.mxu0
    %v1707 = vadd.f32 %v286, %v1706
    %v1708 = vpop.f32.mrf.mxu0
    %v1709 = vadd.f32 %v286, %v1708
    %1710 = vmatmul.bf16.gmra.mxu0 %v957
    %v1711 = vpop.f32.mrf.mxu0
    %v1712 = vadd.f32 %v286, %v1711
    %v1713 = vpop.f32.mrf.mxu0
    %v1714 = vadd.f32 %v286, %v1713
    %1715 = vdwg.mxu0
    %1716 = vmatpush.bf16.msra.mxu0 %v1336
    %1717 = vmatpush.bf16.msra.mxu0 %v1334
    %1718 = vmatpush.bf16.msra.mxu0 %v1332
    %1719 = vmatpush.bf16.msra.mxu0 %v1330
    %1720 = vmatpush.bf16.msra.mxu0 %v1328
    %1721 = vmatpush.bf16.msra.mxu0 %v1326
    %1722 = vmatpush.bf16.msra.mxu0 %v1324
    %1723 = vmatpush.bf16.msra.mxu0 %v1322
    %1724 = vmatmul.bf16.gmra.mxu0 %v803
    %v1725 = vpop.f32.mrf.mxu0
    %v1726 = vadd.f32 %v1557, %v1725
    %v1727 = vpop.f32.mrf.mxu0
    %v1728 = vadd.f32 %v1559, %v1727
    %1729 = vmatmul.bf16.gmra.mxu0 %v808
    %v1730 = vpop.f32.mrf.mxu0
    %v1731 = vadd.f32 %v1562, %v1730
    %v1732 = vpop.f32.mrf.mxu0
    %v1733 = vadd.f32 %v1564, %v1732
    %1734 = vmatmul.bf16.gmra.mxu0 %v813
    %v1735 = vpop.f32.mrf.mxu0
    %v1736 = vadd.f32 %v1567, %v1735
    %v1737 = vpop.f32.mrf.mxu0
    %v1738 = vadd.f32 %v1569, %v1737
    %1739 = vmatmul.bf16.gmra.mxu0 %v818
    %v1740 = vpop.f32.mrf.mxu0
    %v1741 = vadd.f32 %v1572, %v1740
    %v1742 = vpop.f32.mrf.mxu0
    %v1743 = vadd.f32 %v1574, %v1742
    %1744 = vmatmul.bf16.gmra.mxu0 %v823
    %v1745 = vpop.f32.mrf.mxu0
    %v1746 = vadd.f32 %v1577, %v1745
    %v1747 = vpop.f32.mrf.mxu0
    %v1748 = vadd.f32 %v1579, %v1747
    %1749 = vmatmul.bf16.gmra.mxu0 %v828
    %v1750 = vpop.f32.mrf.mxu0
    %v1751 = vadd.f32 %v1582, %v1750
    %v1752 = vpop.f32.mrf.mxu0
    %v1753 = vadd.f32 %v1584, %v1752
    %1754 = vmatmul.bf16.gmra.mxu0 %v833
    %v1755 = vpop.f32.mrf.mxu0
    %v1756 = vadd.f32 %v1587, %v1755
    %v1757 = vpop.f32.mrf.mxu0
    %v1758 = vadd.f32 %v1589, %v1757
    %1759 = vmatmul.bf16.gmra.mxu0 %v838
    %v1760 = vpop.f32.mrf.mxu0
    %v1761 = vadd.f32 %v1592, %v1760
    %v1762 = vpop.f32.mrf.mxu0
    %v1763 = vadd.f32 %v1594, %v1762
    %1764 = vmatmul.bf16.gmra.mxu0 %v843
    %v1765 = vpop.f32.mrf.mxu0
    %v1766 = vadd.f32 %v1597, %v1765
    %v1767 = vpop.f32.mrf.mxu0
    %v1768 = vadd.f32 %v1599, %v1767
    %1769 = vmatmul.bf16.gmra.mxu0 %v848
    %v1770 = vpop.f32.mrf.mxu0
    %v1771 = vadd.f32 %v1602, %v1770
    %v1772 = vpop.f32.mrf.mxu0
    %v1773 = vadd.f32 %v1604, %v1772
    %1774 = vmatmul.bf16.gmra.mxu0 %v853
    %v1775 = vpop.f32.mrf.mxu0
    %v1776 = vadd.f32 %v1607, %v1775
    %v1777 = vpop.f32.mrf.mxu0
    %v1778 = vadd.f32 %v1609, %v1777
    %1779 = vmatmul.bf16.gmra.mxu0 %v858
    %v1780 = vpop.f32.mrf.mxu0
    %v1781 = vadd.f32 %v1612, %v1780
    %v1782 = vpop.f32.mrf.mxu0
    %v1783 = vadd.f32 %v1614, %v1782
    %1784 = vmatmul.bf16.gmra.mxu0 %v863
    %v1785 = vpop.f32.mrf.mxu0
    %v1786 = vadd.f32 %v1617, %v1785
    %v1787 = vpop.f32.mrf.mxu0
    %v1788 = vadd.f32 %v1619, %v1787
    %1789 = vmatmul.bf16.gmra.mxu0 %v868
    %v1790 = vpop.f32.mrf.mxu0
    %v1791 = vadd.f32 %v1622, %v1790
    %v1792 = vpop.f32.mrf.mxu0
    %v1793 = vadd.f32 %v1624, %v1792
    %1794 = vmatmul.bf16.gmra.mxu0 %v873
    %v1795 = vpop.f32.mrf.mxu0
    %v1796 = vadd.f32 %v1627, %v1795
    %v1797 = vpop.f32.mrf.mxu0
    %v1798 = vadd.f32 %v1629, %v1797
    %1799 = vmatmul.bf16.gmra.mxu0 %v878
    %v1800 = vpop.f32.mrf.mxu0
    %v1801 = vadd.f32 %v1632, %v1800
    %v1802 = vpop.f32.mrf.mxu0
    %v1803 = vadd.f32 %v1634, %v1802
    %1804 = vmatmul.bf16.gmra.mxu0 %v883
    %v1805 = vpop.f32.mrf.mxu0
    %v1806 = vadd.f32 %v1637, %v1805
    %v1807 = vpop.f32.mrf.mxu0
    %v1808 = vadd.f32 %v1639, %v1807
    %1809 = vmatmul.bf16.gmra.mxu0 %v888
    %v1810 = vpop.f32.mrf.mxu0
    %v1811 = vadd.f32 %v1642, %v1810
    %v1812 = vpop.f32.mrf.mxu0
    %v1813 = vadd.f32 %v1644, %v1812
    %1814 = vmatmul.bf16.gmra.mxu0 %v893
    %v1815 = vpop.f32.mrf.mxu0
    %v1816 = vadd.f32 %v1647, %v1815
    %v1817 = vpop.f32.mrf.mxu0
    %v1818 = vadd.f32 %v1649, %v1817
    %1819 = vmatmul.bf16.gmra.mxu0 %v898
    %v1820 = vpop.f32.mrf.mxu0
    %v1821 = vadd.f32 %v1652, %v1820
    %v1822 = vpop.f32.mrf.mxu0
    %v1823 = vadd.f32 %v1654, %v1822
    %1824 = vmatmul.bf16.gmra.mxu0 %v903
    %v1825 = vpop.f32.mrf.mxu0
    %v1826 = vadd.f32 %v1657, %v1825
    %v1827 = vpop.f32.mrf.mxu0
    %v1828 = vadd.f32 %v1659, %v1827
    %1829 = vmatmul.bf16.gmra.mxu0 %v908
    %v1830 = vpop.f32.mrf.mxu0
    %v1831 = vadd.f32 %v1662, %v1830
    %v1832 = vpop.f32.mrf.mxu0
    %v1833 = vadd.f32 %v1664, %v1832
    %1834 = vmatmul.bf16.gmra.mxu0 %v913
    %v1835 = vpop.f32.mrf.mxu0
    %v1836 = vadd.f32 %v1667, %v1835
    %v1837 = vpop.f32.mrf.mxu0
    %v1838 = vadd.f32 %v1669, %v1837
    %1839 = vmatmul.bf16.gmra.mxu0 %v918
    %v1840 = vpop.f32.mrf.mxu0
    %v1841 = vadd.f32 %v1672, %v1840
    %v1842 = vpop.f32.mrf.mxu0
    %v1843 = vadd.f32 %v1674, %v1842
    %1844 = vmatmul.bf16.gmra.mxu0 %v923
    %v1845 = vpop.f32.mrf.mxu0
    %v1846 = vadd.f32 %v1677, %v1845
    %v1847 = vpop.f32.mrf.mxu0
    %v1848 = vadd.f32 %v1679, %v1847
    %1849 = vmatmul.bf16.gmra.mxu0 %v928
    %v1850 = vpop.f32.mrf.mxu0
    %v1851 = vadd.f32 %v1682, %v1850
    %v1852 = vpop.f32.mrf.mxu0
    %v1853 = vadd.f32 %v1684, %v1852
    %1854 = vmatmul.bf16.gmra.mxu0 %v933
    %v1855 = vpop.f32.mrf.mxu0
    %v1856 = vadd.f32 %v1687, %v1855
    %v1857 = vpop.f32.mrf.mxu0
    %v1858 = vadd.f32 %v1689, %v1857
    %1859 = vmatmul.bf16.gmra.mxu0 %v938
    %v1860 = vpop.f32.mrf.mxu0
    %v1861 = vadd.f32 %v1692, %v1860
    %v1862 = vpop.f32.mrf.mxu0
    %v1863 = vadd.f32 %v1694, %v1862
    %1864 = vmatmul.bf16.gmra.mxu0 %v943
    %v1865 = vpop.f32.mrf.mxu0
    %v1866 = vadd.f32 %v1697, %v1865
    %v1867 = vpop.f32.mrf.mxu0
    %v1868 = vadd.f32 %v1699, %v1867
    %1869 = vmatmul.bf16.gmra.mxu0 %v948
    %v1870 = vpop.f32.mrf.mxu0
    %v1871 = vadd.f32 %v1702, %v1870
    %v1872 = vpop.f32.mrf.mxu0
    %v1873 = vadd.f32 %v1704, %v1872
    %1874 = vmatmul.bf16.gmra.mxu0 %v953
    %v1875 = vpop.f32.mrf.mxu0
    %v1876 = vadd.f32 %v1707, %v1875
    %v1877 = vpop.f32.mrf.mxu0
    %v1878 = vadd.f32 %v1709, %v1877
    %1879 = vmatmul.bf16.gmra.mxu0 %v958
    %v1880 = vpop.f32.mrf.mxu0
    %v1881 = vadd.f32 %v1712, %v1880
    %v1882 = vpop.f32.mrf.mxu0
    %v1883 = vadd.f32 %v1714, %v1882
    %1884 = vdwg.mxu0
    %1885 = vmatpush.bf16.msra.mxu0 %v1352
    %1886 = vmatpush.bf16.msra.mxu0 %v1350
    %1887 = vmatpush.bf16.msra.mxu0 %v1348
    %1888 = vmatpush.bf16.msra.mxu0 %v1346
    %1889 = vmatpush.bf16.msra.mxu0 %v1344
    %1890 = vmatpush.bf16.msra.mxu0 %v1342
    %1891 = vmatpush.bf16.msra.mxu0 %v1340
    %1892 = vmatpush.bf16.msra.mxu0 %v1338
    %1893 = vmatmul.bf16.gmra.mxu0 %v804
    %v1894 = vpop.f32.mrf.mxu0
    %v1895 = vadd.f32 %v1726, %v1894
    %v1896 = vpop.f32.mrf.mxu0
    %v1897 = vadd.f32 %v1728, %v1896
    %1898 = vmatmul.bf16.gmra.mxu0 %v809
    %v1899 = vpop.f32.mrf.mxu0
    %v1900 = vadd.f32 %v1731, %v1899
    %v1901 = vpop.f32.mrf.mxu0
    %v1902 = vadd.f32 %v1733, %v1901
    %1903 = vmatmul.bf16.gmra.mxu0 %v814
    %v1904 = vpop.f32.mrf.mxu0
    %v1905 = vadd.f32 %v1736, %v1904
    %v1906 = vpop.f32.mrf.mxu0
    %v1907 = vadd.f32 %v1738, %v1906
    %1908 = vmatmul.bf16.gmra.mxu0 %v819
    %v1909 = vpop.f32.mrf.mxu0
    %v1910 = vadd.f32 %v1741, %v1909
    %v1911 = vpop.f32.mrf.mxu0
    %v1912 = vadd.f32 %v1743, %v1911
    %1913 = vmatmul.bf16.gmra.mxu0 %v824
    %v1914 = vpop.f32.mrf.mxu0
    %v1915 = vadd.f32 %v1746, %v1914
    %v1916 = vpop.f32.mrf.mxu0
    %v1917 = vadd.f32 %v1748, %v1916
    %1918 = vmatmul.bf16.gmra.mxu0 %v829
    %v1919 = vpop.f32.mrf.mxu0
    %v1920 = vadd.f32 %v1751, %v1919
    %v1921 = vpop.f32.mrf.mxu0
    %v1922 = vadd.f32 %v1753, %v1921
    %1923 = vmatmul.bf16.gmra.mxu0 %v834
    %v1924 = vpop.f32.mrf.mxu0
    %v1925 = vadd.f32 %v1756, %v1924
    %v1926 = vpop.f32.mrf.mxu0
    %v1927 = vadd.f32 %v1758, %v1926
    %1928 = vmatmul.bf16.gmra.mxu0 %v839
    %v1929 = vpop.f32.mrf.mxu0
    %v1930 = vadd.f32 %v1761, %v1929
    %v1931 = vpop.f32.mrf.mxu0
    %v1932 = vadd.f32 %v1763, %v1931
    %1933 = vmatmul.bf16.gmra.mxu0 %v844
    %v1934 = vpop.f32.mrf.mxu0
    %v1935 = vadd.f32 %v1766, %v1934
    %v1936 = vpop.f32.mrf.mxu0
    %v1937 = vadd.f32 %v1768, %v1936
    %1938 = vmatmul.bf16.gmra.mxu0 %v849
    %v1939 = vpop.f32.mrf.mxu0
    %v1940 = vadd.f32 %v1771, %v1939
    %v1941 = vpop.f32.mrf.mxu0
    %v1942 = vadd.f32 %v1773, %v1941
    %1943 = vmatmul.bf16.gmra.mxu0 %v854
    %v1944 = vpop.f32.mrf.mxu0
    %v1945 = vadd.f32 %v1776, %v1944
    %v1946 = vpop.f32.mrf.mxu0
    %v1947 = vadd.f32 %v1778, %v1946
    %1948 = vmatmul.bf16.gmra.mxu0 %v859
    %v1949 = vpop.f32.mrf.mxu0
    %v1950 = vadd.f32 %v1781, %v1949
    %v1951 = vpop.f32.mrf.mxu0
    %v1952 = vadd.f32 %v1783, %v1951
    %1953 = vmatmul.bf16.gmra.mxu0 %v864
    %v1954 = vpop.f32.mrf.mxu0
    %v1955 = vadd.f32 %v1786, %v1954
    %v1956 = vpop.f32.mrf.mxu0
    %v1957 = vadd.f32 %v1788, %v1956
    %1958 = vmatmul.bf16.gmra.mxu0 %v869
    %v1959 = vpop.f32.mrf.mxu0
    %v1960 = vadd.f32 %v1791, %v1959
    %v1961 = vpop.f32.mrf.mxu0
    %v1962 = vadd.f32 %v1793, %v1961
    %1963 = vmatmul.bf16.gmra.mxu0 %v874
    %v1964 = vpop.f32.mrf.mxu0
    %v1965 = vadd.f32 %v1796, %v1964
    %v1966 = vpop.f32.mrf.mxu0
    %v1967 = vadd.f32 %v1798, %v1966
    %1968 = vmatmul.bf16.gmra.mxu0 %v879
    %v1969 = vpop.f32.mrf.mxu0
    %v1970 = vadd.f32 %v1801, %v1969
    %v1971 = vpop.f32.mrf.mxu0
    %v1972 = vadd.f32 %v1803, %v1971
    %1973 = vmatmul.bf16.gmra.mxu0 %v884
    %v1974 = vpop.f32.mrf.mxu0
    %v1975 = vadd.f32 %v1806, %v1974
    %v1976 = vpop.f32.mrf.mxu0
    %v1977 = vadd.f32 %v1808, %v1976
    %1978 = vmatmul.bf16.gmra.mxu0 %v889
    %v1979 = vpop.f32.mrf.mxu0
    %v1980 = vadd.f32 %v1811, %v1979
    %v1981 = vpop.f32.mrf.mxu0
    %v1982 = vadd.f32 %v1813, %v1981
    %1983 = vmatmul.bf16.gmra.mxu0 %v894
    %v1984 = vpop.f32.mrf.mxu0
    %v1985 = vadd.f32 %v1816, %v1984
    %v1986 = vpop.f32.mrf.mxu0
    %v1987 = vadd.f32 %v1818, %v1986
    %1988 = vmatmul.bf16.gmra.mxu0 %v899
    %v1989 = vpop.f32.mrf.mxu0
    %v1990 = vadd.f32 %v1821, %v1989
    %v1991 = vpop.f32.mrf.mxu0
    %v1992 = vadd.f32 %v1823, %v1991
    %1993 = vmatmul.bf16.gmra.mxu0 %v904
    %v1994 = vpop.f32.mrf.mxu0
    %v1995 = vadd.f32 %v1826, %v1994
    %v1996 = vpop.f32.mrf.mxu0
    %v1997 = vadd.f32 %v1828, %v1996
    %1998 = vmatmul.bf16.gmra.mxu0 %v909
    %v1999 = vpop.f32.mrf.mxu0
    %v2000 = vadd.f32 %v1831, %v1999
    %v2001 = vpop.f32.mrf.mxu0
    %v2002 = vadd.f32 %v1833, %v2001
    %2003 = vmatmul.bf16.gmra.mxu0 %v914
    %v2004 = vpop.f32.mrf.mxu0
    %v2005 = vadd.f32 %v1836, %v2004
    %v2006 = vpop.f32.mrf.mxu0
    %v2007 = vadd.f32 %v1838, %v2006
    %2008 = vmatmul.bf16.gmra.mxu0 %v919
    %v2009 = vpop.f32.mrf.mxu0
    %v2010 = vadd.f32 %v1841, %v2009
    %v2011 = vpop.f32.mrf.mxu0
    %v2012 = vadd.f32 %v1843, %v2011
    %2013 = vmatmul.bf16.gmra.mxu0 %v924
    %v2014 = vpop.f32.mrf.mxu0
    %v2015 = vadd.f32 %v1846, %v2014
    %v2016 = vpop.f32.mrf.mxu0
    %v2017 = vadd.f32 %v1848, %v2016
    %2018 = vmatmul.bf16.gmra.mxu0 %v929
    %v2019 = vpop.f32.mrf.mxu0
    %v2020 = vadd.f32 %v1851, %v2019
    %v2021 = vpop.f32.mrf.mxu0
    %v2022 = vadd.f32 %v1853, %v2021
    %2023 = vmatmul.bf16.gmra.mxu0 %v934
    %v2024 = vpop.f32.mrf.mxu0
    %v2025 = vadd.f32 %v1856, %v2024
    %v2026 = vpop.f32.mrf.mxu0
    %v2027 = vadd.f32 %v1858, %v2026
    %2028 = vmatmul.bf16.gmra.mxu0 %v939
    %v2029 = vpop.f32.mrf.mxu0
    %v2030 = vadd.f32 %v1861, %v2029
    %v2031 = vpop.f32.mrf.mxu0
    %v2032 = vadd.f32 %v1863, %v2031
    %2033 = vmatmul.bf16.gmra.mxu0 %v944
    %v2034 = vpop.f32.mrf.mxu0
    %v2035 = vadd.f32 %v1866, %v2034
    %v2036 = vpop.f32.mrf.mxu0
    %v2037 = vadd.f32 %v1868, %v2036
    %2038 = vmatmul.bf16.gmra.mxu0 %v949
    %v2039 = vpop.f32.mrf.mxu0
    %v2040 = vadd.f32 %v1871, %v2039
    %v2041 = vpop.f32.mrf.mxu0
    %v2042 = vadd.f32 %v1873, %v2041
    %2043 = vmatmul.bf16.gmra.mxu0 %v954
    %v2044 = vpop.f32.mrf.mxu0
    %v2045 = vadd.f32 %v1876, %v2044
    %v2046 = vpop.f32.mrf.mxu0
    %v2047 = vadd.f32 %v1878, %v2046
    %2048 = vmatmul.bf16.gmra.mxu0 %v959
    %v2049 = vpop.f32.mrf.mxu0
    %v2050 = vadd.f32 %v1881, %v2049
    %v2051 = vpop.f32.mrf.mxu0
    %v2052 = vadd.f32 %v1883, %v2051
    %2053 = vdwg.mxu0
    %2054 = vmatpush.bf16.msra.mxu0 %v1368
    %2055 = vmatpush.bf16.msra.mxu0 %v1366
    %2056 = vmatpush.bf16.msra.mxu0 %v1364
    %2057 = vmatpush.bf16.msra.mxu0 %v1362
    %2058 = vmatpush.bf16.msra.mxu0 %v1360
    %2059 = vmatpush.bf16.msra.mxu0 %v1358
    %2060 = vmatpush.bf16.msra.mxu0 %v1356
    %2061 = vmatpush.bf16.msra.mxu0 %v1354
    %2062 = vmatmul.bf16.gmra.mxu0 %v805
    %v2063 = vpop.f32.mrf.mxu0
    %v2064 = vadd.f32 %v1895, %v2063
    %v2065 = vpop.f32.mrf.mxu0
    %v2066 = vadd.f32 %v1897, %v2065
    %2067 = vmatmul.bf16.gmra.mxu0 %v810
    %v2068 = vpop.f32.mrf.mxu0
    %v2069 = vadd.f32 %v1900, %v2068
    %v2070 = vpop.f32.mrf.mxu0
    %v2071 = vadd.f32 %v1902, %v2070
    %2072 = vmatmul.bf16.gmra.mxu0 %v815
    %v2073 = vpop.f32.mrf.mxu0
    %v2074 = vadd.f32 %v1905, %v2073
    %v2075 = vpop.f32.mrf.mxu0
    %v2076 = vadd.f32 %v1907, %v2075
    %2077 = vmatmul.bf16.gmra.mxu0 %v820
    %v2078 = vpop.f32.mrf.mxu0
    %v2079 = vadd.f32 %v1910, %v2078
    %v2080 = vpop.f32.mrf.mxu0
    %v2081 = vadd.f32 %v1912, %v2080
    %2082 = vmatmul.bf16.gmra.mxu0 %v825
    %v2083 = vpop.f32.mrf.mxu0
    %v2084 = vadd.f32 %v1915, %v2083
    %v2085 = vpop.f32.mrf.mxu0
    %v2086 = vadd.f32 %v1917, %v2085
    %2087 = vmatmul.bf16.gmra.mxu0 %v830
    %v2088 = vpop.f32.mrf.mxu0
    %v2089 = vadd.f32 %v1920, %v2088
    %v2090 = vpop.f32.mrf.mxu0
    %v2091 = vadd.f32 %v1922, %v2090
    %2092 = vmatmul.bf16.gmra.mxu0 %v835
    %v2093 = vpop.f32.mrf.mxu0
    %v2094 = vadd.f32 %v1925, %v2093
    %v2095 = vpop.f32.mrf.mxu0
    %v2096 = vadd.f32 %v1927, %v2095
    %2097 = vmatmul.bf16.gmra.mxu0 %v840
    %v2098 = vpop.f32.mrf.mxu0
    %v2099 = vadd.f32 %v1930, %v2098
    %v2100 = vpop.f32.mrf.mxu0
    %v2101 = vadd.f32 %v1932, %v2100
    %2102 = vmatmul.bf16.gmra.mxu0 %v845
    %v2103 = vpop.f32.mrf.mxu0
    %v2104 = vadd.f32 %v1935, %v2103
    %v2105 = vpop.f32.mrf.mxu0
    %v2106 = vadd.f32 %v1937, %v2105
    %2107 = vmatmul.bf16.gmra.mxu0 %v850
    %v2108 = vpop.f32.mrf.mxu0
    %v2109 = vadd.f32 %v1940, %v2108
    %v2110 = vpop.f32.mrf.mxu0
    %v2111 = vadd.f32 %v1942, %v2110
    %2112 = vmatmul.bf16.gmra.mxu0 %v855
    %v2113 = vpop.f32.mrf.mxu0
    %v2114 = vadd.f32 %v1945, %v2113
    %v2115 = vpop.f32.mrf.mxu0
    %v2116 = vadd.f32 %v1947, %v2115
    %2117 = vmatmul.bf16.gmra.mxu0 %v860
    %v2118 = vpop.f32.mrf.mxu0
    %v2119 = vadd.f32 %v1950, %v2118
    %v2120 = vpop.f32.mrf.mxu0
    %v2121 = vadd.f32 %v1952, %v2120
    %2122 = vmatmul.bf16.gmra.mxu0 %v865
    %v2123 = vpop.f32.mrf.mxu0
    %v2124 = vadd.f32 %v1955, %v2123
    %v2125 = vpop.f32.mrf.mxu0
    %v2126 = vadd.f32 %v1957, %v2125
    %2127 = vmatmul.bf16.gmra.mxu0 %v870
    %v2128 = vpop.f32.mrf.mxu0
    %v2129 = vadd.f32 %v1960, %v2128
    %v2130 = vpop.f32.mrf.mxu0
    %v2131 = vadd.f32 %v1962, %v2130
    %2132 = vmatmul.bf16.gmra.mxu0 %v875
    %v2133 = vpop.f32.mrf.mxu0
    %v2134 = vadd.f32 %v1965, %v2133
    %v2135 = vpop.f32.mrf.mxu0
    %v2136 = vadd.f32 %v1967, %v2135
    %2137 = vmatmul.bf16.gmra.mxu0 %v880
    %v2138 = vpop.f32.mrf.mxu0
    %v2139 = vadd.f32 %v1970, %v2138
    %v2140 = vpop.f32.mrf.mxu0
    %v2141 = vadd.f32 %v1972, %v2140
    %2142 = vmatmul.bf16.gmra.mxu0 %v885
    %v2143 = vpop.f32.mrf.mxu0
    %v2144 = vadd.f32 %v1975, %v2143
    %v2145 = vpop.f32.mrf.mxu0
    %v2146 = vadd.f32 %v1977, %v2145
    %2147 = vmatmul.bf16.gmra.mxu0 %v890
    %v2148 = vpop.f32.mrf.mxu0
    %v2149 = vadd.f32 %v1980, %v2148
    %v2150 = vpop.f32.mrf.mxu0
    %v2151 = vadd.f32 %v1982, %v2150
    %2152 = vmatmul.bf16.gmra.mxu0 %v895
    %v2153 = vpop.f32.mrf.mxu0
    %v2154 = vadd.f32 %v1985, %v2153
    %v2155 = vpop.f32.mrf.mxu0
    %v2156 = vadd.f32 %v1987, %v2155
    %2157 = vmatmul.bf16.gmra.mxu0 %v900
    %v2158 = vpop.f32.mrf.mxu0
    %v2159 = vadd.f32 %v1990, %v2158
    %v2160 = vpop.f32.mrf.mxu0
    %v2161 = vadd.f32 %v1992, %v2160
    %2162 = vmatmul.bf16.gmra.mxu0 %v905
    %v2163 = vpop.f32.mrf.mxu0
    %v2164 = vadd.f32 %v1995, %v2163
    %v2165 = vpop.f32.mrf.mxu0
    %v2166 = vadd.f32 %v1997, %v2165
    %2167 = vmatmul.bf16.gmra.mxu0 %v910
    %v2168 = vpop.f32.mrf.mxu0
    %v2169 = vadd.f32 %v2000, %v2168
    %v2170 = vpop.f32.mrf.mxu0
    %v2171 = vadd.f32 %v2002, %v2170
    %2172 = vmatmul.bf16.gmra.mxu0 %v915
    %v2173 = vpop.f32.mrf.mxu0
    %v2174 = vadd.f32 %v2005, %v2173
    %v2175 = vpop.f32.mrf.mxu0
    %v2176 = vadd.f32 %v2007, %v2175
    %2177 = vmatmul.bf16.gmra.mxu0 %v920
    %v2178 = vpop.f32.mrf.mxu0
    %v2179 = vadd.f32 %v2010, %v2178
    %v2180 = vpop.f32.mrf.mxu0
    %v2181 = vadd.f32 %v2012, %v2180
    %2182 = vmatmul.bf16.gmra.mxu0 %v925
    %v2183 = vpop.f32.mrf.mxu0
    %v2184 = vadd.f32 %v2015, %v2183
    %v2185 = vpop.f32.mrf.mxu0
    %v2186 = vadd.f32 %v2017, %v2185
    %2187 = vmatmul.bf16.gmra.mxu0 %v930
    %v2188 = vpop.f32.mrf.mxu0
    %v2189 = vadd.f32 %v2020, %v2188
    %v2190 = vpop.f32.mrf.mxu0
    %v2191 = vadd.f32 %v2022, %v2190
    %2192 = vmatmul.bf16.gmra.mxu0 %v935
    %v2193 = vpop.f32.mrf.mxu0
    %v2194 = vadd.f32 %v2025, %v2193
    %v2195 = vpop.f32.mrf.mxu0
    %v2196 = vadd.f32 %v2027, %v2195
    %2197 = vmatmul.bf16.gmra.mxu0 %v940
    %v2198 = vpop.f32.mrf.mxu0
    %v2199 = vadd.f32 %v2030, %v2198
    %v2200 = vpop.f32.mrf.mxu0
    %v2201 = vadd.f32 %v2032, %v2200
    %2202 = vmatmul.bf16.gmra.mxu0 %v945
    %v2203 = vpop.f32.mrf.mxu0
    %v2204 = vadd.f32 %v2035, %v2203
    %v2205 = vpop.f32.mrf.mxu0
    %v2206 = vadd.f32 %v2037, %v2205
    %2207 = vmatmul.bf16.gmra.mxu0 %v950
    %v2208 = vpop.f32.mrf.mxu0
    %v2209 = vadd.f32 %v2040, %v2208
    %v2210 = vpop.f32.mrf.mxu0
    %v2211 = vadd.f32 %v2042, %v2210
    %2212 = vmatmul.bf16.gmra.mxu0 %v955
    %v2213 = vpop.f32.mrf.mxu0
    %v2214 = vadd.f32 %v2045, %v2213
    %v2215 = vpop.f32.mrf.mxu0
    %v2216 = vadd.f32 %v2047, %v2215
    %2217 = vmatmul.bf16.gmra.mxu0 %v960
    %v2218 = vpop.f32.mrf.mxu0
    %v2219 = vadd.f32 %v2050, %v2218
    %v2220 = vpop.f32.mrf.mxu0
    %v2221 = vadd.f32 %v2052, %v2220
    %2222 = vdwg.mxu0
    %2223 = vmatpush.bf16.msra.mxu0 0
    %2224 = vmatpush.bf16.msra.mxu0 0
    %2225 = vmatpush.bf16.msra.mxu0 0
    %2226 = vmatpush.bf16.msra.mxu0 0
    %2227 = vmatpush.bf16.msra.mxu0 %v1376
    %2228 = vmatpush.bf16.msra.mxu0 %v1374
    %2229 = vmatpush.bf16.msra.mxu0 %v1372
    %2230 = vmatpush.bf16.msra.mxu0 %v1370
    %2231 = vmatmul.bf16.gmra.mxu0 %v1452
    %v2232 = vpop.f32.mrf.mxu0
    %v2233 = vadd.f32 %v2064, %v2232
    %v2234 = vpop.f32.mrf.mxu0
    %v2235 = vadd.f32 %v2066, %v2234
    %2236 = vmatmul.bf16.gmra.mxu0 %v1455
    %v2237 = vpop.f32.mrf.mxu0
    %v2238 = vadd.f32 %v2069, %v2237
    %v2239 = vpop.f32.mrf.mxu0
    %v2240 = vadd.f32 %v2071, %v2239
    %2241 = vmatmul.bf16.gmra.mxu0 %v1458
    %v2242 = vpop.f32.mrf.mxu0
    %v2243 = vadd.f32 %v2074, %v2242
    %v2244 = vpop.f32.mrf.mxu0
    %v2245 = vadd.f32 %v2076, %v2244
    %2246 = vmatmul.bf16.gmra.mxu0 %v1461
    %v2247 = vpop.f32.mrf.mxu0
    %v2248 = vadd.f32 %v2079, %v2247
    %v2249 = vpop.f32.mrf.mxu0
    %v2250 = vadd.f32 %v2081, %v2249
    %2251 = vmatmul.bf16.gmra.mxu0 %v1464
    %v2252 = vpop.f32.mrf.mxu0
    %v2253 = vadd.f32 %v2084, %v2252
    %v2254 = vpop.f32.mrf.mxu0
    %v2255 = vadd.f32 %v2086, %v2254
    %2256 = vmatmul.bf16.gmra.mxu0 %v1467
    %v2257 = vpop.f32.mrf.mxu0
    %v2258 = vadd.f32 %v2089, %v2257
    %v2259 = vpop.f32.mrf.mxu0
    %v2260 = vadd.f32 %v2091, %v2259
    %2261 = vmatmul.bf16.gmra.mxu0 %v1470
    %v2262 = vpop.f32.mrf.mxu0
    %v2263 = vadd.f32 %v2094, %v2262
    %v2264 = vpop.f32.mrf.mxu0
    %v2265 = vadd.f32 %v2096, %v2264
    %2266 = vmatmul.bf16.gmra.mxu0 %v1473
    %v2267 = vpop.f32.mrf.mxu0
    %v2268 = vadd.f32 %v2099, %v2267
    %v2269 = vpop.f32.mrf.mxu0
    %v2270 = vadd.f32 %v2101, %v2269
    %2271 = vmatmul.bf16.gmra.mxu0 %v1476
    %v2272 = vpop.f32.mrf.mxu0
    %v2273 = vadd.f32 %v2104, %v2272
    %v2274 = vpop.f32.mrf.mxu0
    %v2275 = vadd.f32 %v2106, %v2274
    %2276 = vmatmul.bf16.gmra.mxu0 %v1479
    %v2277 = vpop.f32.mrf.mxu0
    %v2278 = vadd.f32 %v2109, %v2277
    %v2279 = vpop.f32.mrf.mxu0
    %v2280 = vadd.f32 %v2111, %v2279
    %2281 = vmatmul.bf16.gmra.mxu0 %v1482
    %v2282 = vpop.f32.mrf.mxu0
    %v2283 = vadd.f32 %v2114, %v2282
    %v2284 = vpop.f32.mrf.mxu0
    %v2285 = vadd.f32 %v2116, %v2284
    %2286 = vmatmul.bf16.gmra.mxu0 %v1485
    %v2287 = vpop.f32.mrf.mxu0
    %v2288 = vadd.f32 %v2119, %v2287
    %v2289 = vpop.f32.mrf.mxu0
    %v2290 = vadd.f32 %v2121, %v2289
    %2291 = vmatmul.bf16.gmra.mxu0 %v1488
    %v2292 = vpop.f32.mrf.mxu0
    %v2293 = vadd.f32 %v2124, %v2292
    %v2294 = vpop.f32.mrf.mxu0
    %v2295 = vadd.f32 %v2126, %v2294
    %2296 = vmatmul.bf16.gmra.mxu0 %v1491
    %v2297 = vpop.f32.mrf.mxu0
    %v2298 = vadd.f32 %v2129, %v2297
    %v2299 = vpop.f32.mrf.mxu0
    %v2300 = vadd.f32 %v2131, %v2299
    %2301 = vmatmul.bf16.gmra.mxu0 %v1494
    %v2302 = vpop.f32.mrf.mxu0
    %v2303 = vadd.f32 %v2134, %v2302
    %v2304 = vpop.f32.mrf.mxu0
    %v2305 = vadd.f32 %v2136, %v2304
    %2306 = vmatmul.bf16.gmra.mxu0 %v1497
    %v2307 = vpop.f32.mrf.mxu0
    %v2308 = vadd.f32 %v2139, %v2307
    %v2309 = vpop.f32.mrf.mxu0
    %v2310 = vadd.f32 %v2141, %v2309
    %2311 = vmatmul.bf16.gmra.mxu0 %v1500
    %v2312 = vpop.f32.mrf.mxu0
    %v2313 = vadd.f32 %v2144, %v2312
    %v2314 = vpop.f32.mrf.mxu0
    %v2315 = vadd.f32 %v2146, %v2314
    %2316 = vmatmul.bf16.gmra.mxu0 %v1503
    %v2317 = vpop.f32.mrf.mxu0
    %v2318 = vadd.f32 %v2149, %v2317
    %v2319 = vpop.f32.mrf.mxu0
    %v2320 = vadd.f32 %v2151, %v2319
    %2321 = vmatmul.bf16.gmra.mxu0 %v1506
    %v2322 = vpop.f32.mrf.mxu0
    %v2323 = vadd.f32 %v2154, %v2322
    %v2324 = vpop.f32.mrf.mxu0
    %v2325 = vadd.f32 %v2156, %v2324
    %2326 = vmatmul.bf16.gmra.mxu0 %v1509
    %v2327 = vpop.f32.mrf.mxu0
    %v2328 = vadd.f32 %v2159, %v2327
    %v2329 = vpop.f32.mrf.mxu0
    %v2330 = vadd.f32 %v2161, %v2329
    %2331 = vmatmul.bf16.gmra.mxu0 %v1512
    %v2332 = vpop.f32.mrf.mxu0
    %v2333 = vadd.f32 %v2164, %v2332
    %v2334 = vpop.f32.mrf.mxu0
    %v2335 = vadd.f32 %v2166, %v2334
    %2336 = vmatmul.bf16.gmra.mxu0 %v1515
    %v2337 = vpop.f32.mrf.mxu0
    %v2338 = vadd.f32 %v2169, %v2337
    %v2339 = vpop.f32.mrf.mxu0
    %v2340 = vadd.f32 %v2171, %v2339
    %2341 = vmatmul.bf16.gmra.mxu0 %v1518
    %v2342 = vpop.f32.mrf.mxu0
    %v2343 = vadd.f32 %v2174, %v2342
    %v2344 = vpop.f32.mrf.mxu0
    %v2345 = vadd.f32 %v2176, %v2344
    %2346 = vmatmul.bf16.gmra.mxu0 %v1521
    %v2347 = vpop.f32.mrf.mxu0
    %v2348 = vadd.f32 %v2179, %v2347
    %v2349 = vpop.f32.mrf.mxu0
    %v2350 = vadd.f32 %v2181, %v2349
    %2351 = vmatmul.bf16.gmra.mxu0 %v1524
    %v2352 = vpop.f32.mrf.mxu0
    %v2353 = vadd.f32 %v2184, %v2352
    %v2354 = vpop.f32.mrf.mxu0
    %v2355 = vadd.f32 %v2186, %v2354
    %2356 = vmatmul.bf16.gmra.mxu0 %v1527
    %v2357 = vpop.f32.mrf.mxu0
    %v2358 = vadd.f32 %v2189, %v2357
    %v2359 = vpop.f32.mrf.mxu0
    %v2360 = vadd.f32 %v2191, %v2359
    %2361 = vmatmul.bf16.gmra.mxu0 %v1530
    %v2362 = vpop.f32.mrf.mxu0
    %v2363 = vadd.f32 %v2194, %v2362
    %v2364 = vpop.f32.mrf.mxu0
    %v2365 = vadd.f32 %v2196, %v2364
    %2366 = vmatmul.bf16.gmra.mxu0 %v1533
    %v2367 = vpop.f32.mrf.mxu0
    %v2368 = vadd.f32 %v2199, %v2367
    %v2369 = vpop.f32.mrf.mxu0
    %v2370 = vadd.f32 %v2201, %v2369
    %2371 = vmatmul.bf16.gmra.mxu0 %v1536
    %v2372 = vpop.f32.mrf.mxu0
    %v2373 = vadd.f32 %v2204, %v2372
    %v2374 = vpop.f32.mrf.mxu0
    %v2375 = vadd.f32 %v2206, %v2374
    %2376 = vmatmul.bf16.gmra.mxu0 %v1539
    %v2377 = vpop.f32.mrf.mxu0
    %v2378 = vadd.f32 %v2209, %v2377
    %v2379 = vpop.f32.mrf.mxu0
    %v2380 = vadd.f32 %v2211, %v2379
    %2381 = vmatmul.bf16.gmra.mxu0 %v1542
    %v2382 = vpop.f32.mrf.mxu0
    %v2383 = vadd.f32 %v2214, %v2382
    %v2384 = vpop.f32.mrf.mxu0
    %v2385 = vadd.f32 %v2216, %v2384
    %2386 = vmatmul.bf16.gmra.mxu0 %v1545
    %v2387 = vpop.f32.mrf.mxu0
    %v2388 = vadd.f32 %v2219, %v2387
    %v2389 = vpop.f32.mrf.mxu0
    %v2390 = vadd.f32 %v2221, %v2389
    %2391 = vdwg.mxu0
    %2392 = vmatpush.bf16.msra.mxu0 %v1321
    %2393 = vmatpush.bf16.msra.mxu0 %v1319
    %2394 = vmatpush.bf16.msra.mxu0 %v1317
    %2395 = vmatpush.bf16.msra.mxu0 %v1315
    %2396 = vmatpush.bf16.msra.mxu0 %v1313
    %2397 = vmatpush.bf16.msra.mxu0 %v1311
    %2398 = vmatpush.bf16.msra.mxu0 %v1309
    %2399 = vmatpush.bf16.msra.mxu0 %v1307
    %2400 = vmatmul.bf16.gmra.mxu0 %v802
    %v2401 = vpop.f32.mrf.mxu0
    %v2402 = vadd.f32 %v287, %v2401
    %v2403 = vpop.f32.mrf.mxu0
    %v2404 = vadd.f32 %v287, %v2403
    %2405 = vmatmul.bf16.gmra.mxu0 %v807
    %v2406 = vpop.f32.mrf.mxu0
    %v2407 = vadd.f32 %v287, %v2406
    %v2408 = vpop.f32.mrf.mxu0
    %v2409 = vadd.f32 %v287, %v2408
    %2410 = vmatmul.bf16.gmra.mxu0 %v812
    %v2411 = vpop.f32.mrf.mxu0
    %v2412 = vadd.f32 %v287, %v2411
    %v2413 = vpop.f32.mrf.mxu0
    %v2414 = vadd.f32 %v287, %v2413
    %2415 = vmatmul.bf16.gmra.mxu0 %v817
    %v2416 = vpop.f32.mrf.mxu0
    %v2417 = vadd.f32 %v287, %v2416
    %v2418 = vpop.f32.mrf.mxu0
    %v2419 = vadd.f32 %v287, %v2418
    %2420 = vmatmul.bf16.gmra.mxu0 %v822
    %v2421 = vpop.f32.mrf.mxu0
    %v2422 = vadd.f32 %v287, %v2421
    %v2423 = vpop.f32.mrf.mxu0
    %v2424 = vadd.f32 %v287, %v2423
    %2425 = vmatmul.bf16.gmra.mxu0 %v827
    %v2426 = vpop.f32.mrf.mxu0
    %v2427 = vadd.f32 %v287, %v2426
    %v2428 = vpop.f32.mrf.mxu0
    %v2429 = vadd.f32 %v287, %v2428
    %2430 = vmatmul.bf16.gmra.mxu0 %v832
    %v2431 = vpop.f32.mrf.mxu0
    %v2432 = vadd.f32 %v287, %v2431
    %v2433 = vpop.f32.mrf.mxu0
    %v2434 = vadd.f32 %v287, %v2433
    %2435 = vmatmul.bf16.gmra.mxu0 %v837
    %v2436 = vpop.f32.mrf.mxu0
    %v2437 = vadd.f32 %v287, %v2436
    %v2438 = vpop.f32.mrf.mxu0
    %v2439 = vadd.f32 %v287, %v2438
    %2440 = vmatmul.bf16.gmra.mxu0 %v842
    %v2441 = vpop.f32.mrf.mxu0
    %v2442 = vadd.f32 %v287, %v2441
    %v2443 = vpop.f32.mrf.mxu0
    %v2444 = vadd.f32 %v287, %v2443
    %2445 = vmatmul.bf16.gmra.mxu0 %v847
    %v2446 = vpop.f32.mrf.mxu0
    %v2447 = vadd.f32 %v287, %v2446
    %v2448 = vpop.f32.mrf.mxu0
    %v2449 = vadd.f32 %v287, %v2448
    %2450 = vmatmul.bf16.gmra.mxu0 %v852
    %v2451 = vpop.f32.mrf.mxu0
    %v2452 = vadd.f32 %v287, %v2451
    %v2453 = vpop.f32.mrf.mxu0
    %v2454 = vadd.f32 %v287, %v2453
    %2455 = vmatmul.bf16.gmra.mxu0 %v857
    %v2456 = vpop.f32.mrf.mxu0
    %v2457 = vadd.f32 %v287, %v2456
    %v2458 = vpop.f32.mrf.mxu0
    %v2459 = vadd.f32 %v287, %v2458
    %2460 = vmatmul.bf16.gmra.mxu0 %v862
    %v2461 = vpop.f32.mrf.mxu0
    %v2462 = vadd.f32 %v287, %v2461
    %v2463 = vpop.f32.mrf.mxu0
    %v2464 = vadd.f32 %v287, %v2463
    %2465 = vmatmul.bf16.gmra.mxu0 %v867
    %v2466 = vpop.f32.mrf.mxu0
    %v2467 = vadd.f32 %v287, %v2466
    %v2468 = vpop.f32.mrf.mxu0
    %v2469 = vadd.f32 %v287, %v2468
    %2470 = vmatmul.bf16.gmra.mxu0 %v872
    %v2471 = vpop.f32.mrf.mxu0
    %v2472 = vadd.f32 %v287, %v2471
    %v2473 = vpop.f32.mrf.mxu0
    %v2474 = vadd.f32 %v287, %v2473
    %2475 = vmatmul.bf16.gmra.mxu0 %v877
    %v2476 = vpop.f32.mrf.mxu0
    %v2477 = vadd.f32 %v287, %v2476
    %v2478 = vpop.f32.mrf.mxu0
    %v2479 = vadd.f32 %v287, %v2478
    %2480 = vmatmul.bf16.gmra.mxu0 %v882
    %v2481 = vpop.f32.mrf.mxu0
    %v2482 = vadd.f32 %v287, %v2481
    %v2483 = vpop.f32.mrf.mxu0
    %v2484 = vadd.f32 %v287, %v2483
    %2485 = vmatmul.bf16.gmra.mxu0 %v887
    %v2486 = vpop.f32.mrf.mxu0
    %v2487 = vadd.f32 %v287, %v2486
    %v2488 = vpop.f32.mrf.mxu0
    %v2489 = vadd.f32 %v287, %v2488
    %2490 = vmatmul.bf16.gmra.mxu0 %v892
    %v2491 = vpop.f32.mrf.mxu0
    %v2492 = vadd.f32 %v287, %v2491
    %v2493 = vpop.f32.mrf.mxu0
    %v2494 = vadd.f32 %v287, %v2493
    %2495 = vmatmul.bf16.gmra.mxu0 %v897
    %v2496 = vpop.f32.mrf.mxu0
    %v2497 = vadd.f32 %v287, %v2496
    %v2498 = vpop.f32.mrf.mxu0
    %v2499 = vadd.f32 %v287, %v2498
    %2500 = vmatmul.bf16.gmra.mxu0 %v902
    %v2501 = vpop.f32.mrf.mxu0
    %v2502 = vadd.f32 %v287, %v2501
    %v2503 = vpop.f32.mrf.mxu0
    %v2504 = vadd.f32 %v287, %v2503
    %2505 = vmatmul.bf16.gmra.mxu0 %v907
    %v2506 = vpop.f32.mrf.mxu0
    %v2507 = vadd.f32 %v287, %v2506
    %v2508 = vpop.f32.mrf.mxu0
    %v2509 = vadd.f32 %v287, %v2508
    %2510 = vmatmul.bf16.gmra.mxu0 %v912
    %v2511 = vpop.f32.mrf.mxu0
    %v2512 = vadd.f32 %v287, %v2511
    %v2513 = vpop.f32.mrf.mxu0
    %v2514 = vadd.f32 %v287, %v2513
    %2515 = vmatmul.bf16.gmra.mxu0 %v917
    %v2516 = vpop.f32.mrf.mxu0
    %v2517 = vadd.f32 %v287, %v2516
    %v2518 = vpop.f32.mrf.mxu0
    %v2519 = vadd.f32 %v287, %v2518
    %2520 = vmatmul.bf16.gmra.mxu0 %v922
    %v2521 = vpop.f32.mrf.mxu0
    %v2522 = vadd.f32 %v287, %v2521
    %v2523 = vpop.f32.mrf.mxu0
    %v2524 = vadd.f32 %v287, %v2523
    %2525 = vmatmul.bf16.gmra.mxu0 %v927
    %v2526 = vpop.f32.mrf.mxu0
    %v2527 = vadd.f32 %v287, %v2526
    %v2528 = vpop.f32.mrf.mxu0
    %v2529 = vadd.f32 %v287, %v2528
    %2530 = vmatmul.bf16.gmra.mxu0 %v932
    %v2531 = vpop.f32.mrf.mxu0
    %v2532 = vadd.f32 %v287, %v2531
    %v2533 = vpop.f32.mrf.mxu0
    %v2534 = vadd.f32 %v287, %v2533
    %2535 = vmatmul.bf16.gmra.mxu0 %v937
    %v2536 = vpop.f32.mrf.mxu0
    %v2537 = vadd.f32 %v287, %v2536
    %v2538 = vpop.f32.mrf.mxu0
    %v2539 = vadd.f32 %v287, %v2538
    %2540 = vmatmul.bf16.gmra.mxu0 %v942
    %v2541 = vpop.f32.mrf.mxu0
    %v2542 = vadd.f32 %v287, %v2541
    %v2543 = vpop.f32.mrf.mxu0
    %v2544 = vadd.f32 %v287, %v2543
    %2545 = vmatmul.bf16.gmra.mxu0 %v947
    %v2546 = vpop.f32.mrf.mxu0
    %v2547 = vadd.f32 %v287, %v2546
    %v2548 = vpop.f32.mrf.mxu0
    %v2549 = vadd.f32 %v287, %v2548
    %2550 = vmatmul.bf16.gmra.mxu0 %v952
    %v2551 = vpop.f32.mrf.mxu0
    %v2552 = vadd.f32 %v287, %v2551
    %v2553 = vpop.f32.mrf.mxu0
    %v2554 = vadd.f32 %v287, %v2553
    %2555 = vmatmul.bf16.gmra.mxu0 %v957
    %v2556 = vpop.f32.mrf.mxu0
    %v2557 = vadd.f32 %v287, %v2556
    %v2558 = vpop.f32.mrf.mxu0
    %v2559 = vadd.f32 %v287, %v2558
    %2560 = vdwg.mxu0
    %2561 = vmatpush.bf16.msra.mxu0 %v1337
    %2562 = vmatpush.bf16.msra.mxu0 %v1335
    %2563 = vmatpush.bf16.msra.mxu0 %v1333
    %2564 = vmatpush.bf16.msra.mxu0 %v1331
    %2565 = vmatpush.bf16.msra.mxu0 %v1329
    %2566 = vmatpush.bf16.msra.mxu0 %v1327
    %2567 = vmatpush.bf16.msra.mxu0 %v1325
    %2568 = vmatpush.bf16.msra.mxu0 %v1323
    %2569 = vmatmul.bf16.gmra.mxu0 %v803
    %v2570 = vpop.f32.mrf.mxu0
    %v2571 = vadd.f32 %v2402, %v2570
    %v2572 = vpop.f32.mrf.mxu0
    %v2573 = vadd.f32 %v2404, %v2572
    %2574 = vmatmul.bf16.gmra.mxu0 %v808
    %v2575 = vpop.f32.mrf.mxu0
    %v2576 = vadd.f32 %v2407, %v2575
    %v2577 = vpop.f32.mrf.mxu0
    %v2578 = vadd.f32 %v2409, %v2577
    %2579 = vmatmul.bf16.gmra.mxu0 %v813
    %v2580 = vpop.f32.mrf.mxu0
    %v2581 = vadd.f32 %v2412, %v2580
    %v2582 = vpop.f32.mrf.mxu0
    %v2583 = vadd.f32 %v2414, %v2582
    %2584 = vmatmul.bf16.gmra.mxu0 %v818
    %v2585 = vpop.f32.mrf.mxu0
    %v2586 = vadd.f32 %v2417, %v2585
    %v2587 = vpop.f32.mrf.mxu0
    %v2588 = vadd.f32 %v2419, %v2587
    %2589 = vmatmul.bf16.gmra.mxu0 %v823
    %v2590 = vpop.f32.mrf.mxu0
    %v2591 = vadd.f32 %v2422, %v2590
    %v2592 = vpop.f32.mrf.mxu0
    %v2593 = vadd.f32 %v2424, %v2592
    %2594 = vmatmul.bf16.gmra.mxu0 %v828
    %v2595 = vpop.f32.mrf.mxu0
    %v2596 = vadd.f32 %v2427, %v2595
    %v2597 = vpop.f32.mrf.mxu0
    %v2598 = vadd.f32 %v2429, %v2597
    %2599 = vmatmul.bf16.gmra.mxu0 %v833
    %v2600 = vpop.f32.mrf.mxu0
    %v2601 = vadd.f32 %v2432, %v2600
    %v2602 = vpop.f32.mrf.mxu0
    %v2603 = vadd.f32 %v2434, %v2602
    %2604 = vmatmul.bf16.gmra.mxu0 %v838
    %v2605 = vpop.f32.mrf.mxu0
    %v2606 = vadd.f32 %v2437, %v2605
    %v2607 = vpop.f32.mrf.mxu0
    %v2608 = vadd.f32 %v2439, %v2607
    %2609 = vmatmul.bf16.gmra.mxu0 %v843
    %v2610 = vpop.f32.mrf.mxu0
    %v2611 = vadd.f32 %v2442, %v2610
    %v2612 = vpop.f32.mrf.mxu0
    %v2613 = vadd.f32 %v2444, %v2612
    %2614 = vmatmul.bf16.gmra.mxu0 %v848
    %v2615 = vpop.f32.mrf.mxu0
    %v2616 = vadd.f32 %v2447, %v2615
    %v2617 = vpop.f32.mrf.mxu0
    %v2618 = vadd.f32 %v2449, %v2617
    %2619 = vmatmul.bf16.gmra.mxu0 %v853
    %v2620 = vpop.f32.mrf.mxu0
    %v2621 = vadd.f32 %v2452, %v2620
    %v2622 = vpop.f32.mrf.mxu0
    %v2623 = vadd.f32 %v2454, %v2622
    %2624 = vmatmul.bf16.gmra.mxu0 %v858
    %v2625 = vpop.f32.mrf.mxu0
    %v2626 = vadd.f32 %v2457, %v2625
    %v2627 = vpop.f32.mrf.mxu0
    %v2628 = vadd.f32 %v2459, %v2627
    %2629 = vmatmul.bf16.gmra.mxu0 %v863
    %v2630 = vpop.f32.mrf.mxu0
    %v2631 = vadd.f32 %v2462, %v2630
    %v2632 = vpop.f32.mrf.mxu0
    %v2633 = vadd.f32 %v2464, %v2632
    %2634 = vmatmul.bf16.gmra.mxu0 %v868
    %v2635 = vpop.f32.mrf.mxu0
    %v2636 = vadd.f32 %v2467, %v2635
    %v2637 = vpop.f32.mrf.mxu0
    %v2638 = vadd.f32 %v2469, %v2637
    %2639 = vmatmul.bf16.gmra.mxu0 %v873
    %v2640 = vpop.f32.mrf.mxu0
    %v2641 = vadd.f32 %v2472, %v2640
    %v2642 = vpop.f32.mrf.mxu0
    %v2643 = vadd.f32 %v2474, %v2642
    %2644 = vmatmul.bf16.gmra.mxu0 %v878
    %v2645 = vpop.f32.mrf.mxu0
    %v2646 = vadd.f32 %v2477, %v2645
    %v2647 = vpop.f32.mrf.mxu0
    %v2648 = vadd.f32 %v2479, %v2647
    %2649 = vmatmul.bf16.gmra.mxu0 %v883
    %v2650 = vpop.f32.mrf.mxu0
    %v2651 = vadd.f32 %v2482, %v2650
    %v2652 = vpop.f32.mrf.mxu0
    %v2653 = vadd.f32 %v2484, %v2652
    %2654 = vmatmul.bf16.gmra.mxu0 %v888
    %v2655 = vpop.f32.mrf.mxu0
    %v2656 = vadd.f32 %v2487, %v2655
    %v2657 = vpop.f32.mrf.mxu0
    %v2658 = vadd.f32 %v2489, %v2657
    %2659 = vmatmul.bf16.gmra.mxu0 %v893
    %v2660 = vpop.f32.mrf.mxu0
    %v2661 = vadd.f32 %v2492, %v2660
    %v2662 = vpop.f32.mrf.mxu0
    %v2663 = vadd.f32 %v2494, %v2662
    %2664 = vmatmul.bf16.gmra.mxu0 %v898
    %v2665 = vpop.f32.mrf.mxu0
    %v2666 = vadd.f32 %v2497, %v2665
    %v2667 = vpop.f32.mrf.mxu0
    %v2668 = vadd.f32 %v2499, %v2667
    %2669 = vmatmul.bf16.gmra.mxu0 %v903
    %v2670 = vpop.f32.mrf.mxu0
    %v2671 = vadd.f32 %v2502, %v2670
    %v2672 = vpop.f32.mrf.mxu0
    %v2673 = vadd.f32 %v2504, %v2672
    %2674 = vmatmul.bf16.gmra.mxu0 %v908
    %v2675 = vpop.f32.mrf.mxu0
    %v2676 = vadd.f32 %v2507, %v2675
    %v2677 = vpop.f32.mrf.mxu0
    %v2678 = vadd.f32 %v2509, %v2677
    %2679 = vmatmul.bf16.gmra.mxu0 %v913
    %v2680 = vpop.f32.mrf.mxu0
    %v2681 = vadd.f32 %v2512, %v2680
    %v2682 = vpop.f32.mrf.mxu0
    %v2683 = vadd.f32 %v2514, %v2682
    %2684 = vmatmul.bf16.gmra.mxu0 %v918
    %v2685 = vpop.f32.mrf.mxu0
    %v2686 = vadd.f32 %v2517, %v2685
    %v2687 = vpop.f32.mrf.mxu0
    %v2688 = vadd.f32 %v2519, %v2687
    %2689 = vmatmul.bf16.gmra.mxu0 %v923
    %v2690 = vpop.f32.mrf.mxu0
    %v2691 = vadd.f32 %v2522, %v2690
    %v2692 = vpop.f32.mrf.mxu0
    %v2693 = vadd.f32 %v2524, %v2692
    %2694 = vmatmul.bf16.gmra.mxu0 %v928
    %v2695 = vpop.f32.mrf.mxu0
    %v2696 = vadd.f32 %v2527, %v2695
    %v2697 = vpop.f32.mrf.mxu0
    %v2698 = vadd.f32 %v2529, %v2697
    %2699 = vmatmul.bf16.gmra.mxu0 %v933
    %v2700 = vpop.f32.mrf.mxu0
    %v2701 = vadd.f32 %v2532, %v2700
    %v2702 = vpop.f32.mrf.mxu0
    %v2703 = vadd.f32 %v2534, %v2702
    %2704 = vmatmul.bf16.gmra.mxu0 %v938
    %v2705 = vpop.f32.mrf.mxu0
    %v2706 = vadd.f32 %v2537, %v2705
    %v2707 = vpop.f32.mrf.mxu0
    %v2708 = vadd.f32 %v2539, %v2707
    %2709 = vmatmul.bf16.gmra.mxu0 %v943
    %v2710 = vpop.f32.mrf.mxu0
    %v2711 = vadd.f32 %v2542, %v2710
    %v2712 = vpop.f32.mrf.mxu0
    %v2713 = vadd.f32 %v2544, %v2712
    %2714 = vmatmul.bf16.gmra.mxu0 %v948
    %v2715 = vpop.f32.mrf.mxu0
    %v2716 = vadd.f32 %v2547, %v2715
    %v2717 = vpop.f32.mrf.mxu0
    %v2718 = vadd.f32 %v2549, %v2717
    %2719 = vmatmul.bf16.gmra.mxu0 %v953
    %v2720 = vpop.f32.mrf.mxu0
    %v2721 = vadd.f32 %v2552, %v2720
    %v2722 = vpop.f32.mrf.mxu0
    %v2723 = vadd.f32 %v2554, %v2722
    %2724 = vmatmul.bf16.gmra.mxu0 %v958
    %v2725 = vpop.f32.mrf.mxu0
    %v2726 = vadd.f32 %v2557, %v2725
    %v2727 = vpop.f32.mrf.mxu0
    %v2728 = vadd.f32 %v2559, %v2727
    %2729 = vdwg.mxu0
    %2730 = vmatpush.bf16.msra.mxu0 %v1353
    %2731 = vmatpush.bf16.msra.mxu0 %v1351
    %2732 = vmatpush.bf16.msra.mxu0 %v1349
    %2733 = vmatpush.bf16.msra.mxu0 %v1347
    %2734 = vmatpush.bf16.msra.mxu0 %v1345
    %2735 = vmatpush.bf16.msra.mxu0 %v1343
    %2736 = vmatpush.bf16.msra.mxu0 %v1341
    %2737 = vmatpush.bf16.msra.mxu0 %v1339
    %2738 = vmatmul.bf16.gmra.mxu0 %v804
    %v2739 = vpop.f32.mrf.mxu0
    %v2740 = vadd.f32 %v2571, %v2739
    %v2741 = vpop.f32.mrf.mxu0
    %v2742 = vadd.f32 %v2573, %v2741
    %2743 = vmatmul.bf16.gmra.mxu0 %v809
    %v2744 = vpop.f32.mrf.mxu0
    %v2745 = vadd.f32 %v2576, %v2744
    %v2746 = vpop.f32.mrf.mxu0
    %v2747 = vadd.f32 %v2578, %v2746
    %2748 = vmatmul.bf16.gmra.mxu0 %v814
    %v2749 = vpop.f32.mrf.mxu0
    %v2750 = vadd.f32 %v2581, %v2749
    %v2751 = vpop.f32.mrf.mxu0
    %v2752 = vadd.f32 %v2583, %v2751
    %2753 = vmatmul.bf16.gmra.mxu0 %v819
    %v2754 = vpop.f32.mrf.mxu0
    %v2755 = vadd.f32 %v2586, %v2754
    %v2756 = vpop.f32.mrf.mxu0
    %v2757 = vadd.f32 %v2588, %v2756
    %2758 = vmatmul.bf16.gmra.mxu0 %v824
    %v2759 = vpop.f32.mrf.mxu0
    %v2760 = vadd.f32 %v2591, %v2759
    %v2761 = vpop.f32.mrf.mxu0
    %v2762 = vadd.f32 %v2593, %v2761
    %2763 = vmatmul.bf16.gmra.mxu0 %v829
    %v2764 = vpop.f32.mrf.mxu0
    %v2765 = vadd.f32 %v2596, %v2764
    %v2766 = vpop.f32.mrf.mxu0
    %v2767 = vadd.f32 %v2598, %v2766
    %2768 = vmatmul.bf16.gmra.mxu0 %v834
    %v2769 = vpop.f32.mrf.mxu0
    %v2770 = vadd.f32 %v2601, %v2769
    %v2771 = vpop.f32.mrf.mxu0
    %v2772 = vadd.f32 %v2603, %v2771
    %2773 = vmatmul.bf16.gmra.mxu0 %v839
    %v2774 = vpop.f32.mrf.mxu0
    %v2775 = vadd.f32 %v2606, %v2774
    %v2776 = vpop.f32.mrf.mxu0
    %v2777 = vadd.f32 %v2608, %v2776
    %2778 = vmatmul.bf16.gmra.mxu0 %v844
    %v2779 = vpop.f32.mrf.mxu0
    %v2780 = vadd.f32 %v2611, %v2779
    %v2781 = vpop.f32.mrf.mxu0
    %v2782 = vadd.f32 %v2613, %v2781
    %2783 = vmatmul.bf16.gmra.mxu0 %v849
    %v2784 = vpop.f32.mrf.mxu0
    %v2785 = vadd.f32 %v2616, %v2784
    %v2786 = vpop.f32.mrf.mxu0
    %v2787 = vadd.f32 %v2618, %v2786
    %2788 = vmatmul.bf16.gmra.mxu0 %v854
    %v2789 = vpop.f32.mrf.mxu0
    %v2790 = vadd.f32 %v2621, %v2789
    %v2791 = vpop.f32.mrf.mxu0
    %v2792 = vadd.f32 %v2623, %v2791
    %2793 = vmatmul.bf16.gmra.mxu0 %v859
    %v2794 = vpop.f32.mrf.mxu0
    %v2795 = vadd.f32 %v2626, %v2794
    %v2796 = vpop.f32.mrf.mxu0
    %v2797 = vadd.f32 %v2628, %v2796
    %2798 = vmatmul.bf16.gmra.mxu0 %v864
    %v2799 = vpop.f32.mrf.mxu0
    %v2800 = vadd.f32 %v2631, %v2799
    %v2801 = vpop.f32.mrf.mxu0
    %v2802 = vadd.f32 %v2633, %v2801
    %2803 = vmatmul.bf16.gmra.mxu0 %v869
    %v2804 = vpop.f32.mrf.mxu0
    %v2805 = vadd.f32 %v2636, %v2804
    %v2806 = vpop.f32.mrf.mxu0
    %v2807 = vadd.f32 %v2638, %v2806
    %2808 = vmatmul.bf16.gmra.mxu0 %v874
    %v2809 = vpop.f32.mrf.mxu0
    %v2810 = vadd.f32 %v2641, %v2809
    %v2811 = vpop.f32.mrf.mxu0
    %v2812 = vadd.f32 %v2643, %v2811
    %2813 = vmatmul.bf16.gmra.mxu0 %v879
    %v2814 = vpop.f32.mrf.mxu0
    %v2815 = vadd.f32 %v2646, %v2814
    %v2816 = vpop.f32.mrf.mxu0
    %v2817 = vadd.f32 %v2648, %v2816
    %2818 = vmatmul.bf16.gmra.mxu0 %v884
    %v2819 = vpop.f32.mrf.mxu0
    %v2820 = vadd.f32 %v2651, %v2819
    %v2821 = vpop.f32.mrf.mxu0
    %v2822 = vadd.f32 %v2653, %v2821
    %2823 = vmatmul.bf16.gmra.mxu0 %v889
    %v2824 = vpop.f32.mrf.mxu0
    %v2825 = vadd.f32 %v2656, %v2824
    %v2826 = vpop.f32.mrf.mxu0
    %v2827 = vadd.f32 %v2658, %v2826
    %2828 = vmatmul.bf16.gmra.mxu0 %v894
    %v2829 = vpop.f32.mrf.mxu0
    %v2830 = vadd.f32 %v2661, %v2829
    %v2831 = vpop.f32.mrf.mxu0
    %v2832 = vadd.f32 %v2663, %v2831
    %2833 = vmatmul.bf16.gmra.mxu0 %v899
    %v2834 = vpop.f32.mrf.mxu0
    %v2835 = vadd.f32 %v2666, %v2834
    %v2836 = vpop.f32.mrf.mxu0
    %v2837 = vadd.f32 %v2668, %v2836
    %2838 = vmatmul.bf16.gmra.mxu0 %v904
    %v2839 = vpop.f32.mrf.mxu0
    %v2840 = vadd.f32 %v2671, %v2839
    %v2841 = vpop.f32.mrf.mxu0
    %v2842 = vadd.f32 %v2673, %v2841
    %2843 = vmatmul.bf16.gmra.mxu0 %v909
    %v2844 = vpop.f32.mrf.mxu0
    %v2845 = vadd.f32 %v2676, %v2844
    %v2846 = vpop.f32.mrf.mxu0
    %v2847 = vadd.f32 %v2678, %v2846
    %2848 = vmatmul.bf16.gmra.mxu0 %v914
    %v2849 = vpop.f32.mrf.mxu0
    %v2850 = vadd.f32 %v2681, %v2849
    %v2851 = vpop.f32.mrf.mxu0
    %v2852 = vadd.f32 %v2683, %v2851
    %2853 = vmatmul.bf16.gmra.mxu0 %v919
    %v2854 = vpop.f32.mrf.mxu0
    %v2855 = vadd.f32 %v2686, %v2854
    %v2856 = vpop.f32.mrf.mxu0
    %v2857 = vadd.f32 %v2688, %v2856
    %2858 = vmatmul.bf16.gmra.mxu0 %v924
    %v2859 = vpop.f32.mrf.mxu0
    %v2860 = vadd.f32 %v2691, %v2859
    %v2861 = vpop.f32.mrf.mxu0
    %v2862 = vadd.f32 %v2693, %v2861
    %2863 = vmatmul.bf16.gmra.mxu0 %v929
    %v2864 = vpop.f32.mrf.mxu0
    %v2865 = vadd.f32 %v2696, %v2864
    %v2866 = vpop.f32.mrf.mxu0
    %v2867 = vadd.f32 %v2698, %v2866
    %2868 = vmatmul.bf16.gmra.mxu0 %v934
    %v2869 = vpop.f32.mrf.mxu0
    %v2870 = vadd.f32 %v2701, %v2869
    %v2871 = vpop.f32.mrf.mxu0
    %v2872 = vadd.f32 %v2703, %v2871
    %2873 = vmatmul.bf16.gmra.mxu0 %v939
    %v2874 = vpop.f32.mrf.mxu0
    %v2875 = vadd.f32 %v2706, %v2874
    %v2876 = vpop.f32.mrf.mxu0
    %v2877 = vadd.f32 %v2708, %v2876
    %2878 = vmatmul.bf16.gmra.mxu0 %v944
    %v2879 = vpop.f32.mrf.mxu0
    %v2880 = vadd.f32 %v2711, %v2879
    %v2881 = vpop.f32.mrf.mxu0
    %v2882 = vadd.f32 %v2713, %v2881
    %2883 = vmatmul.bf16.gmra.mxu0 %v949
    %v2884 = vpop.f32.mrf.mxu0
    %v2885 = vadd.f32 %v2716, %v2884
    %v2886 = vpop.f32.mrf.mxu0
    %v2887 = vadd.f32 %v2718, %v2886
    %2888 = vmatmul.bf16.gmra.mxu0 %v954
    %v2889 = vpop.f32.mrf.mxu0
    %v2890 = vadd.f32 %v2721, %v2889
    %v2891 = vpop.f32.mrf.mxu0
    %v2892 = vadd.f32 %v2723, %v2891
    %2893 = vmatmul.bf16.gmra.mxu0 %v959
    %v2894 = vpop.f32.mrf.mxu0
    %v2895 = vadd.f32 %v2726, %v2894
    %v2896 = vpop.f32.mrf.mxu0
    %v2897 = vadd.f32 %v2728, %v2896
    %2898 = vdwg.mxu0
    %2899 = vmatpush.bf16.msra.mxu0 %v1369
    %2900 = vmatpush.bf16.msra.mxu0 %v1367
    %2901 = vmatpush.bf16.msra.mxu0 %v1365
    %2902 = vmatpush.bf16.msra.mxu0 %v1363
    %2903 = vmatpush.bf16.msra.mxu0 %v1361
    %2904 = vmatpush.bf16.msra.mxu0 %v1359
    %2905 = vmatpush.bf16.msra.mxu0 %v1357
    %2906 = vmatpush.bf16.msra.mxu0 %v1355
    %2907 = vmatmul.bf16.gmra.mxu0 %v805
    %v2908 = vpop.f32.mrf.mxu0
    %v2909 = vadd.f32 %v2740, %v2908
    %v2910 = vpop.f32.mrf.mxu0
    %v2911 = vadd.f32 %v2742, %v2910
    %2912 = vmatmul.bf16.gmra.mxu0 %v810
    %v2913 = vpop.f32.mrf.mxu0
    %v2914 = vadd.f32 %v2745, %v2913
    %v2915 = vpop.f32.mrf.mxu0
    %v2916 = vadd.f32 %v2747, %v2915
    %2917 = vmatmul.bf16.gmra.mxu0 %v815
    %v2918 = vpop.f32.mrf.mxu0
    %v2919 = vadd.f32 %v2750, %v2918
    %v2920 = vpop.f32.mrf.mxu0
    %v2921 = vadd.f32 %v2752, %v2920
    %2922 = vmatmul.bf16.gmra.mxu0 %v820
    %v2923 = vpop.f32.mrf.mxu0
    %v2924 = vadd.f32 %v2755, %v2923
    %v2925 = vpop.f32.mrf.mxu0
    %v2926 = vadd.f32 %v2757, %v2925
    %2927 = vmatmul.bf16.gmra.mxu0 %v825
    %v2928 = vpop.f32.mrf.mxu0
    %v2929 = vadd.f32 %v2760, %v2928
    %v2930 = vpop.f32.mrf.mxu0
    %v2931 = vadd.f32 %v2762, %v2930
    %2932 = vmatmul.bf16.gmra.mxu0 %v830
    %v2933 = vpop.f32.mrf.mxu0
    %v2934 = vadd.f32 %v2765, %v2933
    %v2935 = vpop.f32.mrf.mxu0
    %v2936 = vadd.f32 %v2767, %v2935
    %2937 = vmatmul.bf16.gmra.mxu0 %v835
    %v2938 = vpop.f32.mrf.mxu0
    %v2939 = vadd.f32 %v2770, %v2938
    %v2940 = vpop.f32.mrf.mxu0
    %v2941 = vadd.f32 %v2772, %v2940
    %2942 = vmatmul.bf16.gmra.mxu0 %v840
    %v2943 = vpop.f32.mrf.mxu0
    %v2944 = vadd.f32 %v2775, %v2943
    %v2945 = vpop.f32.mrf.mxu0
    %v2946 = vadd.f32 %v2777, %v2945
    %2947 = vmatmul.bf16.gmra.mxu0 %v845
    %v2948 = vpop.f32.mrf.mxu0
    %v2949 = vadd.f32 %v2780, %v2948
    %v2950 = vpop.f32.mrf.mxu0
    %v2951 = vadd.f32 %v2782, %v2950
    %2952 = vmatmul.bf16.gmra.mxu0 %v850
    %v2953 = vpop.f32.mrf.mxu0
    %v2954 = vadd.f32 %v2785, %v2953
    %v2955 = vpop.f32.mrf.mxu0
    %v2956 = vadd.f32 %v2787, %v2955
    %2957 = vmatmul.bf16.gmra.mxu0 %v855
    %v2958 = vpop.f32.mrf.mxu0
    %v2959 = vadd.f32 %v2790, %v2958
    %v2960 = vpop.f32.mrf.mxu0
    %v2961 = vadd.f32 %v2792, %v2960
    %2962 = vmatmul.bf16.gmra.mxu0 %v860
    %v2963 = vpop.f32.mrf.mxu0
    %v2964 = vadd.f32 %v2795, %v2963
    %v2965 = vpop.f32.mrf.mxu0
    %v2966 = vadd.f32 %v2797, %v2965
    %2967 = vmatmul.bf16.gmra.mxu0 %v865
    %v2968 = vpop.f32.mrf.mxu0
    %v2969 = vadd.f32 %v2800, %v2968
    %v2970 = vpop.f32.mrf.mxu0
    %v2971 = vadd.f32 %v2802, %v2970
    %2972 = vmatmul.bf16.gmra.mxu0 %v870
    %v2973 = vpop.f32.mrf.mxu0
    %v2974 = vadd.f32 %v2805, %v2973
    %v2975 = vpop.f32.mrf.mxu0
    %v2976 = vadd.f32 %v2807, %v2975
    %2977 = vmatmul.bf16.gmra.mxu0 %v875
    %v2978 = vpop.f32.mrf.mxu0
    %v2979 = vadd.f32 %v2810, %v2978
    %v2980 = vpop.f32.mrf.mxu0
    %v2981 = vadd.f32 %v2812, %v2980
    %2982 = vmatmul.bf16.gmra.mxu0 %v880
    %v2983 = vpop.f32.mrf.mxu0
    %v2984 = vadd.f32 %v2815, %v2983
    %v2985 = vpop.f32.mrf.mxu0
    %v2986 = vadd.f32 %v2817, %v2985
    %2987 = vmatmul.bf16.gmra.mxu0 %v885
    %v2988 = vpop.f32.mrf.mxu0
    %v2989 = vadd.f32 %v2820, %v2988
    %v2990 = vpop.f32.mrf.mxu0
    %v2991 = vadd.f32 %v2822, %v2990
    %2992 = vmatmul.bf16.gmra.mxu0 %v890
    %v2993 = vpop.f32.mrf.mxu0
    %v2994 = vadd.f32 %v2825, %v2993
    %v2995 = vpop.f32.mrf.mxu0
    %v2996 = vadd.f32 %v2827, %v2995
    %2997 = vmatmul.bf16.gmra.mxu0 %v895
    %v2998 = vpop.f32.mrf.mxu0
    %v2999 = vadd.f32 %v2830, %v2998
    %v3000 = vpop.f32.mrf.mxu0
    %v3001 = vadd.f32 %v2832, %v3000
    %3002 = vmatmul.bf16.gmra.mxu0 %v900
    %v3003 = vpop.f32.mrf.mxu0
    %v3004 = vadd.f32 %v2835, %v3003
    %v3005 = vpop.f32.mrf.mxu0
    %v3006 = vadd.f32 %v2837, %v3005
    %3007 = vmatmul.bf16.gmra.mxu0 %v905
    %v3008 = vpop.f32.mrf.mxu0
    %v3009 = vadd.f32 %v2840, %v3008
    %v3010 = vpop.f32.mrf.mxu0
    %v3011 = vadd.f32 %v2842, %v3010
    %3012 = vmatmul.bf16.gmra.mxu0 %v910
    %v3013 = vpop.f32.mrf.mxu0
    %v3014 = vadd.f32 %v2845, %v3013
    %v3015 = vpop.f32.mrf.mxu0
    %v3016 = vadd.f32 %v2847, %v3015
    %3017 = vmatmul.bf16.gmra.mxu0 %v915
    %v3018 = vpop.f32.mrf.mxu0
    %v3019 = vadd.f32 %v2850, %v3018
    %v3020 = vpop.f32.mrf.mxu0
    %v3021 = vadd.f32 %v2852, %v3020
    %3022 = vmatmul.bf16.gmra.mxu0 %v920
    %v3023 = vpop.f32.mrf.mxu0
    %v3024 = vadd.f32 %v2855, %v3023
    %v3025 = vpop.f32.mrf.mxu0
    %v3026 = vadd.f32 %v2857, %v3025
    %3027 = vmatmul.bf16.gmra.mxu0 %v925
    %v3028 = vpop.f32.mrf.mxu0
    %v3029 = vadd.f32 %v2860, %v3028
    %v3030 = vpop.f32.mrf.mxu0
    %v3031 = vadd.f32 %v2862, %v3030
    %3032 = vmatmul.bf16.gmra.mxu0 %v930
    %v3033 = vpop.f32.mrf.mxu0
    %v3034 = vadd.f32 %v2865, %v3033
    %v3035 = vpop.f32.mrf.mxu0
    %v3036 = vadd.f32 %v2867, %v3035
    %3037 = vmatmul.bf16.gmra.mxu0 %v935
    %v3038 = vpop.f32.mrf.mxu0
    %v3039 = vadd.f32 %v2870, %v3038
    %v3040 = vpop.f32.mrf.mxu0
    %v3041 = vadd.f32 %v2872, %v3040
    %3042 = vmatmul.bf16.gmra.mxu0 %v940
    %v3043 = vpop.f32.mrf.mxu0
    %v3044 = vadd.f32 %v2875, %v3043
    %v3045 = vpop.f32.mrf.mxu0
    %v3046 = vadd.f32 %v2877, %v3045
    %3047 = vmatmul.bf16.gmra.mxu0 %v945
    %v3048 = vpop.f32.mrf.mxu0
    %v3049 = vadd.f32 %v2880, %v3048
    %v3050 = vpop.f32.mrf.mxu0
    %v3051 = vadd.f32 %v2882, %v3050
    %3052 = vmatmul.bf16.gmra.mxu0 %v950
    %v3053 = vpop.f32.mrf.mxu0
    %v3054 = vadd.f32 %v2885, %v3053
    %v3055 = vpop.f32.mrf.mxu0
    %v3056 = vadd.f32 %v2887, %v3055
    %3057 = vmatmul.bf16.gmra.mxu0 %v955
    %v3058 = vpop.f32.mrf.mxu0
    %v3059 = vadd.f32 %v2890, %v3058
    %v3060 = vpop.f32.mrf.mxu0
    %v3061 = vadd.f32 %v2892, %v3060
    %3062 = vmatmul.bf16.gmra.mxu0 %v960
    %v3063 = vpop.f32.mrf.mxu0
    %v3064 = vadd.f32 %v2895, %v3063
    %v3065 = vpop.f32.mrf.mxu0
    %v3066 = vadd.f32 %v2897, %v3065
    %3067 = vdwg.mxu0
    %3068 = vmatpush.bf16.msra.mxu0 0
    %3069 = vmatpush.bf16.msra.mxu0 0
    %3070 = vmatpush.bf16.msra.mxu0 0
    %3071 = vmatpush.bf16.msra.mxu0 0
    %3072 = vmatpush.bf16.msra.mxu0 %v1377
    %3073 = vmatpush.bf16.msra.mxu0 %v1375
    %3074 = vmatpush.bf16.msra.mxu0 %v1373
    %3075 = vmatpush.bf16.msra.mxu0 %v1371
    %3076 = vmatmul.bf16.gmra.mxu0 %v1452
    %v3077 = vpop.f32.mrf.mxu0
    %v3078 = vadd.f32 %v2909, %v3077
    %v3079 = vpop.f32.mrf.mxu0
    %v3080 = vadd.f32 %v2911, %v3079
    %3081 = vmatmul.bf16.gmra.mxu0 %v1455
    %v3082 = vpop.f32.mrf.mxu0
    %v3083 = vadd.f32 %v2914, %v3082
    %v3084 = vpop.f32.mrf.mxu0
    %v3085 = vadd.f32 %v2916, %v3084
    %3086 = vmatmul.bf16.gmra.mxu0 %v1458
    %v3087 = vpop.f32.mrf.mxu0
    %v3088 = vadd.f32 %v2919, %v3087
    %v3089 = vpop.f32.mrf.mxu0
    %v3090 = vadd.f32 %v2921, %v3089
    %3091 = vmatmul.bf16.gmra.mxu0 %v1461
    %v3092 = vpop.f32.mrf.mxu0
    %v3093 = vadd.f32 %v2924, %v3092
    %v3094 = vpop.f32.mrf.mxu0
    %v3095 = vadd.f32 %v2926, %v3094
    %3096 = vmatmul.bf16.gmra.mxu0 %v1464
    %v3097 = vpop.f32.mrf.mxu0
    %v3098 = vadd.f32 %v2929, %v3097
    %v3099 = vpop.f32.mrf.mxu0
    %v3100 = vadd.f32 %v2931, %v3099
    %3101 = vmatmul.bf16.gmra.mxu0 %v1467
    %v3102 = vpop.f32.mrf.mxu0
    %v3103 = vadd.f32 %v2934, %v3102
    %v3104 = vpop.f32.mrf.mxu0
    %v3105 = vadd.f32 %v2936, %v3104
    %3106 = vmatmul.bf16.gmra.mxu0 %v1470
    %v3107 = vpop.f32.mrf.mxu0
    %v3108 = vadd.f32 %v2939, %v3107
    %v3109 = vpop.f32.mrf.mxu0
    %v3110 = vadd.f32 %v2941, %v3109
    %3111 = vmatmul.bf16.gmra.mxu0 %v1473
    %v3112 = vpop.f32.mrf.mxu0
    %v3113 = vadd.f32 %v2944, %v3112
    %v3114 = vpop.f32.mrf.mxu0
    %v3115 = vadd.f32 %v2946, %v3114
    %3116 = vmatmul.bf16.gmra.mxu0 %v1476
    %v3117 = vpop.f32.mrf.mxu0
    %v3118 = vadd.f32 %v2949, %v3117
    %v3119 = vpop.f32.mrf.mxu0
    %v3120 = vadd.f32 %v2951, %v3119
    %3121 = vmatmul.bf16.gmra.mxu0 %v1479
    %v3122 = vpop.f32.mrf.mxu0
    %v3123 = vadd.f32 %v2954, %v3122
    %v3124 = vpop.f32.mrf.mxu0
    %v3125 = vadd.f32 %v2956, %v3124
    %3126 = vmatmul.bf16.gmra.mxu0 %v1482
    %v3127 = vpop.f32.mrf.mxu0
    %v3128 = vadd.f32 %v2959, %v3127
    %v3129 = vpop.f32.mrf.mxu0
    %v3130 = vadd.f32 %v2961, %v3129
    %3131 = vmatmul.bf16.gmra.mxu0 %v1485
    %v3132 = vpop.f32.mrf.mxu0
    %v3133 = vadd.f32 %v2964, %v3132
    %v3134 = vpop.f32.mrf.mxu0
    %v3135 = vadd.f32 %v2966, %v3134
    %3136 = vmatmul.bf16.gmra.mxu0 %v1488
    %v3137 = vpop.f32.mrf.mxu0
    %v3138 = vadd.f32 %v2969, %v3137
    %v3139 = vpop.f32.mrf.mxu0
    %v3140 = vadd.f32 %v2971, %v3139
    %3141 = vmatmul.bf16.gmra.mxu0 %v1491
    %v3142 = vpop.f32.mrf.mxu0
    %v3143 = vadd.f32 %v2974, %v3142
    %v3144 = vpop.f32.mrf.mxu0
    %v3145 = vadd.f32 %v2976, %v3144
    %3146 = vmatmul.bf16.gmra.mxu0 %v1494
    %v3147 = vpop.f32.mrf.mxu0
    %v3148 = vadd.f32 %v2979, %v3147
    %v3149 = vpop.f32.mrf.mxu0
    %v3150 = vadd.f32 %v2981, %v3149
    %3151 = vmatmul.bf16.gmra.mxu0 %v1497
    %v3152 = vpop.f32.mrf.mxu0
    %v3153 = vadd.f32 %v2984, %v3152
    %v3154 = vpop.f32.mrf.mxu0
    %v3155 = vadd.f32 %v2986, %v3154
    %3156 = vmatmul.bf16.gmra.mxu0 %v1500
    %v3157 = vpop.f32.mrf.mxu0
    %v3158 = vadd.f32 %v2989, %v3157
    %v3159 = vpop.f32.mrf.mxu0
    %v3160 = vadd.f32 %v2991, %v3159
    %3161 = vmatmul.bf16.gmra.mxu0 %v1503
    %v3162 = vpop.f32.mrf.mxu0
    %v3163 = vadd.f32 %v2994, %v3162
    %v3164 = vpop.f32.mrf.mxu0
    %v3165 = vadd.f32 %v2996, %v3164
    %3166 = vmatmul.bf16.gmra.mxu0 %v1506
    %v3167 = vpop.f32.mrf.mxu0
    %v3168 = vadd.f32 %v2999, %v3167
    %v3169 = vpop.f32.mrf.mxu0
    %v3170 = vadd.f32 %v3001, %v3169
    %3171 = vmatmul.bf16.gmra.mxu0 %v1509
    %v3172 = vpop.f32.mrf.mxu0
    %v3173 = vadd.f32 %v3004, %v3172
    %v3174 = vpop.f32.mrf.mxu0
    %v3175 = vadd.f32 %v3006, %v3174
    %3176 = vmatmul.bf16.gmra.mxu0 %v1512
    %v3177 = vpop.f32.mrf.mxu0
    %v3178 = vadd.f32 %v3009, %v3177
    %v3179 = vpop.f32.mrf.mxu0
    %v3180 = vadd.f32 %v3011, %v3179
    %3181 = vmatmul.bf16.gmra.mxu0 %v1515
    %v3182 = vpop.f32.mrf.mxu0
    %v3183 = vadd.f32 %v3014, %v3182
    %v3184 = vpop.f32.mrf.mxu0
    %v3185 = vadd.f32 %v3016, %v3184
    %3186 = vmatmul.bf16.gmra.mxu0 %v1518
    %v3187 = vpop.f32.mrf.mxu0
    %v3188 = vadd.f32 %v3019, %v3187
    %v3189 = vpop.f32.mrf.mxu0
    %v3190 = vadd.f32 %v3021, %v3189
    %3191 = vmatmul.bf16.gmra.mxu0 %v1521
    %v3192 = vpop.f32.mrf.mxu0
    %v3193 = vadd.f32 %v3024, %v3192
    %v3194 = vpop.f32.mrf.mxu0
    %v3195 = vadd.f32 %v3026, %v3194
    %3196 = vmatmul.bf16.gmra.mxu0 %v1524
    %v3197 = vpop.f32.mrf.mxu0
    %v3198 = vadd.f32 %v3029, %v3197
    %v3199 = vpop.f32.mrf.mxu0
    %v3200 = vadd.f32 %v3031, %v3199
    %3201 = vmatmul.bf16.gmra.mxu0 %v1527
    %v3202 = vpop.f32.mrf.mxu0
    %v3203 = vadd.f32 %v3034, %v3202
    %v3204 = vpop.f32.mrf.mxu0
    %v3205 = vadd.f32 %v3036, %v3204
    %3206 = vmatmul.bf16.gmra.mxu0 %v1530
    %v3207 = vpop.f32.mrf.mxu0
    %v3208 = vadd.f32 %v3039, %v3207
    %v3209 = vpop.f32.mrf.mxu0
    %v3210 = vadd.f32 %v3041, %v3209
    %3211 = vmatmul.bf16.gmra.mxu0 %v1533
    %v3212 = vpop.f32.mrf.mxu0
    %v3213 = vadd.f32 %v3044, %v3212
    %v3214 = vpop.f32.mrf.mxu0
    %v3215 = vadd.f32 %v3046, %v3214
    %3216 = vmatmul.bf16.gmra.mxu0 %v1536
    %v3217 = vpop.f32.mrf.mxu0
    %v3218 = vadd.f32 %v3049, %v3217
    %v3219 = vpop.f32.mrf.mxu0
    %v3220 = vadd.f32 %v3051, %v3219
    %3221 = vmatmul.bf16.gmra.mxu0 %v1539
    %v3222 = vpop.f32.mrf.mxu0
    %v3223 = vadd.f32 %v3054, %v3222
    %v3224 = vpop.f32.mrf.mxu0
    %v3225 = vadd.f32 %v3056, %v3224
    %3226 = vmatmul.bf16.gmra.mxu0 %v1542
    %v3227 = vpop.f32.mrf.mxu0
    %v3228 = vadd.f32 %v3059, %v3227
    %v3229 = vpop.f32.mrf.mxu0
    %v3230 = vadd.f32 %v3061, %v3229
    %3231 = vmatmul.bf16.gmra.mxu0 %v1545
    %v3232 = vpop.f32.mrf.mxu0
    %v3233 = vadd.f32 %v3064, %v3232
    %v3234 = vpop.f32.mrf.mxu0
    %v3235 = vadd.f32 %v3066, %v3234
    %3236 = vdwg.mxu0
    %v3237 = vmax.f32 %v2233, 0.0
    %v3238 = vmax.f32 %v3078, 0.0
    %v3239 = vmax.f32 %v2235, 0.0
    %v3240 = vmax.f32 %v3080, 0.0
    %v3241 = vmax.f32 %v2238, 0.0
    %v3242 = vmax.f32 %v3083, 0.0
    %v3243 = vmax.f32 %v2240, 0.0
    %v3244 = vmax.f32 %v3085, 0.0
    %v3245 = vmax.f32 %v2243, 0.0
    %v3246 = vmax.f32 %v3088, 0.0
    %v3247 = vmax.f32 %v2245, 0.0
    %v3248 = vmax.f32 %v3090, 0.0
    %v3249 = vmax.f32 %v2248, 0.0
    %v3250 = vmax.f32 %v3093, 0.0
    %v3251 = vmax.f32 %v2250, 0.0
    %v3252 = vmax.f32 %v3095, 0.0
    %v3253 = vmax.f32 %v2253, 0.0
    %v3254 = vmax.f32 %v3098, 0.0
    %v3255 = vmax.f32 %v2255, 0.0
    %v3256 = vmax.f32 %v3100, 0.0
    %v3257 = vmax.f32 %v2258, 0.0
    %v3258 = vmax.f32 %v3103, 0.0
    %v3259 = vmax.f32 %v2260, 0.0
    %v3260 = vmax.f32 %v3105, 0.0
    %v3261 = vmax.f32 %v2263, 0.0
    %v3262 = vmax.f32 %v3108, 0.0
    %v3263 = vmax.f32 %v2265, 0.0
    %v3264 = vmax.f32 %v3110, 0.0
    %v3265 = vmax.f32 %v2268, 0.0
    %v3266 = vmax.f32 %v3113, 0.0
    %v3267 = vmax.f32 %v2270, 0.0
    %v3268 = vmax.f32 %v3115, 0.0
    %v3269 = vmax.f32 %v2273, 0.0
    %v3270 = vmax.f32 %v3118, 0.0
    %v3271 = vmax.f32 %v2275, 0.0
    %v3272 = vmax.f32 %v3120, 0.0
    %v3273 = vmax.f32 %v2278, 0.0
    %v3274 = vmax.f32 %v3123, 0.0
    %v3275 = vmax.f32 %v2280, 0.0
    %v3276 = vmax.f32 %v3125, 0.0
    %v3277 = vmax.f32 %v2283, 0.0
    %v3278 = vmax.f32 %v3128, 0.0
    %v3279 = vmax.f32 %v2285, 0.0
    %v3280 = vmax.f32 %v3130, 0.0
    %v3281 = vmax.f32 %v2288, 0.0
    %v3282 = vmax.f32 %v3133, 0.0
    %v3283 = vmax.f32 %v2290, 0.0
    %v3284 = vmax.f32 %v3135, 0.0
    %v3285 = vmax.f32 %v2293, 0.0
    %v3286 = vmax.f32 %v3138, 0.0
    %v3287 = vmax.f32 %v2295, 0.0
    %v3288 = vmax.f32 %v3140, 0.0
    %v3289 = vmax.f32 %v2298, 0.0
    %v3290 = vmax.f32 %v3143, 0.0
    %v3291 = vmax.f32 %v2300, 0.0
    %v3292 = vmax.f32 %v3145, 0.0
    %v3293 = vmax.f32 %v2303, 0.0
    %v3294 = vmax.f32 %v3148, 0.0
    %v3295 = vmax.f32 %v2305, 0.0
    %v3296 = vmax.f32 %v3150, 0.0
    %v3297 = vmax.f32 %v2308, 0.0
    %v3298 = vmax.f32 %v3153, 0.0
    %v3299 = vmax.f32 %v2310, 0.0
    %v3300 = vmax.f32 %v3155, 0.0
    %v3301 = vmax.f32 %v2313, 0.0
    %v3302 = vmax.f32 %v3158, 0.0
    %v3303 = vmax.f32 %v2315, 0.0
    %v3304 = vmax.f32 %v3160, 0.0
    %v3305 = vmax.f32 %v2318, 0.0
    %v3306 = vmax.f32 %v3163, 0.0
    %v3307 = vmax.f32 %v2320, 0.0
    %v3308 = vmax.f32 %v3165, 0.0
    %v3309 = vmax.f32 %v2323, 0.0
    %v3310 = vmax.f32 %v3168, 0.0
    %v3311 = vmax.f32 %v2325, 0.0
    %v3312 = vmax.f32 %v3170, 0.0
    %v3313 = vmax.f32 %v2328, 0.0
    %v3314 = vmax.f32 %v3173, 0.0
    %v3315 = vmax.f32 %v2330, 0.0
    %v3316 = vmax.f32 %v3175, 0.0
    %v3317 = vmax.f32 %v2333, 0.0
    %v3318 = vmax.f32 %v3178, 0.0
    %v3319 = vmax.f32 %v2335, 0.0
    %v3320 = vmax.f32 %v3180, 0.0
    %v3321 = vmax.f32 %v2338, 0.0
    %v3322 = vmax.f32 %v3183, 0.0
    %v3323 = vmax.f32 %v2340, 0.0
    %v3324 = vmax.f32 %v3185, 0.0
    %v3325 = vmax.f32 %v2343, 0.0
    %v3326 = vmax.f32 %v3188, 0.0
    %v3327 = vmax.f32 %v2345, 0.0
    %v3328 = vmax.f32 %v3190, 0.0
    %v3329 = vmax.f32 %v2348, 0.0
    %v3330 = vmax.f32 %v3193, 0.0
    %v3331 = vmax.f32 %v2350, 0.0
    %v3332 = vmax.f32 %v3195, 0.0
    %v3333 = vmax.f32 %v2353, 0.0
    %v3334 = vmax.f32 %v3198, 0.0
    %v3335 = vmax.f32 %v2355, 0.0
    %v3336 = vmax.f32 %v3200, 0.0
    %v3337 = vmax.f32 %v2358, 0.0
    %v3338 = vmax.f32 %v3203, 0.0
    %v3339 = vmax.f32 %v2360, 0.0
    %v3340 = vmax.f32 %v3205, 0.0
    %v3341 = vmax.f32 %v2363, 0.0
    %v3342 = vmax.f32 %v3208, 0.0
    %v3343 = vmax.f32 %v2365, 0.0
    %v3344 = vmax.f32 %v3210, 0.0
    %v3345 = vmax.f32 %v2368, 0.0
    %v3346 = vmax.f32 %v3213, 0.0
    %v3347 = vmax.f32 %v2370, 0.0
    %v3348 = vmax.f32 %v3215, 0.0
    %v3349 = vmax.f32 %v2373, 0.0
    %v3350 = vmax.f32 %v3218, 0.0
    %v3351 = vmax.f32 %v2375, 0.0
    %v3352 = vmax.f32 %v3220, 0.0
    %v3353 = vmax.f32 %v2378, 0.0
    %v3354 = vmax.f32 %v3223, 0.0
    %v3355 = vmax.f32 %v2380, 0.0
    %v3356 = vmax.f32 %v3225, 0.0
    %v3357 = vmax.f32 %v2383, 0.0
    %v3358 = vmax.f32 %v3228, 0.0
    %v3359 = vmax.f32 %v2385, 0.0
    %v3360 = vmax.f32 %v3230, 0.0
    %v3361 = vmax.f32 %v2388, 0.0
    %v3362 = vmax.f32 %v3233, 0.0
    %v3363 = vmax.f32 %v2390, 0.0
    %v3364 = vmax.f32 %v3235, 0.0
    %v3365 = vpack.c.bf16 %v3238, %v3237
    %v3366 = vpack.c.bf16 %v3240, %v3239
    %v3367 = vpack.c.bf16 %v3242, %v3241
    %v3368 = vpack.c.bf16 %v3244, %v3243
    %v3369 = vpack.c.bf16 %v3246, %v3245
    %v3370 = vpack.c.bf16 %v3248, %v3247
    %v3371 = vpack.c.bf16 %v3250, %v3249
    %v3372 = vpack.c.bf16 %v3252, %v3251
    %v3373 = vpack.c.bf16 %v3254, %v3253
    %v3374 = vpack.c.bf16 %v3256, %v3255
    %v3375 = vpack.c.bf16 %v3258, %v3257
    %v3376 = vpack.c.bf16 %v3260, %v3259
    %v3377 = vpack.c.bf16 %v3262, %v3261
    %v3378 = vpack.c.bf16 %v3264, %v3263
    %v3379 = vpack.c.bf16 %v3266, %v3265
    %v3380 = vpack.c.bf16 %v3268, %v3267
    %v3381 = vpack.c.bf16 %v3270, %v3269
    %v3382 = vpack.c.bf16 %v3272, %v3271
    %v3383 = vpack.c.bf16 %v3274, %v3273
    %v3384 = vpack.c.bf16 %v3276, %v3275
    %v3385 = vpack.c.bf16 %v3278, %v3277
    %v3386 = vpack.c.bf16 %v3280, %v3279
    %v3387 = vpack.c.bf16 %v3282, %v3281
    %v3388 = vpack.c.bf16 %v3284, %v3283
    %v3389 = vpack.c.bf16 %v3286, %v3285
    %v3390 = vpack.c.bf16 %v3288, %v3287
    %v3391 = vpack.c.bf16 %v3290, %v3289
    %v3392 = vpack.c.bf16 %v3292, %v3291
    %v3393 = vpack.c.bf16 %v3294, %v3293
    %v3394 = vpack.c.bf16 %v3296, %v3295
    %v3395 = vpack.c.bf16 %v3298, %v3297
    %v3396 = vpack.c.bf16 %v3300, %v3299
    %v3397 = vpack.c.bf16 %v3302, %v3301
    %v3398 = vpack.c.bf16 %v3304, %v3303
    %v3399 = vpack.c.bf16 %v3306, %v3305
    %v3400 = vpack.c.bf16 %v3308, %v3307
    %v3401 = vpack.c.bf16 %v3310, %v3309
    %v3402 = vpack.c.bf16 %v3312, %v3311
    %v3403 = vpack.c.bf16 %v3314, %v3313
    %v3404 = vpack.c.bf16 %v3316, %v3315
    %v3405 = vpack.c.bf16 %v3318, %v3317
    %v3406 = vpack.c.bf16 %v3320, %v3319
    %v3407 = vpack.c.bf16 %v3322, %v3321
    %v3408 = vpack.c.bf16 %v3324, %v3323
    %v3409 = vpack.c.bf16 %v3326, %v3325
    %v3410 = vpack.c.bf16 %v3328, %v3327
    %v3411 = vpack.c.bf16 %v3330, %v3329
    %v3412 = vpack.c.bf16 %v3332, %v3331
    %v3413 = vpack.c.bf16 %v3334, %v3333
    %v3414 = vpack.c.bf16 %v3336, %v3335
    %v3415 = vpack.c.bf16 %v3338, %v3337
    %v3416 = vpack.c.bf16 %v3340, %v3339
    %v3417 = vpack.c.bf16 %v3342, %v3341
    %v3418 = vpack.c.bf16 %v3344, %v3343
    %v3419 = vpack.c.bf16 %v3346, %v3345
    %v3420 = vpack.c.bf16 %v3348, %v3347
    %v3421 = vpack.c.bf16 %v3350, %v3349
    %v3422 = vpack.c.bf16 %v3352, %v3351
    %v3423 = vpack.c.bf16 %v3354, %v3353
    %v3424 = vpack.c.bf16 %v3356, %v3355
    %v3425 = vpack.c.bf16 %v3358, %v3357
    %v3426 = vpack.c.bf16 %v3360, %v3359
    %v3427 = vpack.c.bf16 %v3362, %v3361
    %v3428 = vpack.c.bf16 %v3364, %v3363
    %3429 = vst [vmem:[#allocation2] sm:$0xff] %v3365
    %3430 = vst [vmem:[#allocation2 + $0x8] sm:$0xff] %v3366
    %3431 = vst [vmem:[#allocation2 + $0x10] sm:$0xff] %v3367
    %3432 = vst [vmem:[#allocation2 + $0x18] sm:$0xff] %v3368
    %3433 = vst [vmem:[#allocation2 + $0x20] sm:$0xff] %v3369
    %3434 = vst [vmem:[#allocation2 + $0x28] sm:$0xff] %v3370
    %3435 = vst [vmem:[#allocation2 + $0x30] sm:$0xff] %v3371
    %3436 = vst [vmem:[#allocation2 + $0x38] sm:$0xff] %v3372
    %3437 = vst [vmem:[#allocation2 + $0x40] sm:$0xff] %v3373
    %3438 = vst [vmem:[#allocation2 + $0x48] sm:$0xff] %v3374
    %3439 = vst [vmem:[#allocation2 + $0x50] sm:$0xff] %v3375
    %3440 = vst [vmem:[#allocation2 + $0x58] sm:$0xff] %v3376
    %3441 = vst [vmem:[#allocation2 + $0x60] sm:$0xff] %v3377
    %3442 = vst [vmem:[#allocation2 + $0x68] sm:$0xff] %v3378
    %3443 = vst [vmem:[#allocation2 + $0x70] sm:$0xff] %v3379
    %3444 = vst [vmem:[#allocation2 + $0x78] sm:$0xff] %v3380
    %3445 = vst [vmem:[#allocation2 + $0x80] sm:$0xff] %v3381
    %3446 = vst [vmem:[#allocation2 + $0x88] sm:$0xff] %v3382
    %3447 = vst [vmem:[#allocation2 + $0x90] sm:$0xff] %v3383
    %3448 = vst [vmem:[#allocation2 + $0x98] sm:$0xff] %v3384
    %3449 = vst [vmem:[#allocation2 + $0xa0] sm:$0xff] %v3385
    %3450 = vst [vmem:[#allocation2 + $0xa8] sm:$0xff] %v3386
    %3451 = vst [vmem:[#allocation2 + $0xb0] sm:$0xff] %v3387
    %3452 = vst [vmem:[#allocation2 + $0xb8] sm:$0xff] %v3388
    %3453 = vst [vmem:[#allocation2 + $0xc0] sm:$0xff] %v3389
    %3454 = vst [vmem:[#allocation2 + $0xc8] sm:$0xff] %v3390
    %3455 = vst [vmem:[#allocation2 + $0xd0] sm:$0xff] %v3391
    %3456 = vst [vmem:[#allocation2 + $0xd8] sm:$0xff] %v3392
    %3457 = vst [vmem:[#allocation2 + $0xe0] sm:$0xff] %v3393
    %3458 = vst [vmem:[#allocation2 + $0xe8] sm:$0xff] %v3394
    %3459 = vst [vmem:[#allocation2 + $0xf0] sm:$0xff] %v3395
    %3460 = vst [vmem:[#allocation2 + $0xf8] sm:$0xff] %v3396
    %3461 = vst [vmem:[#allocation2 + $0x100] sm:$0xff] %v3397
    %3462 = vst [vmem:[#allocation2 + $0x108] sm:$0xff] %v3398
    %3463 = vst [vmem:[#allocation2 + $0x110] sm:$0xff] %v3399
    %3464 = vst [vmem:[#allocation2 + $0x118] sm:$0xff] %v3400
    %3465 = vst [vmem:[#allocation2 + $0x120] sm:$0xff] %v3401
    %3466 = vst [vmem:[#allocation2 + $0x128] sm:$0xff] %v3402
    %3467 = vst [vmem:[#allocation2 + $0x130] sm:$0xff] %v3403
    %3468 = vst [vmem:[#allocation2 + $0x138] sm:$0xff] %v3404
    %3469 = vst [vmem:[#allocation2 + $0x140] sm:$0xff] %v3405
    %3470 = vst [vmem:[#allocation2 + $0x148] sm:$0xff] %v3406
    %3471 = vst [vmem:[#allocation2 + $0x150] sm:$0xff] %v3407
    %3472 = vst [vmem:[#allocation2 + $0x158] sm:$0xff] %v3408
    %3473 = vst [vmem:[#allocation2 + $0x160] sm:$0xff] %v3409
    %3474 = vst [vmem:[#allocation2 + $0x168] sm:$0xff] %v3410
    %3475 = vst [vmem:[#allocation2 + $0x170] sm:$0xff] %v3411
    %3476 = vst [vmem:[#allocation2 + $0x178] sm:$0xff] %v3412
    %3477 = vst [vmem:[#allocation2 + $0x180] sm:$0xff] %v3413
    %3478 = vst [vmem:[#allocation2 + $0x188] sm:$0xff] %v3414
    %3479 = vst [vmem:[#allocation2 + $0x190] sm:$0xff] %v3415
    %3480 = vst [vmem:[#allocation2 + $0x198] sm:$0xff] %v3416
    %3481 = vst [vmem:[#allocation2 + $0x1a0] sm:$0xff] %v3417
    %3482 = vst [vmem:[#allocation2 + $0x1a8] sm:$0xff] %v3418
    %3483 = vst [vmem:[#allocation2 + $0x1b0] sm:$0xff] %v3419
    %3484 = vst [vmem:[#allocation2 + $0x1b8] sm:$0xff] %v3420
    %3485 = vst [vmem:[#allocation2 + $0x1c0] sm:$0xff] %v3421
    %3486 = vst [vmem:[#allocation2 + $0x1c8] sm:$0xff] %v3422
    %3487 = vst [vmem:[#allocation2 + $0x1d0] sm:$0xff] %v3423
    %3488 = vst [vmem:[#allocation2 + $0x1d8] sm:$0xff] %v3424
    %3489 = vst [vmem:[#allocation2 + $0x1e0] sm:$0xff] %v3425
    %3490 = vst [vmem:[#allocation2 + $0x1e8] sm:$0xff] %v3426
    %3491 = vst [vmem:[#allocation2 + $0x1f0] sm:$0xff] %v3427
    %3492 = vst [vmem:[#allocation2 + $0x1f8] sm:$0xff] %v3428
    %v3493 = vlaneseq
    %v3494 = vshrl.u32 %v3493, 7
    %v3495 = vadd.s32 %v3494, 8
    %v3496 = vadd.s32 %v3494, 16
    %v3497 = vadd.s32 %v3494, 24
    %v3498 = vadd.s32 %v3494, 32
    %v3499 = vadd.s32 %v3494, 40
    %v3500 = vadd.s32 %v3494, 48
    %v3501 = vadd.s32 %v3494, 56
    %v3502 = vadd.s32 %v3494, 64
    %v3503 = vadd.s32 %v3494, 72
    %v3504 = vadd.s32 %v3494, 80
    %v3505 = vadd.s32 %v3494, 88
    %v3506 = vadd.s32 %v3494, 96
    %v3507 = vadd.s32 %v3494, 104
    %v3508 = vadd.s32 %v3494, 112
    %v3509 = vadd.s32 %v3494, 120
    %v3510 = vadd.s32 %v3494, 128
    %v3511 = vadd.s32 %v3494, 136
    %v3512 = vadd.s32 %v3494, 144
    %v3513 = vadd.s32 %v3494, 152
    %v3514 = vadd.s32 %v3494, 160
    %v3515 = vadd.s32 %v3494, 168
    %v3516 = vadd.s32 %v3494, 176
    %v3517 = vadd.s32 %v3494, 184
    %v3518 = vadd.s32 %v3494, 192
    %v3519 = vadd.s32 %v3494, 200
    %v3520 = vadd.s32 %v3494, 208
    %v3521 = vadd.s32 %v3494, 216
    %v3522 = vadd.s32 %v3494, 224
    %v3523 = vadd.s32 %v3494, 232
    %v3524 = vadd.s32 %v3494, 240
    %v3525 = vadd.s32 %v3494, 248
    %v3526 = vadd.s32 %v3494, 256
    %v3527 = vadd.s32 %v3494, 264
    %v3528 = vadd.s32 %v3494, 272
    %v3529 = vadd.s32 %v3494, 280
    %v3530 = vadd.s32 %v3494, 288
    %v3531 = vadd.s32 %v3494, 296
    %v3532 = vadd.s32 %v3494, 304
    %v3533 = vadd.s32 %v3494, 312
    %v3534 = vadd.s32 %v3494, 320
    %v3535 = vadd.s32 %v3494, 328
    %v3536 = vadd.s32 %v3494, 336
    %v3537 = vadd.s32 %v3494, 344
    %v3538 = vadd.s32 %v3494, 352
    %v3539 = vadd.s32 %v3494, 360
    %v3540 = vadd.s32 %v3494, 368
    %v3541 = vadd.s32 %v3494, 376
    %v3542 = vadd.s32 %v3494, 384
    %v3543 = vadd.s32 %v3494, 392
    %v3544 = vadd.s32 %v3494, 400
    %v3545 = vadd.s32 %v3494, 408
    %v3546 = vadd.s32 %v3494, 416
    %v3547 = vadd.s32 %v3494, 424
    %v3548 = vadd.s32 %v3494, 432
    %v3549 = vadd.s32 %v3494, 440
    %v3550 = vadd.s32 %v3494, 448
    %v3551 = vadd.s32 %v3494, 456
    %v3552 = vadd.s32 %v3494, 464
    %v3553 = vadd.s32 %v3494, 472
    %v3554 = vadd.s32 %v3494, 480
    %v3555 = vadd.s32 %v3494, 488
    %v3556 = vadd.s32 %v3494, 496
    %v3557 = vadd.s32 %v3494, 504
    %s3558 = smul.u32 0, 512
    %v3559 = vstv %s3558
    %v3560 = vadd.s32 %v3494, %v3559
    %v3561 = vadd.s32 %v3495, %v3559
    %v3562 = vadd.s32 %v3496, %v3559
    %v3563 = vadd.s32 %v3497, %v3559
    %v3564 = vadd.s32 %v3498, %v3559
    %v3565 = vadd.s32 %v3499, %v3559
    %v3566 = vadd.s32 %v3500, %v3559
    %v3567 = vadd.s32 %v3501, %v3559
    %v3568 = vadd.s32 %v3502, %v3559
    %v3569 = vadd.s32 %v3503, %v3559
    %v3570 = vadd.s32 %v3504, %v3559
    %v3571 = vadd.s32 %v3505, %v3559
    %v3572 = vadd.s32 %v3506, %v3559
    %v3573 = vadd.s32 %v3507, %v3559
    %v3574 = vadd.s32 %v3508, %v3559
    %v3575 = vadd.s32 %v3509, %v3559
    %v3576 = vadd.s32 %v3510, %v3559
    %v3577 = vadd.s32 %v3511, %v3559
    %v3578 = vadd.s32 %v3512, %v3559
    %v3579 = vadd.s32 %v3513, %v3559
    %v3580 = vadd.s32 %v3514, %v3559
    %v3581 = vadd.s32 %v3515, %v3559
    %v3582 = vadd.s32 %v3516, %v3559
    %v3583 = vadd.s32 %v3517, %v3559
    %v3584 = vadd.s32 %v3518, %v3559
    %v3585 = vadd.s32 %v3519, %v3559
    %v3586 = vadd.s32 %v3520, %v3559
    %v3587 = vadd.s32 %v3521, %v3559
    %v3588 = vadd.s32 %v3522, %v3559
    %v3589 = vadd.s32 %v3523, %v3559
    %v3590 = vadd.s32 %v3524, %v3559
    %v3591 = vadd.s32 %v3525, %v3559
    %v3592 = vadd.s32 %v3526, %v3559
    %v3593 = vadd.s32 %v3527, %v3559
    %v3594 = vadd.s32 %v3528, %v3559
    %v3595 = vadd.s32 %v3529, %v3559
    %v3596 = vadd.s32 %v3530, %v3559
    %v3597 = vadd.s32 %v3531, %v3559
    %v3598 = vadd.s32 %v3532, %v3559
    %v3599 = vadd.s32 %v3533, %v3559
    %v3600 = vadd.s32 %v3534, %v3559
    %v3601 = vadd.s32 %v3535, %v3559
    %v3602 = vadd.s32 %v3536, %v3559
    %v3603 = vadd.s32 %v3537, %v3559
    %v3604 = vadd.s32 %v3538, %v3559
    %v3605 = vadd.s32 %v3539, %v3559
    %v3606 = vadd.s32 %v3540, %v3559
    %v3607 = vadd.s32 %v3541, %v3559
    %v3608 = vadd.s32 %v3542, %v3559
    %v3609 = vadd.s32 %v3543, %v3559
    %v3610 = vadd.s32 %v3544, %v3559
    %v3611 = vadd.s32 %v3545, %v3559
    %v3612 = vadd.s32 %v3546, %v3559
    %v3613 = vadd.s32 %v3547, %v3559
    %v3614 = vadd.s32 %v3548, %v3559
    %v3615 = vadd.s32 %v3549, %v3559
    %v3616 = vadd.s32 %v3550, %v3559
    %v3617 = vadd.s32 %v3551, %v3559
    %v3618 = vadd.s32 %v3552, %v3559
    %v3619 = vadd.s32 %v3553, %v3559
    %v3620 = vadd.s32 %v3554, %v3559
    %v3621 = vadd.s32 %v3555, %v3559
    %v3622 = vadd.s32 %v3556, %v3559
    %v3623 = vadd.s32 %v3557, %v3559
    %vm3624 = vcmp.lt.s32.totalorder %v3560, 512
    %vm3625 = vcmp.lt.s32.totalorder %v3561, 512
    %vm3626 = vcmp.lt.s32.totalorder %v3562, 512
    %vm3627 = vcmp.lt.s32.totalorder %v3563, 512
    %vm3628 = vcmp.lt.s32.totalorder %v3564, 512
    %vm3629 = vcmp.lt.s32.totalorder %v3565, 512
    %vm3630 = vcmp.lt.s32.totalorder %v3566, 512
    %vm3631 = vcmp.lt.s32.totalorder %v3567, 512
    %vm3632 = vcmp.lt.s32.totalorder %v3568, 512
    %vm3633 = vcmp.lt.s32.totalorder %v3569, 512
    %vm3634 = vcmp.lt.s32.totalorder %v3570, 512
    %vm3635 = vcmp.lt.s32.totalorder %v3571, 512
    %vm3636 = vcmp.lt.s32.totalorder %v3572, 512
    %vm3637 = vcmp.lt.s32.totalorder %v3573, 512
    %vm3638 = vcmp.lt.s32.totalorder %v3574, 512
    %vm3639 = vcmp.lt.s32.totalorder %v3575, 512
    %vm3640 = vcmp.lt.s32.totalorder %v3576, 512
    %vm3641 = vcmp.lt.s32.totalorder %v3577, 512
    %vm3642 = vcmp.lt.s32.totalorder %v3578, 512
    %vm3643 = vcmp.lt.s32.totalorder %v3579, 512
    %vm3644 = vcmp.lt.s32.totalorder %v3580, 512
    %vm3645 = vcmp.lt.s32.totalorder %v3581, 512
    %vm3646 = vcmp.lt.s32.totalorder %v3582, 512
    %vm3647 = vcmp.lt.s32.totalorder %v3583, 512
    %vm3648 = vcmp.lt.s32.totalorder %v3584, 512
    %vm3649 = vcmp.lt.s32.totalorder %v3585, 512
    %vm3650 = vcmp.lt.s32.totalorder %v3586, 512
    %vm3651 = vcmp.lt.s32.totalorder %v3587, 512
    %vm3652 = vcmp.lt.s32.totalorder %v3588, 512
    %vm3653 = vcmp.lt.s32.totalorder %v3589, 512
    %vm3654 = vcmp.lt.s32.totalorder %v3590, 512
    %vm3655 = vcmp.lt.s32.totalorder %v3591, 512
    %vm3656 = vcmp.lt.s32.totalorder %v3592, 512
    %vm3657 = vcmp.lt.s32.totalorder %v3593, 512
    %vm3658 = vcmp.lt.s32.totalorder %v3594, 512
    %vm3659 = vcmp.lt.s32.totalorder %v3595, 512
    %vm3660 = vcmp.lt.s32.totalorder %v3596, 512
    %vm3661 = vcmp.lt.s32.totalorder %v3597, 512
    %vm3662 = vcmp.lt.s32.totalorder %v3598, 512
    %vm3663 = vcmp.lt.s32.totalorder %v3599, 512
    %vm3664 = vcmp.lt.s32.totalorder %v3600, 512
    %vm3665 = vcmp.lt.s32.totalorder %v3601, 512
    %vm3666 = vcmp.lt.s32.totalorder %v3602, 512
    %vm3667 = vcmp.lt.s32.totalorder %v3603, 512
    %vm3668 = vcmp.lt.s32.totalorder %v3604, 512
    %vm3669 = vcmp.lt.s32.totalorder %v3605, 512
    %vm3670 = vcmp.lt.s32.totalorder %v3606, 512
    %vm3671 = vcmp.lt.s32.totalorder %v3607, 512
    %vm3672 = vcmp.lt.s32.totalorder %v3608, 512
    %vm3673 = vcmp.lt.s32.totalorder %v3609, 512
    %vm3674 = vcmp.lt.s32.totalorder %v3610, 512
    %vm3675 = vcmp.lt.s32.totalorder %v3611, 512
    %vm3676 = vcmp.lt.s32.totalorder %v3612, 512
    %vm3677 = vcmp.lt.s32.totalorder %v3613, 512
    %vm3678 = vcmp.lt.s32.totalorder %v3614, 512
    %vm3679 = vcmp.lt.s32.totalorder %v3615, 512
    %vm3680 = vcmp.lt.s32.totalorder %v3616, 512
    %vm3681 = vcmp.lt.s32.totalorder %v3617, 512
    %vm3682 = vcmp.lt.s32.totalorder %v3618, 512
    %vm3683 = vcmp.lt.s32.totalorder %v3619, 512
    %vm3684 = vcmp.lt.s32.totalorder %v3620, 512
    %vm3685 = vcmp.lt.s32.totalorder %v3621, 512
    %vm3686 = vcmp.lt.s32.totalorder %v3622, 512
    %vm3687 = vcmp.lt.s32.totalorder %v3623, 512
    %v3688 = vsel %vm3624, 1, 0
    %v3689 = vsel %vm3625, 1, 0
    %v3690 = vsel %vm3626, 1, 0
    %v3691 = vsel %vm3627, 1, 0
    %v3692 = vsel %vm3628, 1, 0
    %v3693 = vsel %vm3629, 1, 0
    %v3694 = vsel %vm3630, 1, 0
    %v3695 = vsel %vm3631, 1, 0
    %v3696 = vsel %vm3632, 1, 0
    %v3697 = vsel %vm3633, 1, 0
    %v3698 = vsel %vm3634, 1, 0
    %v3699 = vsel %vm3635, 1, 0
    %v3700 = vsel %vm3636, 1, 0
    %v3701 = vsel %vm3637, 1, 0
    %v3702 = vsel %vm3638, 1, 0
    %v3703 = vsel %vm3639, 1, 0
    %v3704 = vsel %vm3640, 1, 0
    %v3705 = vsel %vm3641, 1, 0
    %v3706 = vsel %vm3642, 1, 0
    %v3707 = vsel %vm3643, 1, 0
    %v3708 = vsel %vm3644, 1, 0
    %v3709 = vsel %vm3645, 1, 0
    %v3710 = vsel %vm3646, 1, 0
    %v3711 = vsel %vm3647, 1, 0
    %v3712 = vsel %vm3648, 1, 0
    %v3713 = vsel %vm3649, 1, 0
    %v3714 = vsel %vm3650, 1, 0
    %v3715 = vsel %vm3651, 1, 0
    %v3716 = vsel %vm3652, 1, 0
    %v3717 = vsel %vm3653, 1, 0
    %v3718 = vsel %vm3654, 1, 0
    %v3719 = vsel %vm3655, 1, 0
    %v3720 = vsel %vm3656, 1, 0
    %v3721 = vsel %vm3657, 1, 0
    %v3722 = vsel %vm3658, 1, 0
    %v3723 = vsel %vm3659, 1, 0
    %v3724 = vsel %vm3660, 1, 0
    %v3725 = vsel %vm3661, 1, 0
    %v3726 = vsel %vm3662, 1, 0
    %v3727 = vsel %vm3663, 1, 0
    %v3728 = vsel %vm3664, 1, 0
    %v3729 = vsel %vm3665, 1, 0
    %v3730 = vsel %vm3666, 1, 0
    %v3731 = vsel %vm3667, 1, 0
    %v3732 = vsel %vm3668, 1, 0
    %v3733 = vsel %vm3669, 1, 0
    %v3734 = vsel %vm3670, 1, 0
    %v3735 = vsel %vm3671, 1, 0
    %v3736 = vsel %vm3672, 1, 0
    %v3737 = vsel %vm3673, 1, 0
    %v3738 = vsel %vm3674, 1, 0
    %v3739 = vsel %vm3675, 1, 0
    %v3740 = vsel %vm3676, 1, 0
    %v3741 = vsel %vm3677, 1, 0
    %v3742 = vsel %vm3678, 1, 0
    %v3743 = vsel %vm3679, 1, 0
    %v3744 = vsel %vm3680, 1, 0
    %v3745 = vsel %vm3681, 1, 0
    %v3746 = vsel %vm3682, 1, 0
    %v3747 = vsel %vm3683, 1, 0
    %v3748 = vsel %vm3684, 1, 0
    %v3749 = vsel %vm3685, 1, 0
    %v3750 = vsel %vm3686, 1, 0
    %v3751 = vsel %vm3687, 1, 0
    %vm3752 = vcmp.eq.s32.totalorder %v3688, 1
    %vm3753 = vcmp.eq.s32.totalorder %v3689, 1
    %vm3754 = vcmp.eq.s32.totalorder %v3690, 1
    %vm3755 = vcmp.eq.s32.totalorder %v3691, 1
    %vm3756 = vcmp.eq.s32.totalorder %v3692, 1
    %vm3757 = vcmp.eq.s32.totalorder %v3693, 1
    %vm3758 = vcmp.eq.s32.totalorder %v3694, 1
    %vm3759 = vcmp.eq.s32.totalorder %v3695, 1
    %vm3760 = vcmp.eq.s32.totalorder %v3696, 1
    %vm3761 = vcmp.eq.s32.totalorder %v3697, 1
    %vm3762 = vcmp.eq.s32.totalorder %v3698, 1
    %vm3763 = vcmp.eq.s32.totalorder %v3699, 1
    %vm3764 = vcmp.eq.s32.totalorder %v3700, 1
    %vm3765 = vcmp.eq.s32.totalorder %v3701, 1
    %vm3766 = vcmp.eq.s32.totalorder %v3702, 1
    %vm3767 = vcmp.eq.s32.totalorder %v3703, 1
    %vm3768 = vcmp.eq.s32.totalorder %v3704, 1
    %vm3769 = vcmp.eq.s32.totalorder %v3705, 1
    %vm3770 = vcmp.eq.s32.totalorder %v3706, 1
    %vm3771 = vcmp.eq.s32.totalorder %v3707, 1
    %vm3772 = vcmp.eq.s32.totalorder %v3708, 1
    %vm3773 = vcmp.eq.s32.totalorder %v3709, 1
    %vm3774 = vcmp.eq.s32.totalorder %v3710, 1
    %vm3775 = vcmp.eq.s32.totalorder %v3711, 1
    %vm3776 = vcmp.eq.s32.totalorder %v3712, 1
    %vm3777 = vcmp.eq.s32.totalorder %v3713, 1
    %vm3778 = vcmp.eq.s32.totalorder %v3714, 1
    %vm3779 = vcmp.eq.s32.totalorder %v3715, 1
    %vm3780 = vcmp.eq.s32.totalorder %v3716, 1
    %vm3781 = vcmp.eq.s32.totalorder %v3717, 1
    %vm3782 = vcmp.eq.s32.totalorder %v3718, 1
    %vm3783 = vcmp.eq.s32.totalorder %v3719, 1
    %vm3784 = vcmp.eq.s32.totalorder %v3720, 1
    %vm3785 = vcmp.eq.s32.totalorder %v3721, 1
    %vm3786 = vcmp.eq.s32.totalorder %v3722, 1
    %vm3787 = vcmp.eq.s32.totalorder %v3723, 1
    %vm3788 = vcmp.eq.s32.totalorder %v3724, 1
    %vm3789 = vcmp.eq.s32.totalorder %v3725, 1
    %vm3790 = vcmp.eq.s32.totalorder %v3726, 1
    %vm3791 = vcmp.eq.s32.totalorder %v3727, 1
    %vm3792 = vcmp.eq.s32.totalorder %v3728, 1
    %vm3793 = vcmp.eq.s32.totalorder %v3729, 1
    %vm3794 = vcmp.eq.s32.totalorder %v3730, 1
    %vm3795 = vcmp.eq.s32.totalorder %v3731, 1
    %vm3796 = vcmp.eq.s32.totalorder %v3732, 1
    %vm3797 = vcmp.eq.s32.totalorder %v3733, 1
    %vm3798 = vcmp.eq.s32.totalorder %v3734, 1
    %vm3799 = vcmp.eq.s32.totalorder %v3735, 1
    %vm3800 = vcmp.eq.s32.totalorder %v3736, 1
    %vm3801 = vcmp.eq.s32.totalorder %v3737, 1
    %vm3802 = vcmp.eq.s32.totalorder %v3738, 1
    %vm3803 = vcmp.eq.s32.totalorder %v3739, 1
    %vm3804 = vcmp.eq.s32.totalorder %v3740, 1
    %vm3805 = vcmp.eq.s32.totalorder %v3741, 1
    %vm3806 = vcmp.eq.s32.totalorder %v3742, 1
    %vm3807 = vcmp.eq.s32.totalorder %v3743, 1
    %vm3808 = vcmp.eq.s32.totalorder %v3744, 1
    %vm3809 = vcmp.eq.s32.totalorder %v3745, 1
    %vm3810 = vcmp.eq.s32.totalorder %v3746, 1
    %vm3811 = vcmp.eq.s32.totalorder %v3747, 1
    %vm3812 = vcmp.eq.s32.totalorder %v3748, 1
    %vm3813 = vcmp.eq.s32.totalorder %v3749, 1
    %vm3814 = vcmp.eq.s32.totalorder %v3750, 1
    %vm3815 = vcmp.eq.s32.totalorder %v3751, 1
    %v3816 = vsel %vm3752, %v3237, 0.0
    %v3817 = vsel %vm3752, %v3238, 0.0
    %v3818 = vsel %vm3753, %v3239, 0.0
    %v3819 = vsel %vm3753, %v3240, 0.0
    %v3820 = vsel %vm3754, %v3241, 0.0
    %v3821 = vsel %vm3754, %v3242, 0.0
    %v3822 = vsel %vm3755, %v3243, 0.0
    %v3823 = vsel %vm3755, %v3244, 0.0
    %v3824 = vsel %vm3756, %v3245, 0.0
    %v3825 = vsel %vm3756, %v3246, 0.0
    %v3826 = vsel %vm3757, %v3247, 0.0
    %v3827 = vsel %vm3757, %v3248, 0.0
    %v3828 = vsel %vm3758, %v3249, 0.0
    %v3829 = vsel %vm3758, %v3250, 0.0
    %v3830 = vsel %vm3759, %v3251, 0.0
    %v3831 = vsel %vm3759, %v3252, 0.0
    %v3832 = vsel %vm3760, %v3253, 0.0
    %v3833 = vsel %vm3760, %v3254, 0.0
    %v3834 = vsel %vm3761, %v3255, 0.0
    %v3835 = vsel %vm3761, %v3256, 0.0
    %v3836 = vsel %vm3762, %v3257, 0.0
    %v3837 = vsel %vm3762, %v3258, 0.0
    %v3838 = vsel %vm3763, %v3259, 0.0
    %v3839 = vsel %vm3763, %v3260, 0.0
    %v3840 = vsel %vm3764, %v3261, 0.0
    %v3841 = vsel %vm3764, %v3262, 0.0
    %v3842 = vsel %vm3765, %v3263, 0.0
    %v3843 = vsel %vm3765, %v3264, 0.0
    %v3844 = vsel %vm3766, %v3265, 0.0
    %v3845 = vsel %vm3766, %v3266, 0.0
    %v3846 = vsel %vm3767, %v3267, 0.0
    %v3847 = vsel %vm3767, %v3268, 0.0
    %v3848 = vsel %vm3768, %v3269, 0.0
    %v3849 = vsel %vm3768, %v3270, 0.0
    %v3850 = vsel %vm3769, %v3271, 0.0
    %v3851 = vsel %vm3769, %v3272, 0.0
    %v3852 = vsel %vm3770, %v3273, 0.0
    %v3853 = vsel %vm3770, %v3274, 0.0
    %v3854 = vsel %vm3771, %v3275, 0.0
    %v3855 = vsel %vm3771, %v3276, 0.0
    %v3856 = vsel %vm3772, %v3277, 0.0
    %v3857 = vsel %vm3772, %v3278, 0.0
    %v3858 = vsel %vm3773, %v3279, 0.0
    %v3859 = vsel %vm3773, %v3280, 0.0
    %v3860 = vsel %vm3774, %v3281, 0.0
    %v3861 = vsel %vm3774, %v3282, 0.0
    %v3862 = vsel %vm3775, %v3283, 0.0
    %v3863 = vsel %vm3775, %v3284, 0.0
    %v3864 = vsel %vm3776, %v3285, 0.0
    %v3865 = vsel %vm3776, %v3286, 0.0
    %v3866 = vsel %vm3777, %v3287, 0.0
    %v3867 = vsel %vm3777, %v3288, 0.0
    %v3868 = vsel %vm3778, %v3289, 0.0
    %v3869 = vsel %vm3778, %v3290, 0.0
    %v3870 = vsel %vm3779, %v3291, 0.0
    %v3871 = vsel %vm3779, %v3292, 0.0
    %v3872 = vsel %vm3780, %v3293, 0.0
    %v3873 = vsel %vm3780, %v3294, 0.0
    %v3874 = vsel %vm3781, %v3295, 0.0
    %v3875 = vsel %vm3781, %v3296, 0.0
    %v3876 = vsel %vm3782, %v3297, 0.0
    %v3877 = vsel %vm3782, %v3298, 0.0
    %v3878 = vsel %vm3783, %v3299, 0.0
    %v3879 = vsel %vm3783, %v3300, 0.0
    %v3880 = vsel %vm3784, %v3301, 0.0
    %v3881 = vsel %vm3784, %v3302, 0.0
    %v3882 = vsel %vm3785, %v3303, 0.0
    %v3883 = vsel %vm3785, %v3304, 0.0
    %v3884 = vsel %vm3786, %v3305, 0.0
    %v3885 = vsel %vm3786, %v3306, 0.0
    %v3886 = vsel %vm3787, %v3307, 0.0
    %v3887 = vsel %vm3787, %v3308, 0.0
    %v3888 = vsel %vm3788, %v3309, 0.0
    %v3889 = vsel %vm3788, %v3310, 0.0
    %v3890 = vsel %vm3789, %v3311, 0.0
    %v3891 = vsel %vm3789, %v3312, 0.0
    %v3892 = vsel %vm3790, %v3313, 0.0
    %v3893 = vsel %vm3790, %v3314, 0.0
    %v3894 = vsel %vm3791, %v3315, 0.0
    %v3895 = vsel %vm3791, %v3316, 0.0
    %v3896 = vsel %vm3792, %v3317, 0.0
    %v3897 = vsel %vm3792, %v3318, 0.0
    %v3898 = vsel %vm3793, %v3319, 0.0
    %v3899 = vsel %vm3793, %v3320, 0.0
    %v3900 = vsel %vm3794, %v3321, 0.0
    %v3901 = vsel %vm3794, %v3322, 0.0
    %v3902 = vsel %vm3795, %v3323, 0.0
    %v3903 = vsel %vm3795, %v3324, 0.0
    %v3904 = vsel %vm3796, %v3325, 0.0
    %v3905 = vsel %vm3796, %v3326, 0.0
    %v3906 = vsel %vm3797, %v3327, 0.0
    %v3907 = vsel %vm3797, %v3328, 0.0
    %v3908 = vsel %vm3798, %v3329, 0.0
    %v3909 = vsel %vm3798, %v3330, 0.0
    %v3910 = vsel %vm3799, %v3331, 0.0
    %v3911 = vsel %vm3799, %v3332, 0.0
    %v3912 = vsel %vm3800, %v3333, 0.0
    %v3913 = vsel %vm3800, %v3334, 0.0
    %v3914 = vsel %vm3801, %v3335, 0.0
    %v3915 = vsel %vm3801, %v3336, 0.0
    %v3916 = vsel %vm3802, %v3337, 0.0
    %v3917 = vsel %vm3802, %v3338, 0.0
    %v3918 = vsel %vm3803, %v3339, 0.0
    %v3919 = vsel %vm3803, %v3340, 0.0
    %v3920 = vsel %vm3804, %v3341, 0.0
    %v3921 = vsel %vm3804, %v3342, 0.0
    %v3922 = vsel %vm3805, %v3343, 0.0
    %v3923 = vsel %vm3805, %v3344, 0.0
    %v3924 = vsel %vm3806, %v3345, 0.0
    %v3925 = vsel %vm3806, %v3346, 0.0
    %v3926 = vsel %vm3807, %v3347, 0.0
    %v3927 = vsel %vm3807, %v3348, 0.0
    %v3928 = vsel %vm3808, %v3349, 0.0
    %v3929 = vsel %vm3808, %v3350, 0.0
    %v3930 = vsel %vm3809, %v3351, 0.0
    %v3931 = vsel %vm3809, %v3352, 0.0
    %v3932 = vsel %vm3810, %v3353, 0.0
    %v3933 = vsel %vm3810, %v3354, 0.0
    %v3934 = vsel %vm3811, %v3355, 0.0
    %v3935 = vsel %vm3811, %v3356, 0.0
    %v3936 = vsel %vm3812, %v3357, 0.0
    %v3937 = vsel %vm3812, %v3358, 0.0
    %v3938 = vsel %vm3813, %v3359, 0.0
    %v3939 = vsel %vm3813, %v3360, 0.0
    %v3940 = vsel %vm3814, %v3361, 0.0
    %v3941 = vsel %vm3814, %v3362, 0.0
    %v3942 = vsel %vm3815, %v3363, 0.0
    %v3943 = vsel %vm3815, %v3364, 0.0
    %v3944 = vadd.f32 %v3816, %v3818
    %v3945 = vadd.f32 %v3944, %v3820
    %v3946 = vadd.f32 %v3945, %v3822
    %v3947 = vadd.f32 %v3946, %v3824
    %v3948 = vadd.f32 %v3947, %v3826
    %v3949 = vadd.f32 %v3948, %v3828
    %v3950 = vadd.f32 %v3949, %v3830
    %v3951 = vadd.f32 %v3950, %v3832
    %v3952 = vadd.f32 %v3951, %v3834
    %v3953 = vadd.f32 %v3952, %v3836
    %v3954 = vadd.f32 %v3953, %v3838
    %v3955 = vadd.f32 %v3954, %v3840
    %v3956 = vadd.f32 %v3955, %v3842
    %v3957 = vadd.f32 %v3956, %v3844
    %v3958 = vadd.f32 %v3957, %v3846
    %v3959 = vadd.f32 %v3958, %v3848
    %v3960 = vadd.f32 %v3959, %v3850
    %v3961 = vadd.f32 %v3960, %v3852
    %v3962 = vadd.f32 %v3961, %v3854
    %v3963 = vadd.f32 %v3962, %v3856
    %v3964 = vadd.f32 %v3963, %v3858
    %v3965 = vadd.f32 %v3964, %v3860
    %v3966 = vadd.f32 %v3965, %v3862
    %v3967 = vadd.f32 %v3966, %v3864
    %v3968 = vadd.f32 %v3967, %v3866
    %v3969 = vadd.f32 %v3968, %v3868
    %v3970 = vadd.f32 %v3969, %v3870
    %v3971 = vadd.f32 %v3970, %v3872
    %v3972 = vadd.f32 %v3971, %v3874
    %v3973 = vadd.f32 %v3972, %v3876
    %v3974 = vadd.f32 %v3973, %v3878
    %v3975 = vadd.f32 %v3974, %v3880
    %v3976 = vadd.f32 %v3975, %v3882
    %v3977 = vadd.f32 %v3976, %v3884
    %v3978 = vadd.f32 %v3977, %v3886
    %v3979 = vadd.f32 %v3978, %v3888
    %v3980 = vadd.f32 %v3979, %v3890
    %v3981 = vadd.f32 %v3980, %v3892
    %v3982 = vadd.f32 %v3981, %v3894
    %v3983 = vadd.f32 %v3982, %v3896
    %v3984 = vadd.f32 %v3983, %v3898
    %v3985 = vadd.f32 %v3984, %v3900
    %v3986 = vadd.f32 %v3985, %v3902
    %v3987 = vadd.f32 %v3986, %v3904
    %v3988 = vadd.f32 %v3987, %v3906
    %v3989 = vadd.f32 %v3988, %v3908
    %v3990 = vadd.f32 %v3989, %v3910
    %v3991 = vadd.f32 %v3990, %v3912
    %v3992 = vadd.f32 %v3991, %v3914
    %v3993 = vadd.f32 %v3992, %v3916
    %v3994 = vadd.f32 %v3993, %v3918
    %v3995 = vadd.f32 %v3994, %v3920
    %v3996 = vadd.f32 %v3995, %v3922
    %v3997 = vadd.f32 %v3996, %v3924
    %v3998 = vadd.f32 %v3997, %v3926
    %v3999 = vadd.f32 %v3998, %v3928
    %v4000 = vadd.f32 %v3999, %v3930
    %v4001 = vadd.f32 %v4000, %v3932
    %v4002 = vadd.f32 %v4001, %v3934
    %v4003 = vadd.f32 %v4002, %v3936
    %v4004 = vadd.f32 %v4003, %v3938
    %v4005 = vadd.f32 %v4004, %v3940
    %v4006 = vadd.f32 %v4005, %v3942
    %v4007 = vrot.slane %v4006, 4
    %v4008 = vadd.f32 %v4006, %v4007
    %v4009 = vrot.slane %v4008, 2
    %v4010 = vadd.f32 %v4008, %v4009
    %v4011 = vrot.slane %v4010, 1
    %v4012 = vadd.f32 %v4010, %v4011
    %v4013 = vadd.f32 %v3817, %v3819
    %v4014 = vadd.f32 %v4013, %v3821
    %v4015 = vadd.f32 %v4014, %v3823
    %v4016 = vadd.f32 %v4015, %v3825
    %v4017 = vadd.f32 %v4016, %v3827
    %v4018 = vadd.f32 %v4017, %v3829
    %v4019 = vadd.f32 %v4018, %v3831
    %v4020 = vadd.f32 %v4019, %v3833
    %v4021 = vadd.f32 %v4020, %v3835
    %v4022 = vadd.f32 %v4021, %v3837
    %v4023 = vadd.f32 %v4022, %v3839
    %v4024 = vadd.f32 %v4023, %v3841
    %v4025 = vadd.f32 %v4024, %v3843
    %v4026 = vadd.f32 %v4025, %v3845
    %v4027 = vadd.f32 %v4026, %v3847
    %v4028 = vadd.f32 %v4027, %v3849
    %v4029 = vadd.f32 %v4028, %v3851
    %v4030 = vadd.f32 %v4029, %v3853
    %v4031 = vadd.f32 %v4030, %v3855
    %v4032 = vadd.f32 %v4031, %v3857
    %v4033 = vadd.f32 %v4032, %v3859
    %v4034 = vadd.f32 %v4033, %v3861
    %v4035 = vadd.f32 %v4034, %v3863
    %v4036 = vadd.f32 %v4035, %v3865
    %v4037 = vadd.f32 %v4036, %v3867
    %v4038 = vadd.f32 %v4037, %v3869
    %v4039 = vadd.f32 %v4038, %v3871
    %v4040 = vadd.f32 %v4039, %v3873
    %v4041 = vadd.f32 %v4040, %v3875
    %v4042 = vadd.f32 %v4041, %v3877
    %v4043 = vadd.f32 %v4042, %v3879
    %v4044 = vadd.f32 %v4043, %v3881
    %v4045 = vadd.f32 %v4044, %v3883
    %v4046 = vadd.f32 %v4045, %v3885
    %v4047 = vadd.f32 %v4046, %v3887
    %v4048 = vadd.f32 %v4047, %v3889
    %v4049 = vadd.f32 %v4048, %v3891
    %v4050 = vadd.f32 %v4049, %v3893
    %v4051 = vadd.f32 %v4050, %v3895
    %v4052 = vadd.f32 %v4051, %v3897
    %v4053 = vadd.f32 %v4052, %v3899
    %v4054 = vadd.f32 %v4053, %v3901
    %v4055 = vadd.f32 %v4054, %v3903
    %v4056 = vadd.f32 %v4055, %v3905
    %v4057 = vadd.f32 %v4056, %v3907
    %v4058 = vadd.f32 %v4057, %v3909
    %v4059 = vadd.f32 %v4058, %v3911
    %v4060 = vadd.f32 %v4059, %v3913
    %v4061 = vadd.f32 %v4060, %v3915
    %v4062 = vadd.f32 %v4061, %v3917
    %v4063 = vadd.f32 %v4062, %v3919
    %v4064 = vadd.f32 %v4063, %v3921
    %v4065 = vadd.f32 %v4064, %v3923
    %v4066 = vadd.f32 %v4065, %v3925
    %v4067 = vadd.f32 %v4066, %v3927
    %v4068 = vadd.f32 %v4067, %v3929
    %v4069 = vadd.f32 %v4068, %v3931
    %v4070 = vadd.f32 %v4069, %v3933
    %v4071 = vadd.f32 %v4070, %v3935
    %v4072 = vadd.f32 %v4071, %v3937
    %v4073 = vadd.f32 %v4072, %v3939
    %v4074 = vadd.f32 %v4073, %v3941
    %v4075 = vadd.f32 %v4074, %v3943
    %v4076 = vrot.slane %v4075, 4
    %v4077 = vadd.f32 %v4075, %v4076
    %v4078 = vrot.slane %v4077, 2
    %v4079 = vadd.f32 %v4077, %v4078
    %v4080 = vrot.slane %v4079, 1
    %v4081 = vadd.f32 %v4079, %v4080
    %v4084 = vrot.slane %v4081, 7
    %vm4085 = vcmask 1040384
    %v4086 = vsel %vm4085, %v4012, %v4084
    %v4088 = vlaneseq
    %vm4089 = vcmp.ge.s32.totalorder %v4088, 0
    %vm4090 = vcmp.lt.s32.totalorder %v4088, 256
    %vm4091 = vmand %vm4089, %vm4090
    %4092 = vst.msk [vmem:[#allocation4] sm:$0x3] %vm4091, %v4086
    %v4093 = vmul.f32 %v3816, %v3816
    %v4094 = vmul.f32 %v3817, %v3817
    %v4095 = vmul.f32 %v3818, %v3818
    %v4096 = vmul.f32 %v3819, %v3819
    %v4097 = vmul.f32 %v3820, %v3820
    %v4098 = vmul.f32 %v3821, %v3821
    %v4099 = vmul.f32 %v3822, %v3822
    %v4100 = vmul.f32 %v3823, %v3823
    %v4101 = vmul.f32 %v3824, %v3824
    %v4102 = vmul.f32 %v3825, %v3825
    %v4103 = vmul.f32 %v3826, %v3826
    %v4104 = vmul.f32 %v3827, %v3827
    %v4105 = vmul.f32 %v3828, %v3828
    %v4106 = vmul.f32 %v3829, %v3829
    %v4107 = vmul.f32 %v3830, %v3830
    %v4108 = vmul.f32 %v3831, %v3831
    %v4109 = vmul.f32 %v3832, %v3832
    %v4110 = vmul.f32 %v3833, %v3833
    %v4111 = vmul.f32 %v3834, %v3834
    %v4112 = vmul.f32 %v3835, %v3835
    %v4113 = vmul.f32 %v3836, %v3836
    %v4114 = vmul.f32 %v3837, %v3837
    %v4115 = vmul.f32 %v3838, %v3838
    %v4116 = vmul.f32 %v3839, %v3839
    %v4117 = vmul.f32 %v3840, %v3840
    %v4118 = vmul.f32 %v3841, %v3841
    %v4119 = vmul.f32 %v3842, %v3842
    %v4120 = vmul.f32 %v3843, %v3843
    %v4121 = vmul.f32 %v3844, %v3844
    %v4122 = vmul.f32 %v3845, %v3845
    %v4123 = vmul.f32 %v3846, %v3846
    %v4124 = vmul.f32 %v3847, %v3847
    %v4125 = vmul.f32 %v3848, %v3848
    %v4126 = vmul.f32 %v3849, %v3849
    %v4127 = vmul.f32 %v3850, %v3850
    %v4128 = vmul.f32 %v3851, %v3851
    %v4129 = vmul.f32 %v3852, %v3852
    %v4130 = vmul.f32 %v3853, %v3853
    %v4131 = vmul.f32 %v3854, %v3854
    %v4132 = vmul.f32 %v3855, %v3855
    %v4133 = vmul.f32 %v3856, %v3856
    %v4134 = vmul.f32 %v3857, %v3857
    %v4135 = vmul.f32 %v3858, %v3858
    %v4136 = vmul.f32 %v3859, %v3859
    %v4137 = vmul.f32 %v3860, %v3860
    %v4138 = vmul.f32 %v3861, %v3861
    %v4139 = vmul.f32 %v3862, %v3862
    %v4140 = vmul.f32 %v3863, %v3863
    %v4141 = vmul.f32 %v3864, %v3864
    %v4142 = vmul.f32 %v3865, %v3865
    %v4143 = vmul.f32 %v3866, %v3866
    %v4144 = vmul.f32 %v3867, %v3867
    %v4145 = vmul.f32 %v3868, %v3868
    %v4146 = vmul.f32 %v3869, %v3869
    %v4147 = vmul.f32 %v3870, %v3870
    %v4148 = vmul.f32 %v3871, %v3871
    %v4149 = vmul.f32 %v3872, %v3872
    %v4150 = vmul.f32 %v3873, %v3873
    %v4151 = vmul.f32 %v3874, %v3874
    %v4152 = vmul.f32 %v3875, %v3875
    %v4153 = vmul.f32 %v3876, %v3876
    %v4154 = vmul.f32 %v3877, %v3877
    %v4155 = vmul.f32 %v3878, %v3878
    %v4156 = vmul.f32 %v3879, %v3879
    %v4157 = vmul.f32 %v3880, %v3880
    %v4158 = vmul.f32 %v3881, %v3881
    %v4159 = vmul.f32 %v3882, %v3882
    %v4160 = vmul.f32 %v3883, %v3883
    %v4161 = vmul.f32 %v3884, %v3884
    %v4162 = vmul.f32 %v3885, %v3885
    %v4163 = vmul.f32 %v3886, %v3886
    %v4164 = vmul.f32 %v3887, %v3887
    %v4165 = vmul.f32 %v3888, %v3888
    %v4166 = vmul.f32 %v3889, %v3889
    %v4167 = vmul.f32 %v3890, %v3890
    %v4168 = vmul.f32 %v3891, %v3891
    %v4169 = vmul.f32 %v3892, %v3892
    %v4170 = vmul.f32 %v3893, %v3893
    %v4171 = vmul.f32 %v3894, %v3894
    %v4172 = vmul.f32 %v3895, %v3895
    %v4173 = vmul.f32 %v3896, %v3896
    %v4174 = vmul.f32 %v3897, %v3897
    %v4175 = vmul.f32 %v3898, %v3898
    %v4176 = vmul.f32 %v3899, %v3899
    %v4177 = vmul.f32 %v3900, %v3900
    %v4178 = vmul.f32 %v3901, %v3901
    %v4179 = vmul.f32 %v3902, %v3902
    %v4180 = vmul.f32 %v3903, %v3903
    %v4181 = vmul.f32 %v3904, %v3904
    %v4182 = vmul.f32 %v3905, %v3905
    %v4183 = vmul.f32 %v3906, %v3906
    %v4184 = vmul.f32 %v3907, %v3907
    %v4185 = vmul.f32 %v3908, %v3908
    %v4186 = vmul.f32 %v3909, %v3909
    %v4187 = vmul.f32 %v3910, %v3910
    %v4188 = vmul.f32 %v3911, %v3911
    %v4189 = vmul.f32 %v3912, %v3912
    %v4190 = vmul.f32 %v3913, %v3913
    %v4191 = vmul.f32 %v3914, %v3914
    %v4192 = vmul.f32 %v3915, %v3915
    %v4193 = vmul.f32 %v3916, %v3916
    %v4194 = vmul.f32 %v3917, %v3917
    %v4195 = vmul.f32 %v3918, %v3918
    %v4196 = vmul.f32 %v3919, %v3919
    %v4197 = vmul.f32 %v3920, %v3920
    %v4198 = vmul.f32 %v3921, %v3921
    %v4199 = vmul.f32 %v3922, %v3922
    %v4200 = vmul.f32 %v3923, %v3923
    %v4201 = vmul.f32 %v3924, %v3924
    %v4202 = vmul.f32 %v3925, %v3925
    %v4203 = vmul.f32 %v3926, %v3926
    %v4204 = vmul.f32 %v3927, %v3927
    %v4205 = vmul.f32 %v3928, %v3928
    %v4206 = vmul.f32 %v3929, %v3929
    %v4207 = vmul.f32 %v3930, %v3930
    %v4208 = vmul.f32 %v3931, %v3931
    %v4209 = vmul.f32 %v3932, %v3932
    %v4210 = vmul.f32 %v3933, %v3933
    %v4211 = vmul.f32 %v3934, %v3934
    %v4212 = vmul.f32 %v3935, %v3935
    %v4213 = vmul.f32 %v3936, %v3936
    %v4214 = vmul.f32 %v3937, %v3937
    %v4215 = vmul.f32 %v3938, %v3938
    %v4216 = vmul.f32 %v3939, %v3939
    %v4217 = vmul.f32 %v3940, %v3940
    %v4218 = vmul.f32 %v3941, %v3941
    %v4219 = vmul.f32 %v3942, %v3942
    %v4220 = vmul.f32 %v3943, %v3943
    %v4221 = vadd.f32 %v4093, %v4095
    %v4222 = vadd.f32 %v4221, %v4097
    %v4223 = vadd.f32 %v4222, %v4099
    %v4224 = vadd.f32 %v4223, %v4101
    %v4225 = vadd.f32 %v4224, %v4103
    %v4226 = vadd.f32 %v4225, %v4105
    %v4227 = vadd.f32 %v4226, %v4107
    %v4228 = vadd.f32 %v4227, %v4109
    %v4229 = vadd.f32 %v4228, %v4111
    %v4230 = vadd.f32 %v4229, %v4113
    %v4231 = vadd.f32 %v4230, %v4115
    %v4232 = vadd.f32 %v4231, %v4117
    %v4233 = vadd.f32 %v4232, %v4119
    %v4234 = vadd.f32 %v4233, %v4121
    %v4235 = vadd.f32 %v4234, %v4123
    %v4236 = vadd.f32 %v4235, %v4125
    %v4237 = vadd.f32 %v4236, %v4127
    %v4238 = vadd.f32 %v4237, %v4129
    %v4239 = vadd.f32 %v4238, %v4131
    %v4240 = vadd.f32 %v4239, %v4133
    %v4241 = vadd.f32 %v4240, %v4135
    %v4242 = vadd.f32 %v4241, %v4137
    %v4243 = vadd.f32 %v4242, %v4139
    %v4244 = vadd.f32 %v4243, %v4141
    %v4245 = vadd.f32 %v4244, %v4143
    %v4246 = vadd.f32 %v4245, %v4145
    %v4247 = vadd.f32 %v4246, %v4147
    %v4248 = vadd.f32 %v4247, %v4149
    %v4249 = vadd.f32 %v4248, %v4151
    %v4250 = vadd.f32 %v4249, %v4153
    %v4251 = vadd.f32 %v4250, %v4155
    %v4252 = vadd.f32 %v4251, %v4157
    %v4253 = vadd.f32 %v4252, %v4159
    %v4254 = vadd.f32 %v4253, %v4161
    %v4255 = vadd.f32 %v4254, %v4163
    %v4256 = vadd.f32 %v4255, %v4165
    %v4257 = vadd.f32 %v4256, %v4167
    %v4258 = vadd.f32 %v4257, %v4169
    %v4259 = vadd.f32 %v4258, %v4171
    %v4260 = vadd.f32 %v4259, %v4173
    %v4261 = vadd.f32 %v4260, %v4175
    %v4262 = vadd.f32 %v4261, %v4177
    %v4263 = vadd.f32 %v4262, %v4179
    %v4264 = vadd.f32 %v4263, %v4181
    %v4265 = vadd.f32 %v4264, %v4183
    %v4266 = vadd.f32 %v4265, %v4185
    %v4267 = vadd.f32 %v4266, %v4187
    %v4268 = vadd.f32 %v4267, %v4189
    %v4269 = vadd.f32 %v4268, %v4191
    %v4270 = vadd.f32 %v4269, %v4193
    %v4271 = vadd.f32 %v4270, %v4195
    %v4272 = vadd.f32 %v4271, %v4197
    %v4273 = vadd.f32 %v4272, %v4199
    %v4274 = vadd.f32 %v4273, %v4201
    %v4275 = vadd.f32 %v4274, %v4203
    %v4276 = vadd.f32 %v4275, %v4205
    %v4277 = vadd.f32 %v4276, %v4207
    %v4278 = vadd.f32 %v4277, %v4209
    %v4279 = vadd.f32 %v4278, %v4211
    %v4280 = vadd.f32 %v4279, %v4213
    %v4281 = vadd.f32 %v4280, %v4215
    %v4282 = vadd.f32 %v4281, %v4217
    %v4283 = vadd.f32 %v4282, %v4219
    %v4284 = vrot.slane %v4283, 4
    %v4285 = vadd.f32 %v4283, %v4284
    %v4286 = vrot.slane %v4285, 2
    %v4287 = vadd.f32 %v4285, %v4286
    %v4288 = vrot.slane %v4287, 1
    %v4289 = vadd.f32 %v4287, %v4288
    %v4290 = vadd.f32 %v4094, %v4096
    %v4291 = vadd.f32 %v4290, %v4098
    %v4292 = vadd.f32 %v4291, %v4100
    %v4293 = vadd.f32 %v4292, %v4102
    %v4294 = vadd.f32 %v4293, %v4104
    %v4295 = vadd.f32 %v4294, %v4106
    %v4296 = vadd.f32 %v4295, %v4108
    %v4297 = vadd.f32 %v4296, %v4110
    %v4298 = vadd.f32 %v4297, %v4112
    %v4299 = vadd.f32 %v4298, %v4114
    %v4300 = vadd.f32 %v4299, %v4116
    %v4301 = vadd.f32 %v4300, %v4118
    %v4302 = vadd.f32 %v4301, %v4120
    %v4303 = vadd.f32 %v4302, %v4122
    %v4304 = vadd.f32 %v4303, %v4124
    %v4305 = vadd.f32 %v4304, %v4126
    %v4306 = vadd.f32 %v4305, %v4128
    %v4307 = vadd.f32 %v4306, %v4130
    %v4308 = vadd.f32 %v4307, %v4132
    %v4309 = vadd.f32 %v4308, %v4134
    %v4310 = vadd.f32 %v4309, %v4136
    %v4311 = vadd.f32 %v4310, %v4138
    %v4312 = vadd.f32 %v4311, %v4140
    %v4313 = vadd.f32 %v4312, %v4142
    %v4314 = vadd.f32 %v4313, %v4144
    %v4315 = vadd.f32 %v4314, %v4146
    %v4316 = vadd.f32 %v4315, %v4148
    %v4317 = vadd.f32 %v4316, %v4150
    %v4318 = vadd.f32 %v4317, %v4152
    %v4319 = vadd.f32 %v4318, %v4154
    %v4320 = vadd.f32 %v4319, %v4156
    %v4321 = vadd.f32 %v4320, %v4158
    %v4322 = vadd.f32 %v4321, %v4160
    %v4323 = vadd.f32 %v4322, %v4162
    %v4324 = vadd.f32 %v4323, %v4164
    %v4325 = vadd.f32 %v4324, %v4166
    %v4326 = vadd.f32 %v4325, %v4168
    %v4327 = vadd.f32 %v4326, %v4170
    %v4328 = vadd.f32 %v4327, %v4172
    %v4329 = vadd.f32 %v4328, %v4174
    %v4330 = vadd.f32 %v4329, %v4176
    %v4331 = vadd.f32 %v4330, %v4178
    %v4332 = vadd.f32 %v4331, %v4180
    %v4333 = vadd.f32 %v4332, %v4182
    %v4334 = vadd.f32 %v4333, %v4184
    %v4335 = vadd.f32 %v4334, %v4186
    %v4336 = vadd.f32 %v4335, %v4188
    %v4337 = vadd.f32 %v4336, %v4190
    %v4338 = vadd.f32 %v4337, %v4192
    %v4339 = vadd.f32 %v4338, %v4194
    %v4340 = vadd.f32 %v4339, %v4196
    %v4341 = vadd.f32 %v4340, %v4198
    %v4342 = vadd.f32 %v4341, %v4200
    %v4343 = vadd.f32 %v4342, %v4202
    %v4344 = vadd.f32 %v4343, %v4204
    %v4345 = vadd.f32 %v4344, %v4206
    %v4346 = vadd.f32 %v4345, %v4208
    %v4347 = vadd.f32 %v4346, %v4210
    %v4348 = vadd.f32 %v4347, %v4212
    %v4349 = vadd.f32 %v4348, %v4214
    %v4350 = vadd.f32 %v4349, %v4216
    %v4351 = vadd.f32 %v4350, %v4218
    %v4352 = vadd.f32 %v4351, %v4220
    %v4353 = vrot.slane %v4352, 4
    %v4354 = vadd.f32 %v4352, %v4353
    %v4355 = vrot.slane %v4354, 2
    %v4356 = vadd.f32 %v4354, %v4355
    %v4357 = vrot.slane %v4356, 1
    %v4358 = vadd.f32 %v4356, %v4357
    %v4361 = vrot.slane %v4358, 7
    %v4362 = vsel %vm4085, %v4289, %v4361
    %4364 = vst.msk [vmem:[#allocation6] sm:$0x3] %vm4091, %v4362
    // Predicated region
    $region14: #{tpu_custom_call.1} parent=1 // pred_check
      _
    $region15: #{tpu_custom_call.1} parent=1 // pred_check_branch
      %4366 = sbr.rel (0) target = $region17
    $region16: #{tpu_custom_call.1} parent=1 // pred_region
      %4368 = vsyncadd [#allocation3], 0
      %s4369 = sshll.u32 [#allocation2], 4
      %s4370 = int_to_ptr.vmem [resolvable:$true] %s4369
      %s4371 = sshll.u32 %s3, 4
      %s4372 = int_to_ptr.hbm [resolvable:$true] %s4371
      %4377 = dma.vmem_to_hbm [thread:$0]  %s4370, 8192, %s4372, [#allocation3], 128, 128, 8
    $region17: #{tpu_custom_call.1} parent=1 // pred_fallthru
      _
    // Predicated region
    $region18: #{tpu_custom_call.1} parent=1 // pred_check
      _
    $region19: #{tpu_custom_call.1} parent=1 // pred_check_branch
      %4379 = sbr.rel (0) target = $region21
    $region20: #{tpu_custom_call.1} parent=1 // pred_region
      %4381 = vsyncadd [#allocation5], 0
      %s4383 = sshll.u32 [#allocation4], 4
      %s4384 = int_to_ptr.vmem [resolvable:$true] %s4383
      %s4385 = sshll.u32 %s4, 4
      %s4386 = int_to_ptr.hbm [resolvable:$true] %s4385
      %4388 = dma.vmem_to_hbm [thread:$0]  %s4384, 32, %s4386, [#allocation5]
    $region21: #{tpu_custom_call.1} parent=1 // pred_fallthru
      _
    // Predicated region
    $region22: #{tpu_custom_call.1} parent=1 // pred_check
      _
    $region23: #{tpu_custom_call.1} parent=1 // pred_check_branch
      %4390 = sbr.rel (0) target = $region25
    $region24: #{tpu_custom_call.1} parent=1 // pred_region
      %4392 = vsyncadd [#allocation5], 0
      %s4394 = sshll.u32 [#allocation6], 4
      %s4395 = int_to_ptr.vmem [resolvable:$true] %s4394
      %s4396 = sshll.u32 %s5, 4
      %s4397 = int_to_ptr.hbm [resolvable:$true] %s4396
      %4399 = dma.vmem_to_hbm [thread:$0]  %s4395, 32, %s4397, [#allocation5]
    $region25: #{tpu_custom_call.1} parent=1 // pred_fallthru
      _
    // Predicated region
    $region26: #{tpu_custom_call.1} parent=1 // pred_check
      _
    $region27: #{tpu_custom_call.1} parent=1 // pred_check_branch
      %4401 = sbr.rel (0) target = $region29
    $region28: #{tpu_custom_call.1} parent=1 // pred_region
      %4403 = dma.done [#allocation3], 8192
    $region29: #{tpu_custom_call.1} parent=1 // pred_fallthru
      _
    // Predicated region
    $region30: #{tpu_custom_call.1} parent=1 // pred_check
      _
    $region31: #{tpu_custom_call.1} parent=1 // pred_check_branch
      %4405 = sbr.rel (0) target = $region33
    $region32: #{tpu_custom_call.1} parent=1 // pred_region
      %4407 = dma.done [#allocation5], 32
    $region33: #{tpu_custom_call.1} parent=1 // pred_fallthru
      _
    // Predicated region
    $region34: #{tpu_custom_call.1} parent=1 // pred_check
      _
    $region35: #{tpu_custom_call.1} parent=1 // pred_check_branch
      %4409 = sbr.rel (0) target = $region37
    $region36: #{tpu_custom_call.1} parent=1 // pred_region
      %4411 = dma.done [#allocation5], 32
    $region37: #{tpu_custom_call.1} parent=1 // pred_fallthru
      _
    %4412 = vsyncpa [#allocation3], 1
    %4413 = vsyncpa [#allocation5], 1

</llo_original>
